<compile_context>
chip_gen: v7x
topology: tpu7x:2x2x1
jax: 0.10.0
libtpu: 0.0.40
codegen_flags: <defaults>
</compile_context>

<pallas_src>
import jax
import jax.numpy as jnp
from jax import lax
from jax.experimental import pallas as pl
from jax.experimental.pallas import tpu as pltpu

# Board geometry from the PyTorch module: H=10, W=5, 5 piece planes.
H, W, P = 10, 5, 5
C_HIDDEN = 10
KH = KW = 3
FEAT = C_HIDDEN * H * W                  # 500
POLICY = H * W * H * W                   # 2500
FEAT_PAD = 512                           # lane-dense K: 500 feat + bias col + pad
BIAS_COL = FEAT                          # feat_pad column 500 == 1.0 (bias fold)
OUT_PAD = 2560                           # 2500 policy + 1 value col + zero pad
VALUE_COL = POLICY                       # global column 2500 = pre-tanh value
VALUE_SLAB_START = (POLICY // 128) * 128 # 2432 — lane-aligned 128-wide slab
VALUE_SLAB_W = 128
VALUE_LOCAL = VALUE_COL - VALUE_SLAB_START  # 68: value's lane inside the slab
TB_MAX = 512                             # batch tile (rows)


# ----------------------------- Pallas kernel ------------------------------

def _heads_kernel(feat_ref, w_ref, policy_ref, value_ref):
    # feat_ref:   [TB, 512]  bf16 (col 500 is the folded-bias ones column)
    # w_ref:      [512, 2560] bf16, VMEM-resident (constant index_map)
    # policy_ref: [TB, 2500] bf16   value_ref: [TB, 128] f32
    acc = jnp.dot(feat_ref[...], w_ref[...],
                  preferred_element_type=jnp.float32)        # [TB, 2560] f32
    policy_ref[...] = acc[:, :POLICY].astype(policy_ref.dtype)
    value_ref[...] = acc[:, VALUE_SLAB_START:VALUE_SLAB_START + VALUE_SLAB_W]


def _heads_call(feat_pad, heads_w, tb):
    bp = feat_pad.shape[0]
    flops = 2 * bp * FEAT_PAD * OUT_PAD
    bytes_accessed = (
        heads_w.size * heads_w.dtype.itemsize          # weight (fetched once)
        + feat_pad.size * feat_pad.dtype.itemsize      # activations in (bf16)
        + bp * POLICY * 2                              # policy out (bf16)
        + bp * VALUE_SLAB_W * 4                        # value slab out (f32)
    )
    return pl.pallas_call(
        _heads_kernel,
        out_shape=(
            jax.ShapeDtypeStruct((bp, POLICY), jnp.bfloat16),
            jax.ShapeDtypeStruct((bp, VALUE_SLAB_W), jnp.float32),
        ),
        grid_spec=pltpu.PrefetchScalarGridSpec(
            num_scalar_prefetch=0,
            grid=(bp // tb,),
            in_specs=[
                pl.BlockSpec((tb, FEAT_PAD), lambda i: (i, 0)),       # streams
                pl.BlockSpec((FEAT_PAD, OUT_PAD), lambda i: (0, 0)),  # resident
            ],
            out_specs=[
                pl.BlockSpec((tb, POLICY), lambda i: (i, 0)),         # bf16 out
                pl.BlockSpec((tb, VALUE_SLAB_W), lambda i: (i, 0)),   # value
            ],
        ),
        compiler_params=pltpu.CompilerParams(
            dimension_semantics=("parallel",),
            vmem_limit_bytes=48 * 1024 * 1024,
        ),
        cost_estimate=pl.CostEstimate(
            flops=flops, transcendentals=0, bytes_accessed=bytes_accessed),
    )(feat_pad, heads_w)


# ------------------------------- JAX glue ---------------------------------

def flip_board(board, flip):
    """board: [B,H,W,P]; flip: [B] bool.  Vectorized torch `flip_board`:
    flip H and W, and permute piece planes via [0,3,4,1,2]."""
    flipped = board[:, ::-1, ::-1, :][..., jnp.array([0, 3, 4, 1, 2])]
    return jnp.where(flip[:, None, None, None], flipped, board)


def init_params(key):
    k1, k2, k3, k4, k5 = jax.random.split(key, 5)
    conv_w = 0.1 * jax.random.normal(k1, (C_HIDDEN, P, KH, KW), jnp.float32)
    conv_b = 0.05 * jax.random.normal(k2, (C_HIDDEN,), jnp.float32)
    policy_w = 0.05 * jax.random.normal(k3, (FEAT, POLICY), jnp.float32)
    policy_b = 0.05 * jax.random.normal(k4, (POLICY,), jnp.float32)
    value_w = 0.05 * jax.random.normal(k5, (FEAT, 1), jnp.float32)
    value_b = jnp.array([0.1], jnp.float32)

    # Pack policy + value + biases into one lane-dense padded head weight:
    #   cols [0, 2500) = policy, col 2500 = value (pre-tanh), rest zero;
    #   row 500 (BIAS_COL) = biases (bias fold: multiplied by the feat ones
    #   column); rows 501..511 are zero K-padding.
    w_big = jnp.zeros((FEAT_PAD, OUT_PAD), jnp.float32)
    w_big = w_big.at[:FEAT, :POLICY].set(policy_w)
    w_big = w_big.at[:FEAT, VALUE_COL].set(value_w[:, 0])
    w_big = w_big.at[BIAS_COL, :POLICY].set(policy_b)
    w_big = w_big.at[BIAS_COL, VALUE_COL].set(value_b[0])

    return dict(
        conv_w=conv_w,
        conv_b=conv_b,
        heads_w=w_big.astype(jnp.bfloat16),   # bf16 stream, f32 MXU accumulate
        # f32 originals kept only for the full-precision accuracy check.
        policy_w=policy_w, policy_b=policy_b, value_w=value_w, value_b=value_b,
    )


def _choose_tiling(b):
    """Padded batch (multiple of 16 for bf16 sublane packing) + batch tile."""
    bp = max(16, -(-b // 16) * 16)
    if bp >= 512:
        # Ensure >=2 grid steps so the "parallel" axis can shard across the two
        # v7x TensorCores; for small batches a single step avoids re-fetching
        # the 2.5 MiB weight on both cores.
        tb = min(TB_MAX, -(-(bp // 2) // 16) * 16)
    else:
        tb = min(TB_MAX, bp)
    bp = -(-bp // tb) * tb
    return bp, tb


def _pad_feat(feat, b):
    """Pad [B,500] f32 feat to [bp,512] bf16 with the bias-fold ones column.
    Padding rows stay all-zero, so they do NOT pick up the folded bias."""
    bp, tb = _choose_tiling(b)
    feat_pad = jnp.zeros((bp, FEAT_PAD), jnp.bfloat16)
    feat_pad = feat_pad.at[:b, :FEAT].set(feat.astype(jnp.bfloat16))
    feat_pad = feat_pad.at[:b, BIAS_COL].set(1.0)
    return feat_pad, tb


def _input_layer(params, board):
    """InputLayer: 3x3 conv (pad=1) + ReLU, channel-last.  Left to XLA — its
    FLOPs/bytes are negligible; this avoids materializing im2col patches in HBM
    and a lane-sparse [B*50, 10] Pallas intermediate."""
    w_hwio = params["conv_w"].transpose(2, 3, 1, 0)          # [KH, KW, P, C]
    hidden = lax.conv_general_dilated(
        board, w_hwio, window_strides=(1, 1), padding="SAME",
        dimension_numbers=("NHWC", "HWIO", "NHWC"))
    return jnp.maximum(hidden + params["conv_b"], 0.0)       # [B, H, W, C]


@jax.jit
def position_evaluator(params, board_state, is_white):
    """board_state: [B, H, W, P] f32, is_white: [B] (+1 white / -1 black).
    Returns (value [B] f32, policy [B, H, W, H, W] bf16)."""
    b = board_state.shape[0]

    # Flip boards played from black's perspective (is_white == -1).
    board = flip_board(board_state, is_white == -1)

    hidden = _input_layer(params, board)                     # [B, H, W, C]
    feat = hidden.reshape(b, FEAT)                           # (h, w, c) order

    feat_pad, tb = _pad_feat(feat, b)
    policy_out, value_slab = _heads_call(feat_pad, params["heads_w"], tb)

    # Contiguous row slice only — no strided de-pad copy of the policy.
    policy = policy_out[:b].reshape(b, H, W, H, W)           # bf16
    value = jnp.tanh(value_slab[:b, VALUE_LOCAL])            # f32
    # NOTE: the reference forward computes `policy_flipped` but returns the
    # un-flipped `policy`; we reproduce that (no back-flip applied).
    # TODO(synk): the torch forward raises on NaN inside forward; no clean
    # jit-time equivalent of a Python raise, so the check is omitted.
    return value, policy


# ------------------------------ References --------------------------------

def reference_forward_bf16(params, board_state, is_white):
    """Pure-JAX reference of the exact kernel math (same packed bf16 weight)."""
    b = board_state.shape[0]
    board = flip_board(board_state, is_white == -1)
    feat = _input_layer(params, board).reshape(b, FEAT)
    feat_pad, _ = _pad_feat(feat, b)
    out = jnp.dot(feat_pad, params["heads_w"],
                  preferred_element_type=jnp.float32)
    policy = out[:b, :POLICY].astype(jnp.bfloat16).reshape(b, H, W, H, W)
    value = jnp.tanh(out[:b, VALUE_COL])
    return value, policy


def reference_forward_f32(params, board_state, is_white):
    """Full-precision (f32) reference, characterizes bf16 drift."""
    b = board_state.shape[0]
    board = flip_board(board_state, is_white == -1)
    feat = _input_layer(params, board).reshape(b, FEAT)
    policy = (feat @ params["policy_w"] + params["policy_b"]
              ).reshape(b, H, W, H, W)
    value = jnp.tanh(feat @ params["value_w"] + params["value_b"]).reshape(-1)
    return value, policy


if __name__ == "__main__":
    key = jax.random.PRNGKey(0)
    pkey, bkey = jax.random.split(key)
    params = init_params(pkey)

    B = 2
    board = jax.random.uniform(bkey, (B, H, W, P), dtype=jnp.float32)
    is_white = jnp.array([1.0, -1.0], dtype=jnp.float32)

    value, policy = position_evaluator(params, board, is_white)
    jax.block_until_ready((value, policy))

    assert value.shape == (B,), value.shape
    assert policy.shape == (B, H, W, H, W), policy.shape
    policy_f32 = policy.astype(jnp.float32)
    assert bool(jnp.all(jnp.isfinite(value)))
    assert bool(jnp.all(jnp.isfinite(policy_f32)))

    # (1) Tight check: Pallas heads kernel vs pure-JAX with identical bf16
    #     weights/activations.
    rv, rp = reference_forward_bf16(params, board, is_white)
    assert bool(jnp.allclose(value, rv, atol=1e-2, rtol=1e-2))
    assert bool(jnp.allclose(policy_f32, rp.astype(jnp.float32),
                             atol=1e-2, rtol=1e-2))

    # (2) Drift check vs the full-precision f32 module (bf16 weight/activation
    #     + bf16 output rounding); characterizes quantization error.
    fv, fp = reference_forward_f32(params, board, is_white)
    assert bool(jnp.allclose(value, fv, atol=5e-2, rtol=5e-2))
    assert bool(jnp.allclose(policy_f32, fp, atol=5e-2, rtol=5e-2))

    print("KERNEL_OK")
</pallas_src>

<mosaic_0001>
module attributes {stable_mosaic.version = 11 : i64} {
  func.func @_heads_kernel(%arg0: i32, %arg1: memref<16x512xbf16, #tpu.memory_space<vmem>>, %arg2: memref<512x2560xbf16, #tpu.memory_space<vmem>>, %arg3: memref<16x2500xbf16, #tpu.memory_space<vmem>>, %arg4: memref<16x128xf32, #tpu.memory_space<vmem>>) attributes {dimension_semantics = [#tpu.dimension_semantics<parallel>], iteration_bounds = array<i64: 1>, scalar_prefetch = 0 : i64, scratch_operands = 0 : i64, tpu.core_type = #tpu.core_type<tc>, window_params = [{transform_indices = @transform_0, window_bounds = array<i64: 16, 512>}, {pipeline_mode = #tpu.pipeline_mode<synchronous>, transform_indices = @transform_1, window_bounds = array<i64: 512, 2560>}, {transform_indices = @transform_2, window_bounds = array<i64: 16, 2500>}, {transform_indices = @transform_3, window_bounds = array<i64: 16, 128>}]} {
    %c0 = arith.constant 0 : index
    %c0_0 = arith.constant 0 : index
    %0 = vector.load %arg1[%c0, %c0_0] : memref<16x512xbf16, #tpu.memory_space<vmem>>, vector<16x512xbf16>
    %c0_1 = arith.constant 0 : index
    %c0_2 = arith.constant 0 : index
    %1 = vector.load %arg2[%c0_1, %c0_2] : memref<512x2560xbf16, #tpu.memory_space<vmem>>, vector<512x2560xbf16>
    %cst = arith.constant dense<0.000000e+00> : vector<16x2560xf32>
    %2 = tpu.matmul %0, %1, %cst {dimension_numbers = #tpu.dot_dimension_numbers<[1], [0], [0], [1], [0, 0, 1, 1], [], []>} : vector<16x512xbf16>, vector<512x2560xbf16>, vector<16x2560xf32> -> vector<16x2560xf32>
    %3 = vector.extract_strided_slice %2 {offsets = [0, 0], sizes = [16, 2500], strides = [1, 1]} : vector<16x2560xf32> to vector<16x2500xf32>
    %4 = arith.truncf %3 : vector<16x2500xf32> to vector<16x2500xbf16>
    %c0_3 = arith.constant 0 : index
    %c0_4 = arith.constant 0 : index
    %5 = vector.load %arg3[%c0_3, %c0_4] : memref<16x2500xbf16, #tpu.memory_space<vmem>>, vector<16x2500xbf16>
    tpu.vector_store %arg3[%c0_3, %c0_4], %4 {strides = array<i32>} : memref<16x2500xbf16, #tpu.memory_space<vmem>>, vector<16x2500xbf16>,
    %6 = vector.extract_strided_slice %2 {offsets = [0, 2432], sizes = [16, 128], strides = [1, 1]} : vector<16x2560xf32> to vector<16x128xf32>
    %c0_5 = arith.constant 0 : index
    %c0_6 = arith.constant 0 : index
    %7 = vector.load %arg4[%c0_5, %c0_6] : memref<16x128xf32, #tpu.memory_space<vmem>>, vector<16x128xf32>
    tpu.vector_store %arg4[%c0_5, %c0_6], %6 {strides = array<i32>} : memref<16x128xf32, #tpu.memory_space<vmem>>, vector<16x128xf32>,
    return
  }
  func.func @transform_0(%arg0: i32) -> (i32, i32) {
    %c0_i32 = arith.constant 0 : i32
    %c0_i32_0 = arith.constant 0 : i32
    return %arg0, %c0_i32 : i32, i32
  }
  func.func @transform_1(%arg0: i32) -> (i32, i32) {
    %c0_i32 = arith.constant 0 : i32
    %c0_i32_0 = arith.constant 0 : i32
    %c0_i32_1 = arith.constant 0 : i32
    return %c0_i32, %c0_i32_0 : i32, i32
  }
  func.func @transform_2(%arg0: i32) -> (i32, i32) {
    %c0_i32 = arith.constant 0 : i32
    %c0_i32_0 = arith.constant 0 : i32
    return %arg0, %c0_i32 : i32, i32
  }
  func.func @transform_3(%arg0: i32) -> (i32, i32) {
    %c0_i32 = arith.constant 0 : i32
    %c0_i32_0 = arith.constant 0 : i32
    return %arg0, %c0_i32 : i32, i32
  }
}

</mosaic_0001>

<llo_original>
// kernel: position_evaluator.1
$region0: #{position_evaluator.1}
  #allocation0 [shape = 'u32[]', space=smem, size = 0x4, offset = 0x4, fixed_abs, tag = 'smem constant byte address 0x4 - core index']
  #allocation1 [shape = 'u32[144,128]{1,0:T(1,128)}', space=vmem, size = 0x12000, scoped, tag = 'internal scratch']
  %s0 = inlined_call_operand.vmem [shape: bf16[16,512], index: 0, kind: input, shape index: {}]
  %s1 = inlined_call_operand.hbm [shape: bf16[512,2560], index: 1, kind: input, shape index: {}]
  %s2 = inlined_call_operand.vmem [shape: bf16[16,2500], index: 2, kind: output, shape index: {0}]
  %s3 = inlined_call_operand.vmem [shape: f32[16,128], index: 3, kind: output, shape index: {1}]
  %4 = xla_tuple %s2, %s3
  %s5 = sld [smem:[#allocation0]]
  $region30: #{position_evaluator.1} parent=0
    _
  %s7 = ssub.s32 1, %s5
  %s8 = scalar_select 0, %s7, %s5
  $region1: #{position_evaluator.1} parent=0
    #allocation2 [shape = 'u8[2621440]{0}', space=vmem, size = 0x280000, scoped, tag = 'input window, operand 1, single buffered']
    #allocation3 [shape = 's32[1]{0}', space=sflag, size = 0x4, scoped, tag = 'scoped memory for position_evaluator.1']
    %9 = vsyncpa [#allocation3], 0
    // Predicated region
    $region2: #{position_evaluator.1} parent=1 // pred_check
      _
    $region3: #{position_evaluator.1} parent=1 // pred_check_branch
      %11 = sbr.rel (0) target = $region5
    $region4: #{position_evaluator.1} parent=1 // pred_region
      _
    $region5: #{position_evaluator.1} parent=1 // pred_fallthru
      _
    // Predicated region
    $region6: #{position_evaluator.1} parent=1 // pred_check
      _
    $region7: #{position_evaluator.1} parent=1 // pred_check_branch
      %13 = sbr.rel (0) target = $region9
    $region8: #{position_evaluator.1} parent=1 // pred_region
      %s15 = ssub.s32 81920, 81920
      %16 = vsyncadd [#allocation3], %s15
      %s17 = sshll.u32 [#allocation2], 4
      %s18 = int_to_ptr.vmem [resolvable:$true] %s17
      %23 = dma.hbm_to_vmem [thread:$0]  %s1, 81920, %s18, [#allocation3], 1280, 1280, 80
    $region9: #{position_evaluator.1} parent=1 // pred_fallthru
      _
    // Predicated region
    $region10: #{position_evaluator.1} parent=1 // pred_check
      _
    $region11: #{position_evaluator.1} parent=1 // pred_check_branch
      %25 = sbr.rel (0) target = $region13
    $region12: #{position_evaluator.1} parent=1 // pred_region
      %26 = dma.done [#allocation3], 81920
    $region13: #{position_evaluator.1} parent=1 // pred_fallthru
      _
    %v27 = vld [vmem:[%s0] sm:$0xff]
    %v28 = vld [vmem:[%s0 + $0x8] sm:$0xff]
    %v29 = vld [vmem:[%s0 + $0x10] sm:$0xff]
    %v30 = vld [vmem:[%s0 + $0x18] sm:$0xff]
    %v31 = vld [vmem:[#allocation2] sm:$0xff]
    %v32 = vld [vmem:[#allocation2 + $0x8] sm:$0xff]
    %v33 = vld [vmem:[#allocation2 + $0x10] sm:$0xff]
    %v34 = vld [vmem:[#allocation2 + $0x18] sm:$0xff]
    %v35 = vld [vmem:[#allocation2 + $0x20] sm:$0xff]
    %v36 = vld [vmem:[#allocation2 + $0x28] sm:$0xff]
    %v37 = vld [vmem:[#allocation2 + $0x30] sm:$0xff]
    %v38 = vld [vmem:[#allocation2 + $0x38] sm:$0xff]
    %v39 = vld [vmem:[#allocation2 + $0x40] sm:$0xff]
    %v40 = vld [vmem:[#allocation2 + $0x48] sm:$0xff]
    %v41 = vld [vmem:[#allocation2 + $0x50] sm:$0xff]
    %v42 = vld [vmem:[#allocation2 + $0x58] sm:$0xff]
    %v43 = vld [vmem:[#allocation2 + $0x60] sm:$0xff]
    %v44 = vld [vmem:[#allocation2 + $0x68] sm:$0xff]
    %v45 = vld [vmem:[#allocation2 + $0x70] sm:$0xff]
    %v46 = vld [vmem:[#allocation2 + $0x78] sm:$0xff]
    %v47 = vld [vmem:[#allocation2 + $0x80] sm:$0xff]
    %v48 = vld [vmem:[#allocation2 + $0x88] sm:$0xff]
    %v49 = vld [vmem:[#allocation2 + $0x90] sm:$0xff]
    %v50 = vld [vmem:[#allocation2 + $0x98] sm:$0xff]
    %v51 = vld [vmem:[#allocation2 + $0xa0] sm:$0xff]
    %v52 = vld [vmem:[#allocation2 + $0xa8] sm:$0xff]
    %v53 = vld [vmem:[#allocation2 + $0xb0] sm:$0xff]
    %v54 = vld [vmem:[#allocation2 + $0xb8] sm:$0xff]
    %v55 = vld [vmem:[#allocation2 + $0xc0] sm:$0xff]
    %v56 = vld [vmem:[#allocation2 + $0xc8] sm:$0xff]
    %v57 = vld [vmem:[#allocation2 + $0xd0] sm:$0xff]
    %v58 = vld [vmem:[#allocation2 + $0xd8] sm:$0xff]
    %v59 = vld [vmem:[#allocation2 + $0xe0] sm:$0xff]
    %v60 = vld [vmem:[#allocation2 + $0xe8] sm:$0xff]
    %v61 = vld [vmem:[#allocation2 + $0xf0] sm:$0xff]
    %v62 = vld [vmem:[#allocation2 + $0xf8] sm:$0xff]
    %v63 = vld [vmem:[#allocation2 + $0x100] sm:$0xff]
    %v64 = vld [vmem:[#allocation2 + $0x108] sm:$0xff]
    %v65 = vld [vmem:[#allocation2 + $0x110] sm:$0xff]
    %v66 = vld [vmem:[#allocation2 + $0x118] sm:$0xff]
    %v67 = vld [vmem:[#allocation2 + $0x120] sm:$0xff]
    %v68 = vld [vmem:[#allocation2 + $0x128] sm:$0xff]
    %v69 = vld [vmem:[#allocation2 + $0x130] sm:$0xff]
    %v70 = vld [vmem:[#allocation2 + $0x138] sm:$0xff]
    %v71 = vld [vmem:[#allocation2 + $0x140] sm:$0xff]
    %v72 = vld [vmem:[#allocation2 + $0x148] sm:$0xff]
    %v73 = vld [vmem:[#allocation2 + $0x150] sm:$0xff]
    %v74 = vld [vmem:[#allocation2 + $0x158] sm:$0xff]
    %v75 = vld [vmem:[#allocation2 + $0x160] sm:$0xff]
    %v76 = vld [vmem:[#allocation2 + $0x168] sm:$0xff]
    %v77 = vld [vmem:[#allocation2 + $0x170] sm:$0xff]
    %v78 = vld [vmem:[#allocation2 + $0x178] sm:$0xff]
    %v79 = vld [vmem:[#allocation2 + $0x180] sm:$0xff]
    %v80 = vld [vmem:[#allocation2 + $0x188] sm:$0xff]
    %v81 = vld [vmem:[#allocation2 + $0x190] sm:$0xff]
    %v82 = vld [vmem:[#allocation2 + $0x198] sm:$0xff]
    %v83 = vld [vmem:[#allocation2 + $0x1a0] sm:$0xff]
    %v84 = vld [vmem:[#allocation2 + $0x1a8] sm:$0xff]
    %v85 = vld [vmem:[#allocation2 + $0x1b0] sm:$0xff]
    %v86 = vld [vmem:[#allocation2 + $0x1b8] sm:$0xff]
    %v87 = vld [vmem:[#allocation2 + $0x1c0] sm:$0xff]
    %v88 = vld [vmem:[#allocation2 + $0x1c8] sm:$0xff]
    %v89 = vld [vmem:[#allocation2 + $0x1d0] sm:$0xff]
    %v90 = vld [vmem:[#allocation2 + $0x1d8] sm:$0xff]
    %v91 = vld [vmem:[#allocation2 + $0x1e0] sm:$0xff]
    %v92 = vld [vmem:[#allocation2 + $0x1e8] sm:$0xff]
    %v93 = vld [vmem:[#allocation2 + $0x1f0] sm:$0xff]
    %v94 = vld [vmem:[#allocation2 + $0x1f8] sm:$0xff]
    %v95 = vld [vmem:[#allocation2 + $0x200] sm:$0xff]
    %v96 = vld [vmem:[#allocation2 + $0x208] sm:$0xff]
    %v97 = vld [vmem:[#allocation2 + $0x210] sm:$0xff]
    %v98 = vld [vmem:[#allocation2 + $0x218] sm:$0xff]
    %v99 = vld [vmem:[#allocation2 + $0x220] sm:$0xff]
    %v100 = vld [vmem:[#allocation2 + $0x228] sm:$0xff]
    %v101 = vld [vmem:[#allocation2 + $0x230] sm:$0xff]
    %v102 = vld [vmem:[#allocation2 + $0x238] sm:$0xff]
    %v103 = vld [vmem:[#allocation2 + $0x240] sm:$0xff]
    %v104 = vld [vmem:[#allocation2 + $0x248] sm:$0xff]
    %v105 = vld [vmem:[#allocation2 + $0x250] sm:$0xff]
    %v106 = vld [vmem:[#allocation2 + $0x258] sm:$0xff]
    %v107 = vld [vmem:[#allocation2 + $0x260] sm:$0xff]
    %v108 = vld [vmem:[#allocation2 + $0x268] sm:$0xff]
    %v109 = vld [vmem:[#allocation2 + $0x270] sm:$0xff]
    %v110 = vld [vmem:[#allocation2 + $0x278] sm:$0xff]
    %v111 = vld [vmem:[#allocation2 + $0x280] sm:$0xff]
    %v112 = vld [vmem:[#allocation2 + $0x288] sm:$0xff]
    %v113 = vld [vmem:[#allocation2 + $0x290] sm:$0xff]
    %v114 = vld [vmem:[#allocation2 + $0x298] sm:$0xff]
    %v115 = vld [vmem:[#allocation2 + $0x2a0] sm:$0xff]
    %v116 = vld [vmem:[#allocation2 + $0x2a8] sm:$0xff]
    %v117 = vld [vmem:[#allocation2 + $0x2b0] sm:$0xff]
    %v118 = vld [vmem:[#allocation2 + $0x2b8] sm:$0xff]
    %v119 = vld [vmem:[#allocation2 + $0x2c0] sm:$0xff]
    %v120 = vld [vmem:[#allocation2 + $0x2c8] sm:$0xff]
    %v121 = vld [vmem:[#allocation2 + $0x2d0] sm:$0xff]
    %v122 = vld [vmem:[#allocation2 + $0x2d8] sm:$0xff]
    %v123 = vld [vmem:[#allocation2 + $0x2e0] sm:$0xff]
    %v124 = vld [vmem:[#allocation2 + $0x2e8] sm:$0xff]
    %v125 = vld [vmem:[#allocation2 + $0x2f0] sm:$0xff]
    %v126 = vld [vmem:[#allocation2 + $0x2f8] sm:$0xff]
    %v127 = vld [vmem:[#allocation2 + $0x300] sm:$0xff]
    %v128 = vld [vmem:[#allocation2 + $0x308] sm:$0xff]
    %v129 = vld [vmem:[#allocation2 + $0x310] sm:$0xff]
    %v130 = vld [vmem:[#allocation2 + $0x318] sm:$0xff]
    %v131 = vld [vmem:[#allocation2 + $0x320] sm:$0xff]
    %v132 = vld [vmem:[#allocation2 + $0x328] sm:$0xff]
    %v133 = vld [vmem:[#allocation2 + $0x330] sm:$0xff]
    %v134 = vld [vmem:[#allocation2 + $0x338] sm:$0xff]
    %v135 = vld [vmem:[#allocation2 + $0x340] sm:$0xff]
    %v136 = vld [vmem:[#allocation2 + $0x348] sm:$0xff]
    %v137 = vld [vmem:[#allocation2 + $0x350] sm:$0xff]
    %v138 = vld [vmem:[#allocation2 + $0x358] sm:$0xff]
    %v139 = vld [vmem:[#allocation2 + $0x360] sm:$0xff]
    %v140 = vld [vmem:[#allocation2 + $0x368] sm:$0xff]
    %v141 = vld [vmem:[#allocation2 + $0x370] sm:$0xff]
    %v142 = vld [vmem:[#allocation2 + $0x378] sm:$0xff]
    %v143 = vld [vmem:[#allocation2 + $0x380] sm:$0xff]
    %v144 = vld [vmem:[#allocation2 + $0x388] sm:$0xff]
    %v145 = vld [vmem:[#allocation2 + $0x390] sm:$0xff]
    %v146 = vld [vmem:[#allocation2 + $0x398] sm:$0xff]
    %v147 = vld [vmem:[#allocation2 + $0x3a0] sm:$0xff]
    %v148 = vld [vmem:[#allocation2 + $0x3a8] sm:$0xff]
    %v149 = vld [vmem:[#allocation2 + $0x3b0] sm:$0xff]
    %v150 = vld [vmem:[#allocation2 + $0x3b8] sm:$0xff]
    %v151 = vld [vmem:[#allocation2 + $0x3c0] sm:$0xff]
    %v152 = vld [vmem:[#allocation2 + $0x3c8] sm:$0xff]
    %v153 = vld [vmem:[#allocation2 + $0x3d0] sm:$0xff]
    %v154 = vld [vmem:[#allocation2 + $0x3d8] sm:$0xff]
    %v155 = vld [vmem:[#allocation2 + $0x3e0] sm:$0xff]
    %v156 = vld [vmem:[#allocation2 + $0x3e8] sm:$0xff]
    %v157 = vld [vmem:[#allocation2 + $0x3f0] sm:$0xff]
    %v158 = vld [vmem:[#allocation2 + $0x3f8] sm:$0xff]
    %v159 = vld [vmem:[#allocation2 + $0x400] sm:$0xff]
    %v160 = vld [vmem:[#allocation2 + $0x408] sm:$0xff]
    %v161 = vld [vmem:[#allocation2 + $0x410] sm:$0xff]
    %v162 = vld [vmem:[#allocation2 + $0x418] sm:$0xff]
    %v163 = vld [vmem:[#allocation2 + $0x420] sm:$0xff]
    %v164 = vld [vmem:[#allocation2 + $0x428] sm:$0xff]
    %v165 = vld [vmem:[#allocation2 + $0x430] sm:$0xff]
    %v166 = vld [vmem:[#allocation2 + $0x438] sm:$0xff]
    %v167 = vld [vmem:[#allocation2 + $0x440] sm:$0xff]
    %v168 = vld [vmem:[#allocation2 + $0x448] sm:$0xff]
    %v169 = vld [vmem:[#allocation2 + $0x450] sm:$0xff]
    %v170 = vld [vmem:[#allocation2 + $0x458] sm:$0xff]
    %v171 = vld [vmem:[#allocation2 + $0x460] sm:$0xff]
    %v172 = vld [vmem:[#allocation2 + $0x468] sm:$0xff]
    %v173 = vld [vmem:[#allocation2 + $0x470] sm:$0xff]
    %v174 = vld [vmem:[#allocation2 + $0x478] sm:$0xff]
    %v175 = vld [vmem:[#allocation2 + $0x480] sm:$0xff]
    %v176 = vld [vmem:[#allocation2 + $0x488] sm:$0xff]
    %v177 = vld [vmem:[#allocation2 + $0x490] sm:$0xff]
    %v178 = vld [vmem:[#allocation2 + $0x498] sm:$0xff]
    %v179 = vld [vmem:[#allocation2 + $0x4a0] sm:$0xff]
    %v180 = vld [vmem:[#allocation2 + $0x4a8] sm:$0xff]
    %v181 = vld [vmem:[#allocation2 + $0x4b0] sm:$0xff]
    %v182 = vld [vmem:[#allocation2 + $0x4b8] sm:$0xff]
    %v183 = vld [vmem:[#allocation2 + $0x4c0] sm:$0xff]
    %v184 = vld [vmem:[#allocation2 + $0x4c8] sm:$0xff]
    %v185 = vld [vmem:[#allocation2 + $0x4d0] sm:$0xff]
    %v186 = vld [vmem:[#allocation2 + $0x4d8] sm:$0xff]
    %v187 = vld [vmem:[#allocation2 + $0x4e0] sm:$0xff]
    %v188 = vld [vmem:[#allocation2 + $0x4e8] sm:$0xff]
    %v189 = vld [vmem:[#allocation2 + $0x4f0] sm:$0xff]
    %v190 = vld [vmem:[#allocation2 + $0x4f8] sm:$0xff]
    %v191 = vld [vmem:[#allocation2 + $0x500] sm:$0xff]
    %v192 = vld [vmem:[#allocation2 + $0x508] sm:$0xff]
    %v193 = vld [vmem:[#allocation2 + $0x510] sm:$0xff]
    %v194 = vld [vmem:[#allocation2 + $0x518] sm:$0xff]
    %v195 = vld [vmem:[#allocation2 + $0x520] sm:$0xff]
    %v196 = vld [vmem:[#allocation2 + $0x528] sm:$0xff]
    %v197 = vld [vmem:[#allocation2 + $0x530] sm:$0xff]
    %v198 = vld [vmem:[#allocation2 + $0x538] sm:$0xff]
    %v199 = vld [vmem:[#allocation2 + $0x540] sm:$0xff]
    %v200 = vld [vmem:[#allocation2 + $0x548] sm:$0xff]
    %v201 = vld [vmem:[#allocation2 + $0x550] sm:$0xff]
    %v202 = vld [vmem:[#allocation2 + $0x558] sm:$0xff]
    %v203 = vld [vmem:[#allocation2 + $0x560] sm:$0xff]
    %v204 = vld [vmem:[#allocation2 + $0x568] sm:$0xff]
    %v205 = vld [vmem:[#allocation2 + $0x570] sm:$0xff]
    %v206 = vld [vmem:[#allocation2 + $0x578] sm:$0xff]
    %v207 = vld [vmem:[#allocation2 + $0x580] sm:$0xff]
    %v208 = vld [vmem:[#allocation2 + $0x588] sm:$0xff]
    %v209 = vld [vmem:[#allocation2 + $0x590] sm:$0xff]
    %v210 = vld [vmem:[#allocation2 + $0x598] sm:$0xff]
    %v211 = vld [vmem:[#allocation2 + $0x5a0] sm:$0xff]
    %v212 = vld [vmem:[#allocation2 + $0x5a8] sm:$0xff]
    %v213 = vld [vmem:[#allocation2 + $0x5b0] sm:$0xff]
    %v214 = vld [vmem:[#allocation2 + $0x5b8] sm:$0xff]
    %v215 = vld [vmem:[#allocation2 + $0x5c0] sm:$0xff]
    %v216 = vld [vmem:[#allocation2 + $0x5c8] sm:$0xff]
    %v217 = vld [vmem:[#allocation2 + $0x5d0] sm:$0xff]
    %v218 = vld [vmem:[#allocation2 + $0x5d8] sm:$0xff]
    %v219 = vld [vmem:[#allocation2 + $0x5e0] sm:$0xff]
    %v220 = vld [vmem:[#allocation2 + $0x5e8] sm:$0xff]
    %v221 = vld [vmem:[#allocation2 + $0x5f0] sm:$0xff]
    %v222 = vld [vmem:[#allocation2 + $0x5f8] sm:$0xff]
    %v223 = vld [vmem:[#allocation2 + $0x600] sm:$0xff]
    %v224 = vld [vmem:[#allocation2 + $0x608] sm:$0xff]
    %v225 = vld [vmem:[#allocation2 + $0x610] sm:$0xff]
    %v226 = vld [vmem:[#allocation2 + $0x618] sm:$0xff]
    %v227 = vld [vmem:[#allocation2 + $0x620] sm:$0xff]
    %v228 = vld [vmem:[#allocation2 + $0x628] sm:$0xff]
    %v229 = vld [vmem:[#allocation2 + $0x630] sm:$0xff]
    %v230 = vld [vmem:[#allocation2 + $0x638] sm:$0xff]
    %v231 = vld [vmem:[#allocation2 + $0x640] sm:$0xff]
    %v232 = vld [vmem:[#allocation2 + $0x648] sm:$0xff]
    %v233 = vld [vmem:[#allocation2 + $0x650] sm:$0xff]
    %v234 = vld [vmem:[#allocation2 + $0x658] sm:$0xff]
    %v235 = vld [vmem:[#allocation2 + $0x660] sm:$0xff]
    %v236 = vld [vmem:[#allocation2 + $0x668] sm:$0xff]
    %v237 = vld [vmem:[#allocation2 + $0x670] sm:$0xff]
    %v238 = vld [vmem:[#allocation2 + $0x678] sm:$0xff]
    %v239 = vld [vmem:[#allocation2 + $0x680] sm:$0xff]
    %v240 = vld [vmem:[#allocation2 + $0x688] sm:$0xff]
    %v241 = vld [vmem:[#allocation2 + $0x690] sm:$0xff]
    %v242 = vld [vmem:[#allocation2 + $0x698] sm:$0xff]
    %v243 = vld [vmem:[#allocation2 + $0x6a0] sm:$0xff]
    %v244 = vld [vmem:[#allocation2 + $0x6a8] sm:$0xff]
    %v245 = vld [vmem:[#allocation2 + $0x6b0] sm:$0xff]
    %v246 = vld [vmem:[#allocation2 + $0x6b8] sm:$0xff]
    %v247 = vld [vmem:[#allocation2 + $0x6c0] sm:$0xff]
    %v248 = vld [vmem:[#allocation2 + $0x6c8] sm:$0xff]
    %v249 = vld [vmem:[#allocation2 + $0x6d0] sm:$0xff]
    %v250 = vld [vmem:[#allocation2 + $0x6d8] sm:$0xff]
    %v251 = vld [vmem:[#allocation2 + $0x6e0] sm:$0xff]
    %v252 = vld [vmem:[#allocation2 + $0x6e8] sm:$0xff]
    %v253 = vld [vmem:[#allocation2 + $0x6f0] sm:$0xff]
    %v254 = vld [vmem:[#allocation2 + $0x6f8] sm:$0xff]
    %v255 = vld [vmem:[#allocation2 + $0x700] sm:$0xff]
    %v256 = vld [vmem:[#allocation2 + $0x708] sm:$0xff]
    %v257 = vld [vmem:[#allocation2 + $0x710] sm:$0xff]
    %v258 = vld [vmem:[#allocation2 + $0x718] sm:$0xff]
    %v259 = vld [vmem:[#allocation2 + $0x720] sm:$0xff]
    %v260 = vld [vmem:[#allocation2 + $0x728] sm:$0xff]
    %v261 = vld [vmem:[#allocation2 + $0x730] sm:$0xff]
    %v262 = vld [vmem:[#allocation2 + $0x738] sm:$0xff]
    %v263 = vld [vmem:[#allocation2 + $0x740] sm:$0xff]
    %v264 = vld [vmem:[#allocation2 + $0x748] sm:$0xff]
    %v265 = vld [vmem:[#allocation2 + $0x750] sm:$0xff]
    %v266 = vld [vmem:[#allocation2 + $0x758] sm:$0xff]
    %v267 = vld [vmem:[#allocation2 + $0x760] sm:$0xff]
    %v268 = vld [vmem:[#allocation2 + $0x768] sm:$0xff]
    %v269 = vld [vmem:[#allocation2 + $0x770] sm:$0xff]
    %v270 = vld [vmem:[#allocation2 + $0x778] sm:$0xff]
    %v271 = vld [vmem:[#allocation2 + $0x780] sm:$0xff]
    %v272 = vld [vmem:[#allocation2 + $0x788] sm:$0xff]
    %v273 = vld [vmem:[#allocation2 + $0x790] sm:$0xff]
    %v274 = vld [vmem:[#allocation2 + $0x798] sm:$0xff]
    %v275 = vld [vmem:[#allocation2 + $0x7a0] sm:$0xff]
    %v276 = vld [vmem:[#allocation2 + $0x7a8] sm:$0xff]
    %v277 = vld [vmem:[#allocation2 + $0x7b0] sm:$0xff]
    %v278 = vld [vmem:[#allocation2 + $0x7b8] sm:$0xff]
    %v279 = vld [vmem:[#allocation2 + $0x7c0] sm:$0xff]
    %v280 = vld [vmem:[#allocation2 + $0x7c8] sm:$0xff]
    %v281 = vld [vmem:[#allocation2 + $0x7d0] sm:$0xff]
    %v282 = vld [vmem:[#allocation2 + $0x7d8] sm:$0xff]
    %v283 = vld [vmem:[#allocation2 + $0x7e0] sm:$0xff]
    %v284 = vld [vmem:[#allocation2 + $0x7e8] sm:$0xff]
    %v285 = vld [vmem:[#allocation2 + $0x7f0] sm:$0xff]
    %v286 = vld [vmem:[#allocation2 + $0x7f8] sm:$0xff]
    %v287 = vld [vmem:[#allocation2 + $0x800] sm:$0xff]
    %v288 = vld [vmem:[#allocation2 + $0x808] sm:$0xff]
    %v289 = vld [vmem:[#allocation2 + $0x810] sm:$0xff]
    %v290 = vld [vmem:[#allocation2 + $0x818] sm:$0xff]
    %v291 = vld [vmem:[#allocation2 + $0x820] sm:$0xff]
    %v292 = vld [vmem:[#allocation2 + $0x828] sm:$0xff]
    %v293 = vld [vmem:[#allocation2 + $0x830] sm:$0xff]
    %v294 = vld [vmem:[#allocation2 + $0x838] sm:$0xff]
    %v295 = vld [vmem:[#allocation2 + $0x840] sm:$0xff]
    %v296 = vld [vmem:[#allocation2 + $0x848] sm:$0xff]
    %v297 = vld [vmem:[#allocation2 + $0x850] sm:$0xff]
    %v298 = vld [vmem:[#allocation2 + $0x858] sm:$0xff]
    %v299 = vld [vmem:[#allocation2 + $0x860] sm:$0xff]
    %v300 = vld [vmem:[#allocation2 + $0x868] sm:$0xff]
    %v301 = vld [vmem:[#allocation2 + $0x870] sm:$0xff]
    %v302 = vld [vmem:[#allocation2 + $0x878] sm:$0xff]
    %v303 = vld [vmem:[#allocation2 + $0x880] sm:$0xff]
    %v304 = vld [vmem:[#allocation2 + $0x888] sm:$0xff]
    %v305 = vld [vmem:[#allocation2 + $0x890] sm:$0xff]
    %v306 = vld [vmem:[#allocation2 + $0x898] sm:$0xff]
    %v307 = vld [vmem:[#allocation2 + $0x8a0] sm:$0xff]
    %v308 = vld [vmem:[#allocation2 + $0x8a8] sm:$0xff]
    %v309 = vld [vmem:[#allocation2 + $0x8b0] sm:$0xff]
    %v310 = vld [vmem:[#allocation2 + $0x8b8] sm:$0xff]
    %v311 = vld [vmem:[#allocation2 + $0x8c0] sm:$0xff]
    %v312 = vld [vmem:[#allocation2 + $0x8c8] sm:$0xff]
    %v313 = vld [vmem:[#allocation2 + $0x8d0] sm:$0xff]
    %v314 = vld [vmem:[#allocation2 + $0x8d8] sm:$0xff]
    %v315 = vld [vmem:[#allocation2 + $0x8e0] sm:$0xff]
    %v316 = vld [vmem:[#allocation2 + $0x8e8] sm:$0xff]
    %v317 = vld [vmem:[#allocation2 + $0x8f0] sm:$0xff]
    %v318 = vld [vmem:[#allocation2 + $0x8f8] sm:$0xff]
    %v319 = vld [vmem:[#allocation2 + $0x900] sm:$0xff]
    %v320 = vld [vmem:[#allocation2 + $0x908] sm:$0xff]
    %v321 = vld [vmem:[#allocation2 + $0x910] sm:$0xff]
    %v322 = vld [vmem:[#allocation2 + $0x918] sm:$0xff]
    %v323 = vld [vmem:[#allocation2 + $0x920] sm:$0xff]
    %v324 = vld [vmem:[#allocation2 + $0x928] sm:$0xff]
    %v325 = vld [vmem:[#allocation2 + $0x930] sm:$0xff]
    %v326 = vld [vmem:[#allocation2 + $0x938] sm:$0xff]
    %v327 = vld [vmem:[#allocation2 + $0x940] sm:$0xff]
    %v328 = vld [vmem:[#allocation2 + $0x948] sm:$0xff]
    %v329 = vld [vmem:[#allocation2 + $0x950] sm:$0xff]
    %v330 = vld [vmem:[#allocation2 + $0x958] sm:$0xff]
    %v331 = vld [vmem:[#allocation2 + $0x960] sm:$0xff]
    %v332 = vld [vmem:[#allocation2 + $0x968] sm:$0xff]
    %v333 = vld [vmem:[#allocation2 + $0x970] sm:$0xff]
    %v334 = vld [vmem:[#allocation2 + $0x978] sm:$0xff]
    %v335 = vld [vmem:[#allocation2 + $0x980] sm:$0xff]
    %v336 = vld [vmem:[#allocation2 + $0x988] sm:$0xff]
    %v337 = vld [vmem:[#allocation2 + $0x990] sm:$0xff]
    %v338 = vld [vmem:[#allocation2 + $0x998] sm:$0xff]
    %v339 = vld [vmem:[#allocation2 + $0x9a0] sm:$0xff]
    %v340 = vld [vmem:[#allocation2 + $0x9a8] sm:$0xff]
    %v341 = vld [vmem:[#allocation2 + $0x9b0] sm:$0xff]
    %v342 = vld [vmem:[#allocation2 + $0x9b8] sm:$0xff]
    %v343 = vld [vmem:[#allocation2 + $0x9c0] sm:$0xff]
    %v344 = vld [vmem:[#allocation2 + $0x9c8] sm:$0xff]
    %v345 = vld [vmem:[#allocation2 + $0x9d0] sm:$0xff]
    %v346 = vld [vmem:[#allocation2 + $0x9d8] sm:$0xff]
    %v347 = vld [vmem:[#allocation2 + $0x9e0] sm:$0xff]
    %v348 = vld [vmem:[#allocation2 + $0x9e8] sm:$0xff]
    %v349 = vld [vmem:[#allocation2 + $0x9f0] sm:$0xff]
    %v350 = vld [vmem:[#allocation2 + $0x9f8] sm:$0xff]
    %v351 = vld [vmem:[#allocation2 + $0xa00] sm:$0xff]
    %v352 = vld [vmem:[#allocation2 + $0xa08] sm:$0xff]
    %v353 = vld [vmem:[#allocation2 + $0xa10] sm:$0xff]
    %v354 = vld [vmem:[#allocation2 + $0xa18] sm:$0xff]
    %v355 = vld [vmem:[#allocation2 + $0xa20] sm:$0xff]
    %v356 = vld [vmem:[#allocation2 + $0xa28] sm:$0xff]
    %v357 = vld [vmem:[#allocation2 + $0xa30] sm:$0xff]
    %v358 = vld [vmem:[#allocation2 + $0xa38] sm:$0xff]
    %v359 = vld [vmem:[#allocation2 + $0xa40] sm:$0xff]
    %v360 = vld [vmem:[#allocation2 + $0xa48] sm:$0xff]
    %v361 = vld [vmem:[#allocation2 + $0xa50] sm:$0xff]
    %v362 = vld [vmem:[#allocation2 + $0xa58] sm:$0xff]
    %v363 = vld [vmem:[#allocation2 + $0xa60] sm:$0xff]
    %v364 = vld [vmem:[#allocation2 + $0xa68] sm:$0xff]
    %v365 = vld [vmem:[#allocation2 + $0xa70] sm:$0xff]
    %v366 = vld [vmem:[#allocation2 + $0xa78] sm:$0xff]
    %v367 = vld [vmem:[#allocation2 + $0xa80] sm:$0xff]
    %v368 = vld [vmem:[#allocation2 + $0xa88] sm:$0xff]
    %v369 = vld [vmem:[#allocation2 + $0xa90] sm:$0xff]
    %v370 = vld [vmem:[#allocation2 + $0xa98] sm:$0xff]
    %v371 = vld [vmem:[#allocation2 + $0xaa0] sm:$0xff]
    %v372 = vld [vmem:[#allocation2 + $0xaa8] sm:$0xff]
    %v373 = vld [vmem:[#allocation2 + $0xab0] sm:$0xff]
    %v374 = vld [vmem:[#allocation2 + $0xab8] sm:$0xff]
    %v375 = vld [vmem:[#allocation2 + $0xac0] sm:$0xff]
    %v376 = vld [vmem:[#allocation2 + $0xac8] sm:$0xff]
    %v377 = vld [vmem:[#allocation2 + $0xad0] sm:$0xff]
    %v378 = vld [vmem:[#allocation2 + $0xad8] sm:$0xff]
    %v379 = vld [vmem:[#allocation2 + $0xae0] sm:$0xff]
    %v380 = vld [vmem:[#allocation2 + $0xae8] sm:$0xff]
    %v381 = vld [vmem:[#allocation2 + $0xaf0] sm:$0xff]
    %v382 = vld [vmem:[#allocation2 + $0xaf8] sm:$0xff]
    %v383 = vld [vmem:[#allocation2 + $0xb00] sm:$0xff]
    %v384 = vld [vmem:[#allocation2 + $0xb08] sm:$0xff]
    %v385 = vld [vmem:[#allocation2 + $0xb10] sm:$0xff]
    %v386 = vld [vmem:[#allocation2 + $0xb18] sm:$0xff]
    %v387 = vld [vmem:[#allocation2 + $0xb20] sm:$0xff]
    %v388 = vld [vmem:[#allocation2 + $0xb28] sm:$0xff]
    %v389 = vld [vmem:[#allocation2 + $0xb30] sm:$0xff]
    %v390 = vld [vmem:[#allocation2 + $0xb38] sm:$0xff]
    %v391 = vld [vmem:[#allocation2 + $0xb40] sm:$0xff]
    %v392 = vld [vmem:[#allocation2 + $0xb48] sm:$0xff]
    %v393 = vld [vmem:[#allocation2 + $0xb50] sm:$0xff]
    %v394 = vld [vmem:[#allocation2 + $0xb58] sm:$0xff]
    %v395 = vld [vmem:[#allocation2 + $0xb60] sm:$0xff]
    %v396 = vld [vmem:[#allocation2 + $0xb68] sm:$0xff]
    %v397 = vld [vmem:[#allocation2 + $0xb70] sm:$0xff]
    %v398 = vld [vmem:[#allocation2 + $0xb78] sm:$0xff]
    %v399 = vld [vmem:[#allocation2 + $0xb80] sm:$0xff]
    %v400 = vld [vmem:[#allocation2 + $0xb88] sm:$0xff]
    %v401 = vld [vmem:[#allocation2 + $0xb90] sm:$0xff]
    %v402 = vld [vmem:[#allocation2 + $0xb98] sm:$0xff]
    %v403 = vld [vmem:[#allocation2 + $0xba0] sm:$0xff]
    %v404 = vld [vmem:[#allocation2 + $0xba8] sm:$0xff]
    %v405 = vld [vmem:[#allocation2 + $0xbb0] sm:$0xff]
    %v406 = vld [vmem:[#allocation2 + $0xbb8] sm:$0xff]
    %v407 = vld [vmem:[#allocation2 + $0xbc0] sm:$0xff]
    %v408 = vld [vmem:[#allocation2 + $0xbc8] sm:$0xff]
    %v409 = vld [vmem:[#allocation2 + $0xbd0] sm:$0xff]
    %v410 = vld [vmem:[#allocation2 + $0xbd8] sm:$0xff]
    %v411 = vld [vmem:[#allocation2 + $0xbe0] sm:$0xff]
    %v412 = vld [vmem:[#allocation2 + $0xbe8] sm:$0xff]
    %v413 = vld [vmem:[#allocation2 + $0xbf0] sm:$0xff]
    %v414 = vld [vmem:[#allocation2 + $0xbf8] sm:$0xff]
    %v415 = vld [vmem:[#allocation2 + $0xc00] sm:$0xff]
    %v416 = vld [vmem:[#allocation2 + $0xc08] sm:$0xff]
    %v417 = vld [vmem:[#allocation2 + $0xc10] sm:$0xff]
    %v418 = vld [vmem:[#allocation2 + $0xc18] sm:$0xff]
    %v419 = vld [vmem:[#allocation2 + $0xc20] sm:$0xff]
    %v420 = vld [vmem:[#allocation2 + $0xc28] sm:$0xff]
    %v421 = vld [vmem:[#allocation2 + $0xc30] sm:$0xff]
    %v422 = vld [vmem:[#allocation2 + $0xc38] sm:$0xff]
    %v423 = vld [vmem:[#allocation2 + $0xc40] sm:$0xff]
    %v424 = vld [vmem:[#allocation2 + $0xc48] sm:$0xff]
    %v425 = vld [vmem:[#allocation2 + $0xc50] sm:$0xff]
    %v426 = vld [vmem:[#allocation2 + $0xc58] sm:$0xff]
    %v427 = vld [vmem:[#allocation2 + $0xc60] sm:$0xff]
    %v428 = vld [vmem:[#allocation2 + $0xc68] sm:$0xff]
    %v429 = vld [vmem:[#allocation2 + $0xc70] sm:$0xff]
    %v430 = vld [vmem:[#allocation2 + $0xc78] sm:$0xff]
    %v431 = vld [vmem:[#allocation2 + $0xc80] sm:$0xff]
    %v432 = vld [vmem:[#allocation2 + $0xc88] sm:$0xff]
    %v433 = vld [vmem:[#allocation2 + $0xc90] sm:$0xff]
    %v434 = vld [vmem:[#allocation2 + $0xc98] sm:$0xff]
    %v435 = vld [vmem:[#allocation2 + $0xca0] sm:$0xff]
    %v436 = vld [vmem:[#allocation2 + $0xca8] sm:$0xff]
    %v437 = vld [vmem:[#allocation2 + $0xcb0] sm:$0xff]
    %v438 = vld [vmem:[#allocation2 + $0xcb8] sm:$0xff]
    %v439 = vld [vmem:[#allocation2 + $0xcc0] sm:$0xff]
    %v440 = vld [vmem:[#allocation2 + $0xcc8] sm:$0xff]
    %v441 = vld [vmem:[#allocation2 + $0xcd0] sm:$0xff]
    %v442 = vld [vmem:[#allocation2 + $0xcd8] sm:$0xff]
    %v443 = vld [vmem:[#allocation2 + $0xce0] sm:$0xff]
    %v444 = vld [vmem:[#allocation2 + $0xce8] sm:$0xff]
    %v445 = vld [vmem:[#allocation2 + $0xcf0] sm:$0xff]
    %v446 = vld [vmem:[#allocation2 + $0xcf8] sm:$0xff]
    %v447 = vld [vmem:[#allocation2 + $0xd00] sm:$0xff]
    %v448 = vld [vmem:[#allocation2 + $0xd08] sm:$0xff]
    %v449 = vld [vmem:[#allocation2 + $0xd10] sm:$0xff]
    %v450 = vld [vmem:[#allocation2 + $0xd18] sm:$0xff]
    %v451 = vld [vmem:[#allocation2 + $0xd20] sm:$0xff]
    %v452 = vld [vmem:[#allocation2 + $0xd28] sm:$0xff]
    %v453 = vld [vmem:[#allocation2 + $0xd30] sm:$0xff]
    %v454 = vld [vmem:[#allocation2 + $0xd38] sm:$0xff]
    %v455 = vld [vmem:[#allocation2 + $0xd40] sm:$0xff]
    %v456 = vld [vmem:[#allocation2 + $0xd48] sm:$0xff]
    %v457 = vld [vmem:[#allocation2 + $0xd50] sm:$0xff]
    %v458 = vld [vmem:[#allocation2 + $0xd58] sm:$0xff]
    %v459 = vld [vmem:[#allocation2 + $0xd60] sm:$0xff]
    %v460 = vld [vmem:[#allocation2 + $0xd68] sm:$0xff]
    %v461 = vld [vmem:[#allocation2 + $0xd70] sm:$0xff]
    %v462 = vld [vmem:[#allocation2 + $0xd78] sm:$0xff]
    %v463 = vld [vmem:[#allocation2 + $0xd80] sm:$0xff]
    %v464 = vld [vmem:[#allocation2 + $0xd88] sm:$0xff]
    %v465 = vld [vmem:[#allocation2 + $0xd90] sm:$0xff]
    %v466 = vld [vmem:[#allocation2 + $0xd98] sm:$0xff]
    %v467 = vld [vmem:[#allocation2 + $0xda0] sm:$0xff]
    %v468 = vld [vmem:[#allocation2 + $0xda8] sm:$0xff]
    %v469 = vld [vmem:[#allocation2 + $0xdb0] sm:$0xff]
    %v470 = vld [vmem:[#allocation2 + $0xdb8] sm:$0xff]
    %v471 = vld [vmem:[#allocation2 + $0xdc0] sm:$0xff]
    %v472 = vld [vmem:[#allocation2 + $0xdc8] sm:$0xff]
    %v473 = vld [vmem:[#allocation2 + $0xdd0] sm:$0xff]
    %v474 = vld [vmem:[#allocation2 + $0xdd8] sm:$0xff]
    %v475 = vld [vmem:[#allocation2 + $0xde0] sm:$0xff]
    %v476 = vld [vmem:[#allocation2 + $0xde8] sm:$0xff]
    %v477 = vld [vmem:[#allocation2 + $0xdf0] sm:$0xff]
    %v478 = vld [vmem:[#allocation2 + $0xdf8] sm:$0xff]
    %v479 = vld [vmem:[#allocation2 + $0xe00] sm:$0xff]
    %v480 = vld [vmem:[#allocation2 + $0xe08] sm:$0xff]
    %v481 = vld [vmem:[#allocation2 + $0xe10] sm:$0xff]
    %v482 = vld [vmem:[#allocation2 + $0xe18] sm:$0xff]
    %v483 = vld [vmem:[#allocation2 + $0xe20] sm:$0xff]
    %v484 = vld [vmem:[#allocation2 + $0xe28] sm:$0xff]
    %v485 = vld [vmem:[#allocation2 + $0xe30] sm:$0xff]
    %v486 = vld [vmem:[#allocation2 + $0xe38] sm:$0xff]
    %v487 = vld [vmem:[#allocation2 + $0xe40] sm:$0xff]
    %v488 = vld [vmem:[#allocation2 + $0xe48] sm:$0xff]
    %v489 = vld [vmem:[#allocation2 + $0xe50] sm:$0xff]
    %v490 = vld [vmem:[#allocation2 + $0xe58] sm:$0xff]
    %v491 = vld [vmem:[#allocation2 + $0xe60] sm:$0xff]
    %v492 = vld [vmem:[#allocation2 + $0xe68] sm:$0xff]
    %v493 = vld [vmem:[#allocation2 + $0xe70] sm:$0xff]
    %v494 = vld [vmem:[#allocation2 + $0xe78] sm:$0xff]
    %v495 = vld [vmem:[#allocation2 + $0xe80] sm:$0xff]
    %v496 = vld [vmem:[#allocation2 + $0xe88] sm:$0xff]
    %v497 = vld [vmem:[#allocation2 + $0xe90] sm:$0xff]
    %v498 = vld [vmem:[#allocation2 + $0xe98] sm:$0xff]
    %v499 = vld [vmem:[#allocation2 + $0xea0] sm:$0xff]
    %v500 = vld [vmem:[#allocation2 + $0xea8] sm:$0xff]
    %v501 = vld [vmem:[#allocation2 + $0xeb0] sm:$0xff]
    %v502 = vld [vmem:[#allocation2 + $0xeb8] sm:$0xff]
    %v503 = vld [vmem:[#allocation2 + $0xec0] sm:$0xff]
    %v504 = vld [vmem:[#allocation2 + $0xec8] sm:$0xff]
    %v505 = vld [vmem:[#allocation2 + $0xed0] sm:$0xff]
    %v506 = vld [vmem:[#allocation2 + $0xed8] sm:$0xff]
    %v507 = vld [vmem:[#allocation2 + $0xee0] sm:$0xff]
    %v508 = vld [vmem:[#allocation2 + $0xee8] sm:$0xff]
    %v509 = vld [vmem:[#allocation2 + $0xef0] sm:$0xff]
    %v510 = vld [vmem:[#allocation2 + $0xef8] sm:$0xff]
    %v511 = vld [vmem:[#allocation2 + $0xf00] sm:$0xff]
    %v512 = vld [vmem:[#allocation2 + $0xf08] sm:$0xff]
    %v513 = vld [vmem:[#allocation2 + $0xf10] sm:$0xff]
    %v514 = vld [vmem:[#allocation2 + $0xf18] sm:$0xff]
    %v515 = vld [vmem:[#allocation2 + $0xf20] sm:$0xff]
    %v516 = vld [vmem:[#allocation2 + $0xf28] sm:$0xff]
    %v517 = vld [vmem:[#allocation2 + $0xf30] sm:$0xff]
    %v518 = vld [vmem:[#allocation2 + $0xf38] sm:$0xff]
    %v519 = vld [vmem:[#allocation2 + $0xf40] sm:$0xff]
    %v520 = vld [vmem:[#allocation2 + $0xf48] sm:$0xff]
    %v521 = vld [vmem:[#allocation2 + $0xf50] sm:$0xff]
    %v522 = vld [vmem:[#allocation2 + $0xf58] sm:$0xff]
    %v523 = vld [vmem:[#allocation2 + $0xf60] sm:$0xff]
    %v524 = vld [vmem:[#allocation2 + $0xf68] sm:$0xff]
    %v525 = vld [vmem:[#allocation2 + $0xf70] sm:$0xff]
    %v526 = vld [vmem:[#allocation2 + $0xf78] sm:$0xff]
    %v527 = vld [vmem:[#allocation2 + $0xf80] sm:$0xff]
    %v528 = vld [vmem:[#allocation2 + $0xf88] sm:$0xff]
    %v529 = vld [vmem:[#allocation2 + $0xf90] sm:$0xff]
    %v530 = vld [vmem:[#allocation2 + $0xf98] sm:$0xff]
    %v531 = vld [vmem:[#allocation2 + $0xfa0] sm:$0xff]
    %v532 = vld [vmem:[#allocation2 + $0xfa8] sm:$0xff]
    %v533 = vld [vmem:[#allocation2 + $0xfb0] sm:$0xff]
    %v534 = vld [vmem:[#allocation2 + $0xfb8] sm:$0xff]
    %v535 = vld [vmem:[#allocation2 + $0xfc0] sm:$0xff]
    %v536 = vld [vmem:[#allocation2 + $0xfc8] sm:$0xff]
    %v537 = vld [vmem:[#allocation2 + $0xfd0] sm:$0xff]
    %v538 = vld [vmem:[#allocation2 + $0xfd8] sm:$0xff]
    %v539 = vld [vmem:[#allocation2 + $0xfe0] sm:$0xff]
    %v540 = vld [vmem:[#allocation2 + $0xfe8] sm:$0xff]
    %v541 = vld [vmem:[#allocation2 + $0xff0] sm:$0xff]
    %v542 = vld [vmem:[#allocation2 + $0xff8] sm:$0xff]
    %v543 = vld [vmem:[#allocation2 + $0x1000] sm:$0xff]
    %v544 = vld [vmem:[#allocation2 + $0x1008] sm:$0xff]
    %v545 = vld [vmem:[#allocation2 + $0x1010] sm:$0xff]
    %v546 = vld [vmem:[#allocation2 + $0x1018] sm:$0xff]
    %v547 = vld [vmem:[#allocation2 + $0x1020] sm:$0xff]
    %v548 = vld [vmem:[#allocation2 + $0x1028] sm:$0xff]
    %v549 = vld [vmem:[#allocation2 + $0x1030] sm:$0xff]
    %v550 = vld [vmem:[#allocation2 + $0x1038] sm:$0xff]
    %v551 = vld [vmem:[#allocation2 + $0x1040] sm:$0xff]
    %v552 = vld [vmem:[#allocation2 + $0x1048] sm:$0xff]
    %v553 = vld [vmem:[#allocation2 + $0x1050] sm:$0xff]
    %v554 = vld [vmem:[#allocation2 + $0x1058] sm:$0xff]
    %v555 = vld [vmem:[#allocation2 + $0x1060] sm:$0xff]
    %v556 = vld [vmem:[#allocation2 + $0x1068] sm:$0xff]
    %v557 = vld [vmem:[#allocation2 + $0x1070] sm:$0xff]
    %v558 = vld [vmem:[#allocation2 + $0x1078] sm:$0xff]
    %v559 = vld [vmem:[#allocation2 + $0x1080] sm:$0xff]
    %v560 = vld [vmem:[#allocation2 + $0x1088] sm:$0xff]
    %v561 = vld [vmem:[#allocation2 + $0x1090] sm:$0xff]
    %v562 = vld [vmem:[#allocation2 + $0x1098] sm:$0xff]
    %v563 = vld [vmem:[#allocation2 + $0x10a0] sm:$0xff]
    %v564 = vld [vmem:[#allocation2 + $0x10a8] sm:$0xff]
    %v565 = vld [vmem:[#allocation2 + $0x10b0] sm:$0xff]
    %v566 = vld [vmem:[#allocation2 + $0x10b8] sm:$0xff]
    %v567 = vld [vmem:[#allocation2 + $0x10c0] sm:$0xff]
    %v568 = vld [vmem:[#allocation2 + $0x10c8] sm:$0xff]
    %v569 = vld [vmem:[#allocation2 + $0x10d0] sm:$0xff]
    %v570 = vld [vmem:[#allocation2 + $0x10d8] sm:$0xff]
    %v571 = vld [vmem:[#allocation2 + $0x10e0] sm:$0xff]
    %v572 = vld [vmem:[#allocation2 + $0x10e8] sm:$0xff]
    %v573 = vld [vmem:[#allocation2 + $0x10f0] sm:$0xff]
    %v574 = vld [vmem:[#allocation2 + $0x10f8] sm:$0xff]
    %v575 = vld [vmem:[#allocation2 + $0x1100] sm:$0xff]
    %v576 = vld [vmem:[#allocation2 + $0x1108] sm:$0xff]
    %v577 = vld [vmem:[#allocation2 + $0x1110] sm:$0xff]
    %v578 = vld [vmem:[#allocation2 + $0x1118] sm:$0xff]
    %v579 = vld [vmem:[#allocation2 + $0x1120] sm:$0xff]
    %v580 = vld [vmem:[#allocation2 + $0x1128] sm:$0xff]
    %v581 = vld [vmem:[#allocation2 + $0x1130] sm:$0xff]
    %v582 = vld [vmem:[#allocation2 + $0x1138] sm:$0xff]
    %v583 = vld [vmem:[#allocation2 + $0x1140] sm:$0xff]
    %v584 = vld [vmem:[#allocation2 + $0x1148] sm:$0xff]
    %v585 = vld [vmem:[#allocation2 + $0x1150] sm:$0xff]
    %v586 = vld [vmem:[#allocation2 + $0x1158] sm:$0xff]
    %v587 = vld [vmem:[#allocation2 + $0x1160] sm:$0xff]
    %v588 = vld [vmem:[#allocation2 + $0x1168] sm:$0xff]
    %v589 = vld [vmem:[#allocation2 + $0x1170] sm:$0xff]
    %v590 = vld [vmem:[#allocation2 + $0x1178] sm:$0xff]
    %v591 = vld [vmem:[#allocation2 + $0x1180] sm:$0xff]
    %v592 = vld [vmem:[#allocation2 + $0x1188] sm:$0xff]
    %v593 = vld [vmem:[#allocation2 + $0x1190] sm:$0xff]
    %v594 = vld [vmem:[#allocation2 + $0x1198] sm:$0xff]
    %v595 = vld [vmem:[#allocation2 + $0x11a0] sm:$0xff]
    %v596 = vld [vmem:[#allocation2 + $0x11a8] sm:$0xff]
    %v597 = vld [vmem:[#allocation2 + $0x11b0] sm:$0xff]
    %v598 = vld [vmem:[#allocation2 + $0x11b8] sm:$0xff]
    %v599 = vld [vmem:[#allocation2 + $0x11c0] sm:$0xff]
    %v600 = vld [vmem:[#allocation2 + $0x11c8] sm:$0xff]
    %v601 = vld [vmem:[#allocation2 + $0x11d0] sm:$0xff]
    %v602 = vld [vmem:[#allocation2 + $0x11d8] sm:$0xff]
    %v603 = vld [vmem:[#allocation2 + $0x11e0] sm:$0xff]
    %v604 = vld [vmem:[#allocation2 + $0x11e8] sm:$0xff]
    %v605 = vld [vmem:[#allocation2 + $0x11f0] sm:$0xff]
    %v606 = vld [vmem:[#allocation2 + $0x11f8] sm:$0xff]
    %v607 = vld [vmem:[#allocation2 + $0x1200] sm:$0xff]
    %v608 = vld [vmem:[#allocation2 + $0x1208] sm:$0xff]
    %v609 = vld [vmem:[#allocation2 + $0x1210] sm:$0xff]
    %v610 = vld [vmem:[#allocation2 + $0x1218] sm:$0xff]
    %v611 = vld [vmem:[#allocation2 + $0x1220] sm:$0xff]
    %v612 = vld [vmem:[#allocation2 + $0x1228] sm:$0xff]
    %v613 = vld [vmem:[#allocation2 + $0x1230] sm:$0xff]
    %v614 = vld [vmem:[#allocation2 + $0x1238] sm:$0xff]
    %v615 = vld [vmem:[#allocation2 + $0x1240] sm:$0xff]
    %v616 = vld [vmem:[#allocation2 + $0x1248] sm:$0xff]
    %v617 = vld [vmem:[#allocation2 + $0x1250] sm:$0xff]
    %v618 = vld [vmem:[#allocation2 + $0x1258] sm:$0xff]
    %v619 = vld [vmem:[#allocation2 + $0x1260] sm:$0xff]
    %v620 = vld [vmem:[#allocation2 + $0x1268] sm:$0xff]
    %v621 = vld [vmem:[#allocation2 + $0x1270] sm:$0xff]
    %v622 = vld [vmem:[#allocation2 + $0x1278] sm:$0xff]
    %v623 = vld [vmem:[#allocation2 + $0x1280] sm:$0xff]
    %v624 = vld [vmem:[#allocation2 + $0x1288] sm:$0xff]
    %v625 = vld [vmem:[#allocation2 + $0x1290] sm:$0xff]
    %v626 = vld [vmem:[#allocation2 + $0x1298] sm:$0xff]
    %v627 = vld [vmem:[#allocation2 + $0x12a0] sm:$0xff]
    %v628 = vld [vmem:[#allocation2 + $0x12a8] sm:$0xff]
    %v629 = vld [vmem:[#allocation2 + $0x12b0] sm:$0xff]
    %v630 = vld [vmem:[#allocation2 + $0x12b8] sm:$0xff]
    %v631 = vld [vmem:[#allocation2 + $0x12c0] sm:$0xff]
    %v632 = vld [vmem:[#allocation2 + $0x12c8] sm:$0xff]
    %v633 = vld [vmem:[#allocation2 + $0x12d0] sm:$0xff]
    %v634 = vld [vmem:[#allocation2 + $0x12d8] sm:$0xff]
    %v635 = vld [vmem:[#allocation2 + $0x12e0] sm:$0xff]
    %v636 = vld [vmem:[#allocation2 + $0x12e8] sm:$0xff]
    %v637 = vld [vmem:[#allocation2 + $0x12f0] sm:$0xff]
    %v638 = vld [vmem:[#allocation2 + $0x12f8] sm:$0xff]
    %v639 = vld [vmem:[#allocation2 + $0x1300] sm:$0xff]
    %v640 = vld [vmem:[#allocation2 + $0x1308] sm:$0xff]
    %v641 = vld [vmem:[#allocation2 + $0x1310] sm:$0xff]
    %v642 = vld [vmem:[#allocation2 + $0x1318] sm:$0xff]
    %v643 = vld [vmem:[#allocation2 + $0x1320] sm:$0xff]
    %v644 = vld [vmem:[#allocation2 + $0x1328] sm:$0xff]
    %v645 = vld [vmem:[#allocation2 + $0x1330] sm:$0xff]
    %v646 = vld [vmem:[#allocation2 + $0x1338] sm:$0xff]
    %v647 = vld [vmem:[#allocation2 + $0x1340] sm:$0xff]
    %v648 = vld [vmem:[#allocation2 + $0x1348] sm:$0xff]
    %v649 = vld [vmem:[#allocation2 + $0x1350] sm:$0xff]
    %v650 = vld [vmem:[#allocation2 + $0x1358] sm:$0xff]
    %v651 = vld [vmem:[#allocation2 + $0x1360] sm:$0xff]
    %v652 = vld [vmem:[#allocation2 + $0x1368] sm:$0xff]
    %v653 = vld [vmem:[#allocation2 + $0x1370] sm:$0xff]
    %v654 = vld [vmem:[#allocation2 + $0x1378] sm:$0xff]
    %v655 = vld [vmem:[#allocation2 + $0x1380] sm:$0xff]
    %v656 = vld [vmem:[#allocation2 + $0x1388] sm:$0xff]
    %v657 = vld [vmem:[#allocation2 + $0x1390] sm:$0xff]
    %v658 = vld [vmem:[#allocation2 + $0x1398] sm:$0xff]
    %v659 = vld [vmem:[#allocation2 + $0x13a0] sm:$0xff]
    %v660 = vld [vmem:[#allocation2 + $0x13a8] sm:$0xff]
    %v661 = vld [vmem:[#allocation2 + $0x13b0] sm:$0xff]
    %v662 = vld [vmem:[#allocation2 + $0x13b8] sm:$0xff]
    %v663 = vld [vmem:[#allocation2 + $0x13c0] sm:$0xff]
    %v664 = vld [vmem:[#allocation2 + $0x13c8] sm:$0xff]
    %v665 = vld [vmem:[#allocation2 + $0x13d0] sm:$0xff]
    %v666 = vld [vmem:[#allocation2 + $0x13d8] sm:$0xff]
    %v667 = vld [vmem:[#allocation2 + $0x13e0] sm:$0xff]
    %v668 = vld [vmem:[#allocation2 + $0x13e8] sm:$0xff]
    %v669 = vld [vmem:[#allocation2 + $0x13f0] sm:$0xff]
    %v670 = vld [vmem:[#allocation2 + $0x13f8] sm:$0xff]
    %v675 = vunpack.c.l.b16 %v27
    %v676 = vunpack.c.h.b16 %v27
    %v677 = vunpack.c.l.b16 %v28
    %v678 = vunpack.c.h.b16 %v28
    %v679 = vunpack.c.l.b16 %v29
    %v680 = vunpack.c.h.b16 %v29
    %v681 = vunpack.c.l.b16 %v30
    %v682 = vunpack.c.h.b16 %v30
    %v683 = vpack.c.b16 %v679, %v675
    %v684 = vpack.c.b16 %v680, %v676
    %v685 = vpack.c.b16 %v681, %v677
    %v686 = vpack.c.b16 %v682, %v678
    %v1331 = vunpack.c.l.b16 %v31
    %v1332 = vunpack.c.h.b16 %v31
    %v1333 = vunpack.c.l.b16 %v32
    %v1334 = vunpack.c.h.b16 %v32
    %v1335 = vunpack.c.l.b16 %v33
    %v1336 = vunpack.c.h.b16 %v33
    %v1337 = vunpack.c.l.b16 %v34
    %v1338 = vunpack.c.h.b16 %v34
    %v1339 = vunpack.c.l.b16 %v35
    %v1340 = vunpack.c.h.b16 %v35
    %v1341 = vunpack.c.l.b16 %v36
    %v1342 = vunpack.c.h.b16 %v36
    %v1343 = vunpack.c.l.b16 %v37
    %v1344 = vunpack.c.h.b16 %v37
    %v1345 = vunpack.c.l.b16 %v38
    %v1346 = vunpack.c.h.b16 %v38
    %v1347 = vunpack.c.l.b16 %v39
    %v1348 = vunpack.c.h.b16 %v39
    %v1349 = vunpack.c.l.b16 %v40
    %v1350 = vunpack.c.h.b16 %v40
    %v1351 = vunpack.c.l.b16 %v41
    %v1352 = vunpack.c.h.b16 %v41
    %v1353 = vunpack.c.l.b16 %v42
    %v1354 = vunpack.c.h.b16 %v42
    %v1355 = vunpack.c.l.b16 %v43
    %v1356 = vunpack.c.h.b16 %v43
    %v1357 = vunpack.c.l.b16 %v44
    %v1358 = vunpack.c.h.b16 %v44
    %v1359 = vunpack.c.l.b16 %v45
    %v1360 = vunpack.c.h.b16 %v45
    %v1361 = vunpack.c.l.b16 %v46
    %v1362 = vunpack.c.h.b16 %v46
    %v1363 = vunpack.c.l.b16 %v47
    %v1364 = vunpack.c.h.b16 %v47
    %v1365 = vunpack.c.l.b16 %v48
    %v1366 = vunpack.c.h.b16 %v48
    %v1367 = vunpack.c.l.b16 %v49
    %v1368 = vunpack.c.h.b16 %v49
    %v1369 = vunpack.c.l.b16 %v50
    %v1370 = vunpack.c.h.b16 %v50
    %v1371 = vunpack.c.l.b16 %v51
    %v1372 = vunpack.c.h.b16 %v51
    %v1373 = vunpack.c.l.b16 %v52
    %v1374 = vunpack.c.h.b16 %v52
    %v1375 = vunpack.c.l.b16 %v53
    %v1376 = vunpack.c.h.b16 %v53
    %v1377 = vunpack.c.l.b16 %v54
    %v1378 = vunpack.c.h.b16 %v54
    %v1379 = vunpack.c.l.b16 %v55
    %v1380 = vunpack.c.h.b16 %v55
    %v1381 = vunpack.c.l.b16 %v56
    %v1382 = vunpack.c.h.b16 %v56
    %v1383 = vunpack.c.l.b16 %v57
    %v1384 = vunpack.c.h.b16 %v57
    %v1385 = vunpack.c.l.b16 %v58
    %v1386 = vunpack.c.h.b16 %v58
    %v1387 = vunpack.c.l.b16 %v59
    %v1388 = vunpack.c.h.b16 %v59
    %v1389 = vunpack.c.l.b16 %v60
    %v1390 = vunpack.c.h.b16 %v60
    %v1391 = vunpack.c.l.b16 %v61
    %v1392 = vunpack.c.h.b16 %v61
    %v1393 = vunpack.c.l.b16 %v62
    %v1394 = vunpack.c.h.b16 %v62
    %v1395 = vunpack.c.l.b16 %v63
    %v1396 = vunpack.c.h.b16 %v63
    %v1397 = vunpack.c.l.b16 %v64
    %v1398 = vunpack.c.h.b16 %v64
    %v1399 = vunpack.c.l.b16 %v65
    %v1400 = vunpack.c.h.b16 %v65
    %v1401 = vunpack.c.l.b16 %v66
    %v1402 = vunpack.c.h.b16 %v66
    %v1403 = vunpack.c.l.b16 %v67
    %v1404 = vunpack.c.h.b16 %v67
    %v1405 = vunpack.c.l.b16 %v68
    %v1406 = vunpack.c.h.b16 %v68
    %v1407 = vunpack.c.l.b16 %v69
    %v1408 = vunpack.c.h.b16 %v69
    %v1409 = vunpack.c.l.b16 %v70
    %v1410 = vunpack.c.h.b16 %v70
    %v1411 = vunpack.c.l.b16 %v71
    %v1412 = vunpack.c.h.b16 %v71
    %v1413 = vunpack.c.l.b16 %v72
    %v1414 = vunpack.c.h.b16 %v72
    %v1415 = vunpack.c.l.b16 %v73
    %v1416 = vunpack.c.h.b16 %v73
    %v1417 = vunpack.c.l.b16 %v74
    %v1418 = vunpack.c.h.b16 %v74
    %v1419 = vunpack.c.l.b16 %v75
    %v1420 = vunpack.c.h.b16 %v75
    %v1421 = vunpack.c.l.b16 %v76
    %v1422 = vunpack.c.h.b16 %v76
    %v1423 = vunpack.c.l.b16 %v77
    %v1424 = vunpack.c.h.b16 %v77
    %v1425 = vunpack.c.l.b16 %v78
    %v1426 = vunpack.c.h.b16 %v78
    %v1427 = vunpack.c.l.b16 %v79
    %v1428 = vunpack.c.h.b16 %v79
    %v1429 = vunpack.c.l.b16 %v80
    %v1430 = vunpack.c.h.b16 %v80
    %v1431 = vunpack.c.l.b16 %v81
    %v1432 = vunpack.c.h.b16 %v81
    %v1433 = vunpack.c.l.b16 %v82
    %v1434 = vunpack.c.h.b16 %v82
    %v1435 = vunpack.c.l.b16 %v83
    %v1436 = vunpack.c.h.b16 %v83
    %v1437 = vunpack.c.l.b16 %v84
    %v1438 = vunpack.c.h.b16 %v84
    %v1439 = vunpack.c.l.b16 %v85
    %v1440 = vunpack.c.h.b16 %v85
    %v1441 = vunpack.c.l.b16 %v86
    %v1442 = vunpack.c.h.b16 %v86
    %v1443 = vunpack.c.l.b16 %v87
    %v1444 = vunpack.c.h.b16 %v87
    %v1445 = vunpack.c.l.b16 %v88
    %v1446 = vunpack.c.h.b16 %v88
    %v1447 = vunpack.c.l.b16 %v89
    %v1448 = vunpack.c.h.b16 %v89
    %v1449 = vunpack.c.l.b16 %v90
    %v1450 = vunpack.c.h.b16 %v90
    %v1451 = vunpack.c.l.b16 %v91
    %v1452 = vunpack.c.h.b16 %v91
    %v1453 = vunpack.c.l.b16 %v92
    %v1454 = vunpack.c.h.b16 %v92
    %v1455 = vunpack.c.l.b16 %v93
    %v1456 = vunpack.c.h.b16 %v93
    %v1457 = vunpack.c.l.b16 %v94
    %v1458 = vunpack.c.h.b16 %v94
    %v1459 = vunpack.c.l.b16 %v95
    %v1460 = vunpack.c.h.b16 %v95
    %v1461 = vunpack.c.l.b16 %v96
    %v1462 = vunpack.c.h.b16 %v96
    %v1463 = vunpack.c.l.b16 %v97
    %v1464 = vunpack.c.h.b16 %v97
    %v1465 = vunpack.c.l.b16 %v98
    %v1466 = vunpack.c.h.b16 %v98
    %v1467 = vunpack.c.l.b16 %v99
    %v1468 = vunpack.c.h.b16 %v99
    %v1469 = vunpack.c.l.b16 %v100
    %v1470 = vunpack.c.h.b16 %v100
    %v1471 = vunpack.c.l.b16 %v101
    %v1472 = vunpack.c.h.b16 %v101
    %v1473 = vunpack.c.l.b16 %v102
    %v1474 = vunpack.c.h.b16 %v102
    %v1475 = vunpack.c.l.b16 %v103
    %v1476 = vunpack.c.h.b16 %v103
    %v1477 = vunpack.c.l.b16 %v104
    %v1478 = vunpack.c.h.b16 %v104
    %v1479 = vunpack.c.l.b16 %v105
    %v1480 = vunpack.c.h.b16 %v105
    %v1481 = vunpack.c.l.b16 %v106
    %v1482 = vunpack.c.h.b16 %v106
    %v1483 = vunpack.c.l.b16 %v107
    %v1484 = vunpack.c.h.b16 %v107
    %v1485 = vunpack.c.l.b16 %v108
    %v1486 = vunpack.c.h.b16 %v108
    %v1487 = vunpack.c.l.b16 %v109
    %v1488 = vunpack.c.h.b16 %v109
    %v1489 = vunpack.c.l.b16 %v110
    %v1490 = vunpack.c.h.b16 %v110
    %v1491 = vunpack.c.l.b16 %v111
    %v1492 = vunpack.c.h.b16 %v111
    %v1493 = vunpack.c.l.b16 %v112
    %v1494 = vunpack.c.h.b16 %v112
    %v1495 = vunpack.c.l.b16 %v113
    %v1496 = vunpack.c.h.b16 %v113
    %v1497 = vunpack.c.l.b16 %v114
    %v1498 = vunpack.c.h.b16 %v114
    %v1499 = vunpack.c.l.b16 %v115
    %v1500 = vunpack.c.h.b16 %v115
    %v1501 = vunpack.c.l.b16 %v116
    %v1502 = vunpack.c.h.b16 %v116
    %v1503 = vunpack.c.l.b16 %v117
    %v1504 = vunpack.c.h.b16 %v117
    %v1505 = vunpack.c.l.b16 %v118
    %v1506 = vunpack.c.h.b16 %v118
    %v1507 = vunpack.c.l.b16 %v119
    %v1508 = vunpack.c.h.b16 %v119
    %v1509 = vunpack.c.l.b16 %v120
    %v1510 = vunpack.c.h.b16 %v120
    %v1511 = vunpack.c.l.b16 %v121
    %v1512 = vunpack.c.h.b16 %v121
    %v1513 = vunpack.c.l.b16 %v122
    %v1514 = vunpack.c.h.b16 %v122
    %v1515 = vunpack.c.l.b16 %v123
    %v1516 = vunpack.c.h.b16 %v123
    %v1517 = vunpack.c.l.b16 %v124
    %v1518 = vunpack.c.h.b16 %v124
    %v1519 = vunpack.c.l.b16 %v125
    %v1520 = vunpack.c.h.b16 %v125
    %v1521 = vunpack.c.l.b16 %v126
    %v1522 = vunpack.c.h.b16 %v126
    %v1523 = vunpack.c.l.b16 %v127
    %v1524 = vunpack.c.h.b16 %v127
    %v1525 = vunpack.c.l.b16 %v128
    %v1526 = vunpack.c.h.b16 %v128
    %v1527 = vunpack.c.l.b16 %v129
    %v1528 = vunpack.c.h.b16 %v129
    %v1529 = vunpack.c.l.b16 %v130
    %v1530 = vunpack.c.h.b16 %v130
    %v1531 = vunpack.c.l.b16 %v131
    %v1532 = vunpack.c.h.b16 %v131
    %v1533 = vunpack.c.l.b16 %v132
    %v1534 = vunpack.c.h.b16 %v132
    %v1535 = vunpack.c.l.b16 %v133
    %v1536 = vunpack.c.h.b16 %v133
    %v1537 = vunpack.c.l.b16 %v134
    %v1538 = vunpack.c.h.b16 %v134
    %v1539 = vunpack.c.l.b16 %v135
    %v1540 = vunpack.c.h.b16 %v135
    %v1541 = vunpack.c.l.b16 %v136
    %v1542 = vunpack.c.h.b16 %v136
    %v1543 = vunpack.c.l.b16 %v137
    %v1544 = vunpack.c.h.b16 %v137
    %v1545 = vunpack.c.l.b16 %v138
    %v1546 = vunpack.c.h.b16 %v138
    %v1547 = vunpack.c.l.b16 %v139
    %v1548 = vunpack.c.h.b16 %v139
    %v1549 = vunpack.c.l.b16 %v140
    %v1550 = vunpack.c.h.b16 %v140
    %v1551 = vunpack.c.l.b16 %v141
    %v1552 = vunpack.c.h.b16 %v141
    %v1553 = vunpack.c.l.b16 %v142
    %v1554 = vunpack.c.h.b16 %v142
    %v1555 = vunpack.c.l.b16 %v143
    %v1556 = vunpack.c.h.b16 %v143
    %v1557 = vunpack.c.l.b16 %v144
    %v1558 = vunpack.c.h.b16 %v144
    %v1559 = vunpack.c.l.b16 %v145
    %v1560 = vunpack.c.h.b16 %v145
    %v1561 = vunpack.c.l.b16 %v146
    %v1562 = vunpack.c.h.b16 %v146
    %v1563 = vunpack.c.l.b16 %v147
    %v1564 = vunpack.c.h.b16 %v147
    %v1565 = vunpack.c.l.b16 %v148
    %v1566 = vunpack.c.h.b16 %v148
    %v1567 = vunpack.c.l.b16 %v149
    %v1568 = vunpack.c.h.b16 %v149
    %v1569 = vunpack.c.l.b16 %v150
    %v1570 = vunpack.c.h.b16 %v150
    %v1571 = vunpack.c.l.b16 %v151
    %v1572 = vunpack.c.h.b16 %v151
    %v1573 = vunpack.c.l.b16 %v152
    %v1574 = vunpack.c.h.b16 %v152
    %v1575 = vunpack.c.l.b16 %v153
    %v1576 = vunpack.c.h.b16 %v153
    %v1577 = vunpack.c.l.b16 %v154
    %v1578 = vunpack.c.h.b16 %v154
    %v1579 = vunpack.c.l.b16 %v155
    %v1580 = vunpack.c.h.b16 %v155
    %v1581 = vunpack.c.l.b16 %v156
    %v1582 = vunpack.c.h.b16 %v156
    %v1583 = vunpack.c.l.b16 %v157
    %v1584 = vunpack.c.h.b16 %v157
    %v1585 = vunpack.c.l.b16 %v158
    %v1586 = vunpack.c.h.b16 %v158
    %v1587 = vunpack.c.l.b16 %v159
    %v1588 = vunpack.c.h.b16 %v159
    %v1589 = vunpack.c.l.b16 %v160
    %v1590 = vunpack.c.h.b16 %v160
    %v1591 = vunpack.c.l.b16 %v161
    %v1592 = vunpack.c.h.b16 %v161
    %v1593 = vunpack.c.l.b16 %v162
    %v1594 = vunpack.c.h.b16 %v162
    %v1595 = vunpack.c.l.b16 %v163
    %v1596 = vunpack.c.h.b16 %v163
    %v1597 = vunpack.c.l.b16 %v164
    %v1598 = vunpack.c.h.b16 %v164
    %v1599 = vunpack.c.l.b16 %v165
    %v1600 = vunpack.c.h.b16 %v165
    %v1601 = vunpack.c.l.b16 %v166
    %v1602 = vunpack.c.h.b16 %v166
    %v1603 = vunpack.c.l.b16 %v167
    %v1604 = vunpack.c.h.b16 %v167
    %v1605 = vunpack.c.l.b16 %v168
    %v1606 = vunpack.c.h.b16 %v168
    %v1607 = vunpack.c.l.b16 %v169
    %v1608 = vunpack.c.h.b16 %v169
    %v1609 = vunpack.c.l.b16 %v170
    %v1610 = vunpack.c.h.b16 %v170
    %v1611 = vunpack.c.l.b16 %v171
    %v1612 = vunpack.c.h.b16 %v171
    %v1613 = vunpack.c.l.b16 %v172
    %v1614 = vunpack.c.h.b16 %v172
    %v1615 = vunpack.c.l.b16 %v173
    %v1616 = vunpack.c.h.b16 %v173
    %v1617 = vunpack.c.l.b16 %v174
    %v1618 = vunpack.c.h.b16 %v174
    %v1619 = vunpack.c.l.b16 %v175
    %v1620 = vunpack.c.h.b16 %v175
    %v1621 = vunpack.c.l.b16 %v176
    %v1622 = vunpack.c.h.b16 %v176
    %v1623 = vunpack.c.l.b16 %v177
    %v1624 = vunpack.c.h.b16 %v177
    %v1625 = vunpack.c.l.b16 %v178
    %v1626 = vunpack.c.h.b16 %v178
    %v1627 = vunpack.c.l.b16 %v179
    %v1628 = vunpack.c.h.b16 %v179
    %v1629 = vunpack.c.l.b16 %v180
    %v1630 = vunpack.c.h.b16 %v180
    %v1631 = vunpack.c.l.b16 %v181
    %v1632 = vunpack.c.h.b16 %v181
    %v1633 = vunpack.c.l.b16 %v182
    %v1634 = vunpack.c.h.b16 %v182
    %v1635 = vunpack.c.l.b16 %v183
    %v1636 = vunpack.c.h.b16 %v183
    %v1637 = vunpack.c.l.b16 %v184
    %v1638 = vunpack.c.h.b16 %v184
    %v1639 = vunpack.c.l.b16 %v185
    %v1640 = vunpack.c.h.b16 %v185
    %v1641 = vunpack.c.l.b16 %v186
    %v1642 = vunpack.c.h.b16 %v186
    %v1643 = vunpack.c.l.b16 %v187
    %v1644 = vunpack.c.h.b16 %v187
    %v1645 = vunpack.c.l.b16 %v188
    %v1646 = vunpack.c.h.b16 %v188
    %v1647 = vunpack.c.l.b16 %v189
    %v1648 = vunpack.c.h.b16 %v189
    %v1649 = vunpack.c.l.b16 %v190
    %v1650 = vunpack.c.h.b16 %v190
    %v1651 = vunpack.c.l.b16 %v191
    %v1652 = vunpack.c.h.b16 %v191
    %v1653 = vunpack.c.l.b16 %v192
    %v1654 = vunpack.c.h.b16 %v192
    %v1655 = vunpack.c.l.b16 %v193
    %v1656 = vunpack.c.h.b16 %v193
    %v1657 = vunpack.c.l.b16 %v194
    %v1658 = vunpack.c.h.b16 %v194
    %v1659 = vunpack.c.l.b16 %v195
    %v1660 = vunpack.c.h.b16 %v195
    %v1661 = vunpack.c.l.b16 %v196
    %v1662 = vunpack.c.h.b16 %v196
    %v1663 = vunpack.c.l.b16 %v197
    %v1664 = vunpack.c.h.b16 %v197
    %v1665 = vunpack.c.l.b16 %v198
    %v1666 = vunpack.c.h.b16 %v198
    %v1667 = vunpack.c.l.b16 %v199
    %v1668 = vunpack.c.h.b16 %v199
    %v1669 = vunpack.c.l.b16 %v200
    %v1670 = vunpack.c.h.b16 %v200
    %v1671 = vunpack.c.l.b16 %v201
    %v1672 = vunpack.c.h.b16 %v201
    %v1673 = vunpack.c.l.b16 %v202
    %v1674 = vunpack.c.h.b16 %v202
    %v1675 = vunpack.c.l.b16 %v203
    %v1676 = vunpack.c.h.b16 %v203
    %v1677 = vunpack.c.l.b16 %v204
    %v1678 = vunpack.c.h.b16 %v204
    %v1679 = vunpack.c.l.b16 %v205
    %v1680 = vunpack.c.h.b16 %v205
    %v1681 = vunpack.c.l.b16 %v206
    %v1682 = vunpack.c.h.b16 %v206
    %v1683 = vunpack.c.l.b16 %v207
    %v1684 = vunpack.c.h.b16 %v207
    %v1685 = vunpack.c.l.b16 %v208
    %v1686 = vunpack.c.h.b16 %v208
    %v1687 = vunpack.c.l.b16 %v209
    %v1688 = vunpack.c.h.b16 %v209
    %v1689 = vunpack.c.l.b16 %v210
    %v1690 = vunpack.c.h.b16 %v210
    %v1691 = vunpack.c.l.b16 %v211
    %v1692 = vunpack.c.h.b16 %v211
    %v1693 = vunpack.c.l.b16 %v212
    %v1694 = vunpack.c.h.b16 %v212
    %v1695 = vunpack.c.l.b16 %v213
    %v1696 = vunpack.c.h.b16 %v213
    %v1697 = vunpack.c.l.b16 %v214
    %v1698 = vunpack.c.h.b16 %v214
    %v1699 = vunpack.c.l.b16 %v215
    %v1700 = vunpack.c.h.b16 %v215
    %v1701 = vunpack.c.l.b16 %v216
    %v1702 = vunpack.c.h.b16 %v216
    %v1703 = vunpack.c.l.b16 %v217
    %v1704 = vunpack.c.h.b16 %v217
    %v1705 = vunpack.c.l.b16 %v218
    %v1706 = vunpack.c.h.b16 %v218
    %v1707 = vunpack.c.l.b16 %v219
    %v1708 = vunpack.c.h.b16 %v219
    %v1709 = vunpack.c.l.b16 %v220
    %v1710 = vunpack.c.h.b16 %v220
    %v1711 = vunpack.c.l.b16 %v221
    %v1712 = vunpack.c.h.b16 %v221
    %v1713 = vunpack.c.l.b16 %v222
    %v1714 = vunpack.c.h.b16 %v222
    %v1715 = vunpack.c.l.b16 %v223
    %v1716 = vunpack.c.h.b16 %v223
    %v1717 = vunpack.c.l.b16 %v224
    %v1718 = vunpack.c.h.b16 %v224
    %v1719 = vunpack.c.l.b16 %v225
    %v1720 = vunpack.c.h.b16 %v225
    %v1721 = vunpack.c.l.b16 %v226
    %v1722 = vunpack.c.h.b16 %v226
    %v1723 = vunpack.c.l.b16 %v227
    %v1724 = vunpack.c.h.b16 %v227
    %v1725 = vunpack.c.l.b16 %v228
    %v1726 = vunpack.c.h.b16 %v228
    %v1727 = vunpack.c.l.b16 %v229
    %v1728 = vunpack.c.h.b16 %v229
    %v1729 = vunpack.c.l.b16 %v230
    %v1730 = vunpack.c.h.b16 %v230
    %v1731 = vunpack.c.l.b16 %v231
    %v1732 = vunpack.c.h.b16 %v231
    %v1733 = vunpack.c.l.b16 %v232
    %v1734 = vunpack.c.h.b16 %v232
    %v1735 = vunpack.c.l.b16 %v233
    %v1736 = vunpack.c.h.b16 %v233
    %v1737 = vunpack.c.l.b16 %v234
    %v1738 = vunpack.c.h.b16 %v234
    %v1739 = vunpack.c.l.b16 %v235
    %v1740 = vunpack.c.h.b16 %v235
    %v1741 = vunpack.c.l.b16 %v236
    %v1742 = vunpack.c.h.b16 %v236
    %v1743 = vunpack.c.l.b16 %v237
    %v1744 = vunpack.c.h.b16 %v237
    %v1745 = vunpack.c.l.b16 %v238
    %v1746 = vunpack.c.h.b16 %v238
    %v1747 = vunpack.c.l.b16 %v239
    %v1748 = vunpack.c.h.b16 %v239
    %v1749 = vunpack.c.l.b16 %v240
    %v1750 = vunpack.c.h.b16 %v240
    %v1751 = vunpack.c.l.b16 %v241
    %v1752 = vunpack.c.h.b16 %v241
    %v1753 = vunpack.c.l.b16 %v242
    %v1754 = vunpack.c.h.b16 %v242
    %v1755 = vunpack.c.l.b16 %v243
    %v1756 = vunpack.c.h.b16 %v243
    %v1757 = vunpack.c.l.b16 %v244
    %v1758 = vunpack.c.h.b16 %v244
    %v1759 = vunpack.c.l.b16 %v245
    %v1760 = vunpack.c.h.b16 %v245
    %v1761 = vunpack.c.l.b16 %v246
    %v1762 = vunpack.c.h.b16 %v246
    %v1763 = vunpack.c.l.b16 %v247
    %v1764 = vunpack.c.h.b16 %v247
    %v1765 = vunpack.c.l.b16 %v248
    %v1766 = vunpack.c.h.b16 %v248
    %v1767 = vunpack.c.l.b16 %v249
    %v1768 = vunpack.c.h.b16 %v249
    %v1769 = vunpack.c.l.b16 %v250
    %v1770 = vunpack.c.h.b16 %v250
    %v1771 = vunpack.c.l.b16 %v251
    %v1772 = vunpack.c.h.b16 %v251
    %v1773 = vunpack.c.l.b16 %v252
    %v1774 = vunpack.c.h.b16 %v252
    %v1775 = vunpack.c.l.b16 %v253
    %v1776 = vunpack.c.h.b16 %v253
    %v1777 = vunpack.c.l.b16 %v254
    %v1778 = vunpack.c.h.b16 %v254
    %v1779 = vunpack.c.l.b16 %v255
    %v1780 = vunpack.c.h.b16 %v255
    %v1781 = vunpack.c.l.b16 %v256
    %v1782 = vunpack.c.h.b16 %v256
    %v1783 = vunpack.c.l.b16 %v257
    %v1784 = vunpack.c.h.b16 %v257
    %v1785 = vunpack.c.l.b16 %v258
    %v1786 = vunpack.c.h.b16 %v258
    %v1787 = vunpack.c.l.b16 %v259
    %v1788 = vunpack.c.h.b16 %v259
    %v1789 = vunpack.c.l.b16 %v260
    %v1790 = vunpack.c.h.b16 %v260
    %v1791 = vunpack.c.l.b16 %v261
    %v1792 = vunpack.c.h.b16 %v261
    %v1793 = vunpack.c.l.b16 %v262
    %v1794 = vunpack.c.h.b16 %v262
    %v1795 = vunpack.c.l.b16 %v263
    %v1796 = vunpack.c.h.b16 %v263
    %v1797 = vunpack.c.l.b16 %v264
    %v1798 = vunpack.c.h.b16 %v264
    %v1799 = vunpack.c.l.b16 %v265
    %v1800 = vunpack.c.h.b16 %v265
    %v1801 = vunpack.c.l.b16 %v266
    %v1802 = vunpack.c.h.b16 %v266
    %v1803 = vunpack.c.l.b16 %v267
    %v1804 = vunpack.c.h.b16 %v267
    %v1805 = vunpack.c.l.b16 %v268
    %v1806 = vunpack.c.h.b16 %v268
    %v1807 = vunpack.c.l.b16 %v269
    %v1808 = vunpack.c.h.b16 %v269
    %v1809 = vunpack.c.l.b16 %v270
    %v1810 = vunpack.c.h.b16 %v270
    %v1811 = vunpack.c.l.b16 %v271
    %v1812 = vunpack.c.h.b16 %v271
    %v1813 = vunpack.c.l.b16 %v272
    %v1814 = vunpack.c.h.b16 %v272
    %v1815 = vunpack.c.l.b16 %v273
    %v1816 = vunpack.c.h.b16 %v273
    %v1817 = vunpack.c.l.b16 %v274
    %v1818 = vunpack.c.h.b16 %v274
    %v1819 = vunpack.c.l.b16 %v275
    %v1820 = vunpack.c.h.b16 %v275
    %v1821 = vunpack.c.l.b16 %v276
    %v1822 = vunpack.c.h.b16 %v276
    %v1823 = vunpack.c.l.b16 %v277
    %v1824 = vunpack.c.h.b16 %v277
    %v1825 = vunpack.c.l.b16 %v278
    %v1826 = vunpack.c.h.b16 %v278
    %v1827 = vunpack.c.l.b16 %v279
    %v1828 = vunpack.c.h.b16 %v279
    %v1829 = vunpack.c.l.b16 %v280
    %v1830 = vunpack.c.h.b16 %v280
    %v1831 = vunpack.c.l.b16 %v281
    %v1832 = vunpack.c.h.b16 %v281
    %v1833 = vunpack.c.l.b16 %v282
    %v1834 = vunpack.c.h.b16 %v282
    %v1835 = vunpack.c.l.b16 %v283
    %v1836 = vunpack.c.h.b16 %v283
    %v1837 = vunpack.c.l.b16 %v284
    %v1838 = vunpack.c.h.b16 %v284
    %v1839 = vunpack.c.l.b16 %v285
    %v1840 = vunpack.c.h.b16 %v285
    %v1841 = vunpack.c.l.b16 %v286
    %v1842 = vunpack.c.h.b16 %v286
    %v1843 = vunpack.c.l.b16 %v287
    %v1844 = vunpack.c.h.b16 %v287
    %v1845 = vunpack.c.l.b16 %v288
    %v1846 = vunpack.c.h.b16 %v288
    %v1847 = vunpack.c.l.b16 %v289
    %v1848 = vunpack.c.h.b16 %v289
    %v1849 = vunpack.c.l.b16 %v290
    %v1850 = vunpack.c.h.b16 %v290
    %v1851 = vunpack.c.l.b16 %v291
    %v1852 = vunpack.c.h.b16 %v291
    %v1853 = vunpack.c.l.b16 %v292
    %v1854 = vunpack.c.h.b16 %v292
    %v1855 = vunpack.c.l.b16 %v293
    %v1856 = vunpack.c.h.b16 %v293
    %v1857 = vunpack.c.l.b16 %v294
    %v1858 = vunpack.c.h.b16 %v294
    %v1859 = vunpack.c.l.b16 %v295
    %v1860 = vunpack.c.h.b16 %v295
    %v1861 = vunpack.c.l.b16 %v296
    %v1862 = vunpack.c.h.b16 %v296
    %v1863 = vunpack.c.l.b16 %v297
    %v1864 = vunpack.c.h.b16 %v297
    %v1865 = vunpack.c.l.b16 %v298
    %v1866 = vunpack.c.h.b16 %v298
    %v1867 = vunpack.c.l.b16 %v299
    %v1868 = vunpack.c.h.b16 %v299
    %v1869 = vunpack.c.l.b16 %v300
    %v1870 = vunpack.c.h.b16 %v300
    %v1871 = vunpack.c.l.b16 %v301
    %v1872 = vunpack.c.h.b16 %v301
    %v1873 = vunpack.c.l.b16 %v302
    %v1874 = vunpack.c.h.b16 %v302
    %v1875 = vunpack.c.l.b16 %v303
    %v1876 = vunpack.c.h.b16 %v303
    %v1877 = vunpack.c.l.b16 %v304
    %v1878 = vunpack.c.h.b16 %v304
    %v1879 = vunpack.c.l.b16 %v305
    %v1880 = vunpack.c.h.b16 %v305
    %v1881 = vunpack.c.l.b16 %v306
    %v1882 = vunpack.c.h.b16 %v306
    %v1883 = vunpack.c.l.b16 %v307
    %v1884 = vunpack.c.h.b16 %v307
    %v1885 = vunpack.c.l.b16 %v308
    %v1886 = vunpack.c.h.b16 %v308
    %v1887 = vunpack.c.l.b16 %v309
    %v1888 = vunpack.c.h.b16 %v309
    %v1889 = vunpack.c.l.b16 %v310
    %v1890 = vunpack.c.h.b16 %v310
    %v1891 = vunpack.c.l.b16 %v311
    %v1892 = vunpack.c.h.b16 %v311
    %v1893 = vunpack.c.l.b16 %v312
    %v1894 = vunpack.c.h.b16 %v312
    %v1895 = vunpack.c.l.b16 %v313
    %v1896 = vunpack.c.h.b16 %v313
    %v1897 = vunpack.c.l.b16 %v314
    %v1898 = vunpack.c.h.b16 %v314
    %v1899 = vunpack.c.l.b16 %v315
    %v1900 = vunpack.c.h.b16 %v315
    %v1901 = vunpack.c.l.b16 %v316
    %v1902 = vunpack.c.h.b16 %v316
    %v1903 = vunpack.c.l.b16 %v317
    %v1904 = vunpack.c.h.b16 %v317
    %v1905 = vunpack.c.l.b16 %v318
    %v1906 = vunpack.c.h.b16 %v318
    %v1907 = vunpack.c.l.b16 %v319
    %v1908 = vunpack.c.h.b16 %v319
    %v1909 = vunpack.c.l.b16 %v320
    %v1910 = vunpack.c.h.b16 %v320
    %v1911 = vunpack.c.l.b16 %v321
    %v1912 = vunpack.c.h.b16 %v321
    %v1913 = vunpack.c.l.b16 %v322
    %v1914 = vunpack.c.h.b16 %v322
    %v1915 = vunpack.c.l.b16 %v323
    %v1916 = vunpack.c.h.b16 %v323
    %v1917 = vunpack.c.l.b16 %v324
    %v1918 = vunpack.c.h.b16 %v324
    %v1919 = vunpack.c.l.b16 %v325
    %v1920 = vunpack.c.h.b16 %v325
    %v1921 = vunpack.c.l.b16 %v326
    %v1922 = vunpack.c.h.b16 %v326
    %v1923 = vunpack.c.l.b16 %v327
    %v1924 = vunpack.c.h.b16 %v327
    %v1925 = vunpack.c.l.b16 %v328
    %v1926 = vunpack.c.h.b16 %v328
    %v1927 = vunpack.c.l.b16 %v329
    %v1928 = vunpack.c.h.b16 %v329
    %v1929 = vunpack.c.l.b16 %v330
    %v1930 = vunpack.c.h.b16 %v330
    %v1931 = vunpack.c.l.b16 %v331
    %v1932 = vunpack.c.h.b16 %v331
    %v1933 = vunpack.c.l.b16 %v332
    %v1934 = vunpack.c.h.b16 %v332
    %v1935 = vunpack.c.l.b16 %v333
    %v1936 = vunpack.c.h.b16 %v333
    %v1937 = vunpack.c.l.b16 %v334
    %v1938 = vunpack.c.h.b16 %v334
    %v1939 = vunpack.c.l.b16 %v335
    %v1940 = vunpack.c.h.b16 %v335
    %v1941 = vunpack.c.l.b16 %v336
    %v1942 = vunpack.c.h.b16 %v336
    %v1943 = vunpack.c.l.b16 %v337
    %v1944 = vunpack.c.h.b16 %v337
    %v1945 = vunpack.c.l.b16 %v338
    %v1946 = vunpack.c.h.b16 %v338
    %v1947 = vunpack.c.l.b16 %v339
    %v1948 = vunpack.c.h.b16 %v339
    %v1949 = vunpack.c.l.b16 %v340
    %v1950 = vunpack.c.h.b16 %v340
    %v1951 = vunpack.c.l.b16 %v341
    %v1952 = vunpack.c.h.b16 %v341
    %v1953 = vunpack.c.l.b16 %v342
    %v1954 = vunpack.c.h.b16 %v342
    %v1955 = vunpack.c.l.b16 %v343
    %v1956 = vunpack.c.h.b16 %v343
    %v1957 = vunpack.c.l.b16 %v344
    %v1958 = vunpack.c.h.b16 %v344
    %v1959 = vunpack.c.l.b16 %v345
    %v1960 = vunpack.c.h.b16 %v345
    %v1961 = vunpack.c.l.b16 %v346
    %v1962 = vunpack.c.h.b16 %v346
    %v1963 = vunpack.c.l.b16 %v347
    %v1964 = vunpack.c.h.b16 %v347
    %v1965 = vunpack.c.l.b16 %v348
    %v1966 = vunpack.c.h.b16 %v348
    %v1967 = vunpack.c.l.b16 %v349
    %v1968 = vunpack.c.h.b16 %v349
    %v1969 = vunpack.c.l.b16 %v350
    %v1970 = vunpack.c.h.b16 %v350
    %v1971 = vunpack.c.l.b16 %v351
    %v1972 = vunpack.c.h.b16 %v351
    %v1973 = vunpack.c.l.b16 %v352
    %v1974 = vunpack.c.h.b16 %v352
    %v1975 = vunpack.c.l.b16 %v353
    %v1976 = vunpack.c.h.b16 %v353
    %v1977 = vunpack.c.l.b16 %v354
    %v1978 = vunpack.c.h.b16 %v354
    %v1979 = vunpack.c.l.b16 %v355
    %v1980 = vunpack.c.h.b16 %v355
    %v1981 = vunpack.c.l.b16 %v356
    %v1982 = vunpack.c.h.b16 %v356
    %v1983 = vunpack.c.l.b16 %v357
    %v1984 = vunpack.c.h.b16 %v357
    %v1985 = vunpack.c.l.b16 %v358
    %v1986 = vunpack.c.h.b16 %v358
    %v1987 = vunpack.c.l.b16 %v359
    %v1988 = vunpack.c.h.b16 %v359
    %v1989 = vunpack.c.l.b16 %v360
    %v1990 = vunpack.c.h.b16 %v360
    %v1991 = vunpack.c.l.b16 %v361
    %v1992 = vunpack.c.h.b16 %v361
    %v1993 = vunpack.c.l.b16 %v362
    %v1994 = vunpack.c.h.b16 %v362
    %v1995 = vunpack.c.l.b16 %v363
    %v1996 = vunpack.c.h.b16 %v363
    %v1997 = vunpack.c.l.b16 %v364
    %v1998 = vunpack.c.h.b16 %v364
    %v1999 = vunpack.c.l.b16 %v365
    %v2000 = vunpack.c.h.b16 %v365
    %v2001 = vunpack.c.l.b16 %v366
    %v2002 = vunpack.c.h.b16 %v366
    %v2003 = vunpack.c.l.b16 %v367
    %v2004 = vunpack.c.h.b16 %v367
    %v2005 = vunpack.c.l.b16 %v368
    %v2006 = vunpack.c.h.b16 %v368
    %v2007 = vunpack.c.l.b16 %v369
    %v2008 = vunpack.c.h.b16 %v369
    %v2009 = vunpack.c.l.b16 %v370
    %v2010 = vunpack.c.h.b16 %v370
    %v2011 = vunpack.c.l.b16 %v371
    %v2012 = vunpack.c.h.b16 %v371
    %v2013 = vunpack.c.l.b16 %v372
    %v2014 = vunpack.c.h.b16 %v372
    %v2015 = vunpack.c.l.b16 %v373
    %v2016 = vunpack.c.h.b16 %v373
    %v2017 = vunpack.c.l.b16 %v374
    %v2018 = vunpack.c.h.b16 %v374
    %v2019 = vunpack.c.l.b16 %v375
    %v2020 = vunpack.c.h.b16 %v375
    %v2021 = vunpack.c.l.b16 %v376
    %v2022 = vunpack.c.h.b16 %v376
    %v2023 = vunpack.c.l.b16 %v377
    %v2024 = vunpack.c.h.b16 %v377
    %v2025 = vunpack.c.l.b16 %v378
    %v2026 = vunpack.c.h.b16 %v378
    %v2027 = vunpack.c.l.b16 %v379
    %v2028 = vunpack.c.h.b16 %v379
    %v2029 = vunpack.c.l.b16 %v380
    %v2030 = vunpack.c.h.b16 %v380
    %v2031 = vunpack.c.l.b16 %v381
    %v2032 = vunpack.c.h.b16 %v381
    %v2033 = vunpack.c.l.b16 %v382
    %v2034 = vunpack.c.h.b16 %v382
    %v2035 = vunpack.c.l.b16 %v383
    %v2036 = vunpack.c.h.b16 %v383
    %v2037 = vunpack.c.l.b16 %v384
    %v2038 = vunpack.c.h.b16 %v384
    %v2039 = vunpack.c.l.b16 %v385
    %v2040 = vunpack.c.h.b16 %v385
    %v2041 = vunpack.c.l.b16 %v386
    %v2042 = vunpack.c.h.b16 %v386
    %v2043 = vunpack.c.l.b16 %v387
    %v2044 = vunpack.c.h.b16 %v387
    %v2045 = vunpack.c.l.b16 %v388
    %v2046 = vunpack.c.h.b16 %v388
    %v2047 = vunpack.c.l.b16 %v389
    %v2048 = vunpack.c.h.b16 %v389
    %v2049 = vunpack.c.l.b16 %v390
    %v2050 = vunpack.c.h.b16 %v390
    %v2051 = vunpack.c.l.b16 %v391
    %v2052 = vunpack.c.h.b16 %v391
    %v2053 = vunpack.c.l.b16 %v392
    %v2054 = vunpack.c.h.b16 %v392
    %v2055 = vunpack.c.l.b16 %v393
    %v2056 = vunpack.c.h.b16 %v393
    %v2057 = vunpack.c.l.b16 %v394
    %v2058 = vunpack.c.h.b16 %v394
    %v2059 = vunpack.c.l.b16 %v395
    %v2060 = vunpack.c.h.b16 %v395
    %v2061 = vunpack.c.l.b16 %v396
    %v2062 = vunpack.c.h.b16 %v396
    %v2063 = vunpack.c.l.b16 %v397
    %v2064 = vunpack.c.h.b16 %v397
    %v2065 = vunpack.c.l.b16 %v398
    %v2066 = vunpack.c.h.b16 %v398
    %v2067 = vunpack.c.l.b16 %v399
    %v2068 = vunpack.c.h.b16 %v399
    %v2069 = vunpack.c.l.b16 %v400
    %v2070 = vunpack.c.h.b16 %v400
    %v2071 = vunpack.c.l.b16 %v401
    %v2072 = vunpack.c.h.b16 %v401
    %v2073 = vunpack.c.l.b16 %v402
    %v2074 = vunpack.c.h.b16 %v402
    %v2075 = vunpack.c.l.b16 %v403
    %v2076 = vunpack.c.h.b16 %v403
    %v2077 = vunpack.c.l.b16 %v404
    %v2078 = vunpack.c.h.b16 %v404
    %v2079 = vunpack.c.l.b16 %v405
    %v2080 = vunpack.c.h.b16 %v405
    %v2081 = vunpack.c.l.b16 %v406
    %v2082 = vunpack.c.h.b16 %v406
    %v2083 = vunpack.c.l.b16 %v407
    %v2084 = vunpack.c.h.b16 %v407
    %v2085 = vunpack.c.l.b16 %v408
    %v2086 = vunpack.c.h.b16 %v408
    %v2087 = vunpack.c.l.b16 %v409
    %v2088 = vunpack.c.h.b16 %v409
    %v2089 = vunpack.c.l.b16 %v410
    %v2090 = vunpack.c.h.b16 %v410
    %v2091 = vunpack.c.l.b16 %v411
    %v2092 = vunpack.c.h.b16 %v411
    %v2093 = vunpack.c.l.b16 %v412
    %v2094 = vunpack.c.h.b16 %v412
    %v2095 = vunpack.c.l.b16 %v413
    %v2096 = vunpack.c.h.b16 %v413
    %v2097 = vunpack.c.l.b16 %v414
    %v2098 = vunpack.c.h.b16 %v414
    %v2099 = vunpack.c.l.b16 %v415
    %v2100 = vunpack.c.h.b16 %v415
    %v2101 = vunpack.c.l.b16 %v416
    %v2102 = vunpack.c.h.b16 %v416
    %v2103 = vunpack.c.l.b16 %v417
    %v2104 = vunpack.c.h.b16 %v417
    %v2105 = vunpack.c.l.b16 %v418
    %v2106 = vunpack.c.h.b16 %v418
    %v2107 = vunpack.c.l.b16 %v419
    %v2108 = vunpack.c.h.b16 %v419
    %v2109 = vunpack.c.l.b16 %v420
    %v2110 = vunpack.c.h.b16 %v420
    %v2111 = vunpack.c.l.b16 %v421
    %v2112 = vunpack.c.h.b16 %v421
    %v2113 = vunpack.c.l.b16 %v422
    %v2114 = vunpack.c.h.b16 %v422
    %v2115 = vunpack.c.l.b16 %v423
    %v2116 = vunpack.c.h.b16 %v423
    %v2117 = vunpack.c.l.b16 %v424
    %v2118 = vunpack.c.h.b16 %v424
    %v2119 = vunpack.c.l.b16 %v425
    %v2120 = vunpack.c.h.b16 %v425
    %v2121 = vunpack.c.l.b16 %v426
    %v2122 = vunpack.c.h.b16 %v426
    %v2123 = vunpack.c.l.b16 %v427
    %v2124 = vunpack.c.h.b16 %v427
    %v2125 = vunpack.c.l.b16 %v428
    %v2126 = vunpack.c.h.b16 %v428
    %v2127 = vunpack.c.l.b16 %v429
    %v2128 = vunpack.c.h.b16 %v429
    %v2129 = vunpack.c.l.b16 %v430
    %v2130 = vunpack.c.h.b16 %v430
    %v2131 = vunpack.c.l.b16 %v431
    %v2132 = vunpack.c.h.b16 %v431
    %v2133 = vunpack.c.l.b16 %v432
    %v2134 = vunpack.c.h.b16 %v432
    %v2135 = vunpack.c.l.b16 %v433
    %v2136 = vunpack.c.h.b16 %v433
    %v2137 = vunpack.c.l.b16 %v434
    %v2138 = vunpack.c.h.b16 %v434
    %v2139 = vunpack.c.l.b16 %v435
    %v2140 = vunpack.c.h.b16 %v435
    %v2141 = vunpack.c.l.b16 %v436
    %v2142 = vunpack.c.h.b16 %v436
    %v2143 = vunpack.c.l.b16 %v437
    %v2144 = vunpack.c.h.b16 %v437
    %v2145 = vunpack.c.l.b16 %v438
    %v2146 = vunpack.c.h.b16 %v438
    %v2147 = vunpack.c.l.b16 %v439
    %v2148 = vunpack.c.h.b16 %v439
    %v2149 = vunpack.c.l.b16 %v440
    %v2150 = vunpack.c.h.b16 %v440
    %v2151 = vunpack.c.l.b16 %v441
    %v2152 = vunpack.c.h.b16 %v441
    %v2153 = vunpack.c.l.b16 %v442
    %v2154 = vunpack.c.h.b16 %v442
    %v2155 = vunpack.c.l.b16 %v443
    %v2156 = vunpack.c.h.b16 %v443
    %v2157 = vunpack.c.l.b16 %v444
    %v2158 = vunpack.c.h.b16 %v444
    %v2159 = vunpack.c.l.b16 %v445
    %v2160 = vunpack.c.h.b16 %v445
    %v2161 = vunpack.c.l.b16 %v446
    %v2162 = vunpack.c.h.b16 %v446
    %v2163 = vunpack.c.l.b16 %v447
    %v2164 = vunpack.c.h.b16 %v447
    %v2165 = vunpack.c.l.b16 %v448
    %v2166 = vunpack.c.h.b16 %v448
    %v2167 = vunpack.c.l.b16 %v449
    %v2168 = vunpack.c.h.b16 %v449
    %v2169 = vunpack.c.l.b16 %v450
    %v2170 = vunpack.c.h.b16 %v450
    %v2171 = vunpack.c.l.b16 %v451
    %v2172 = vunpack.c.h.b16 %v451
    %v2173 = vunpack.c.l.b16 %v452
    %v2174 = vunpack.c.h.b16 %v452
    %v2175 = vunpack.c.l.b16 %v453
    %v2176 = vunpack.c.h.b16 %v453
    %v2177 = vunpack.c.l.b16 %v454
    %v2178 = vunpack.c.h.b16 %v454
    %v2179 = vunpack.c.l.b16 %v455
    %v2180 = vunpack.c.h.b16 %v455
    %v2181 = vunpack.c.l.b16 %v456
    %v2182 = vunpack.c.h.b16 %v456
    %v2183 = vunpack.c.l.b16 %v457
    %v2184 = vunpack.c.h.b16 %v457
    %v2185 = vunpack.c.l.b16 %v458
    %v2186 = vunpack.c.h.b16 %v458
    %v2187 = vunpack.c.l.b16 %v459
    %v2188 = vunpack.c.h.b16 %v459
    %v2189 = vunpack.c.l.b16 %v460
    %v2190 = vunpack.c.h.b16 %v460
    %v2191 = vunpack.c.l.b16 %v461
    %v2192 = vunpack.c.h.b16 %v461
    %v2193 = vunpack.c.l.b16 %v462
    %v2194 = vunpack.c.h.b16 %v462
    %v2195 = vunpack.c.l.b16 %v463
    %v2196 = vunpack.c.h.b16 %v463
    %v2197 = vunpack.c.l.b16 %v464
    %v2198 = vunpack.c.h.b16 %v464
    %v2199 = vunpack.c.l.b16 %v465
    %v2200 = vunpack.c.h.b16 %v465
    %v2201 = vunpack.c.l.b16 %v466
    %v2202 = vunpack.c.h.b16 %v466
    %v2203 = vunpack.c.l.b16 %v467
    %v2204 = vunpack.c.h.b16 %v467
    %v2205 = vunpack.c.l.b16 %v468
    %v2206 = vunpack.c.h.b16 %v468
    %v2207 = vunpack.c.l.b16 %v469
    %v2208 = vunpack.c.h.b16 %v469
    %v2209 = vunpack.c.l.b16 %v470
    %v2210 = vunpack.c.h.b16 %v470
    %v2211 = vunpack.c.l.b16 %v471
    %v2212 = vunpack.c.h.b16 %v471
    %v2213 = vunpack.c.l.b16 %v472
    %v2214 = vunpack.c.h.b16 %v472
    %v2215 = vunpack.c.l.b16 %v473
    %v2216 = vunpack.c.h.b16 %v473
    %v2217 = vunpack.c.l.b16 %v474
    %v2218 = vunpack.c.h.b16 %v474
    %v2219 = vunpack.c.l.b16 %v475
    %v2220 = vunpack.c.h.b16 %v475
    %v2221 = vunpack.c.l.b16 %v476
    %v2222 = vunpack.c.h.b16 %v476
    %v2223 = vunpack.c.l.b16 %v477
    %v2224 = vunpack.c.h.b16 %v477
    %v2225 = vunpack.c.l.b16 %v478
    %v2226 = vunpack.c.h.b16 %v478
    %v2227 = vunpack.c.l.b16 %v479
    %v2228 = vunpack.c.h.b16 %v479
    %v2229 = vunpack.c.l.b16 %v480
    %v2230 = vunpack.c.h.b16 %v480
    %v2231 = vunpack.c.l.b16 %v481
    %v2232 = vunpack.c.h.b16 %v481
    %v2233 = vunpack.c.l.b16 %v482
    %v2234 = vunpack.c.h.b16 %v482
    %v2235 = vunpack.c.l.b16 %v483
    %v2236 = vunpack.c.h.b16 %v483
    %v2237 = vunpack.c.l.b16 %v484
    %v2238 = vunpack.c.h.b16 %v484
    %v2239 = vunpack.c.l.b16 %v485
    %v2240 = vunpack.c.h.b16 %v485
    %v2241 = vunpack.c.l.b16 %v486
    %v2242 = vunpack.c.h.b16 %v486
    %v2243 = vunpack.c.l.b16 %v487
    %v2244 = vunpack.c.h.b16 %v487
    %v2245 = vunpack.c.l.b16 %v488
    %v2246 = vunpack.c.h.b16 %v488
    %v2247 = vunpack.c.l.b16 %v489
    %v2248 = vunpack.c.h.b16 %v489
    %v2249 = vunpack.c.l.b16 %v490
    %v2250 = vunpack.c.h.b16 %v490
    %v2251 = vunpack.c.l.b16 %v491
    %v2252 = vunpack.c.h.b16 %v491
    %v2253 = vunpack.c.l.b16 %v492
    %v2254 = vunpack.c.h.b16 %v492
    %v2255 = vunpack.c.l.b16 %v493
    %v2256 = vunpack.c.h.b16 %v493
    %v2257 = vunpack.c.l.b16 %v494
    %v2258 = vunpack.c.h.b16 %v494
    %v2259 = vunpack.c.l.b16 %v495
    %v2260 = vunpack.c.h.b16 %v495
    %v2261 = vunpack.c.l.b16 %v496
    %v2262 = vunpack.c.h.b16 %v496
    %v2263 = vunpack.c.l.b16 %v497
    %v2264 = vunpack.c.h.b16 %v497
    %v2265 = vunpack.c.l.b16 %v498
    %v2266 = vunpack.c.h.b16 %v498
    %v2267 = vunpack.c.l.b16 %v499
    %v2268 = vunpack.c.h.b16 %v499
    %v2269 = vunpack.c.l.b16 %v500
    %v2270 = vunpack.c.h.b16 %v500
    %v2271 = vunpack.c.l.b16 %v501
    %v2272 = vunpack.c.h.b16 %v501
    %v2273 = vunpack.c.l.b16 %v502
    %v2274 = vunpack.c.h.b16 %v502
    %v2275 = vunpack.c.l.b16 %v503
    %v2276 = vunpack.c.h.b16 %v503
    %v2277 = vunpack.c.l.b16 %v504
    %v2278 = vunpack.c.h.b16 %v504
    %v2279 = vunpack.c.l.b16 %v505
    %v2280 = vunpack.c.h.b16 %v505
    %v2281 = vunpack.c.l.b16 %v506
    %v2282 = vunpack.c.h.b16 %v506
    %v2283 = vunpack.c.l.b16 %v507
    %v2284 = vunpack.c.h.b16 %v507
    %v2285 = vunpack.c.l.b16 %v508
    %v2286 = vunpack.c.h.b16 %v508
    %v2287 = vunpack.c.l.b16 %v509
    %v2288 = vunpack.c.h.b16 %v509
    %v2289 = vunpack.c.l.b16 %v510
    %v2290 = vunpack.c.h.b16 %v510
    %v2291 = vunpack.c.l.b16 %v511
    %v2292 = vunpack.c.h.b16 %v511
    %v2293 = vunpack.c.l.b16 %v512
    %v2294 = vunpack.c.h.b16 %v512
    %v2295 = vunpack.c.l.b16 %v513
    %v2296 = vunpack.c.h.b16 %v513
    %v2297 = vunpack.c.l.b16 %v514
    %v2298 = vunpack.c.h.b16 %v514
    %v2299 = vunpack.c.l.b16 %v515
    %v2300 = vunpack.c.h.b16 %v515
    %v2301 = vunpack.c.l.b16 %v516
    %v2302 = vunpack.c.h.b16 %v516
    %v2303 = vunpack.c.l.b16 %v517
    %v2304 = vunpack.c.h.b16 %v517
    %v2305 = vunpack.c.l.b16 %v518
    %v2306 = vunpack.c.h.b16 %v518
    %v2307 = vunpack.c.l.b16 %v519
    %v2308 = vunpack.c.h.b16 %v519
    %v2309 = vunpack.c.l.b16 %v520
    %v2310 = vunpack.c.h.b16 %v520
    %v2311 = vunpack.c.l.b16 %v521
    %v2312 = vunpack.c.h.b16 %v521
    %v2313 = vunpack.c.l.b16 %v522
    %v2314 = vunpack.c.h.b16 %v522
    %v2315 = vunpack.c.l.b16 %v523
    %v2316 = vunpack.c.h.b16 %v523
    %v2317 = vunpack.c.l.b16 %v524
    %v2318 = vunpack.c.h.b16 %v524
    %v2319 = vunpack.c.l.b16 %v525
    %v2320 = vunpack.c.h.b16 %v525
    %v2321 = vunpack.c.l.b16 %v526
    %v2322 = vunpack.c.h.b16 %v526
    %v2323 = vunpack.c.l.b16 %v527
    %v2324 = vunpack.c.h.b16 %v527
    %v2325 = vunpack.c.l.b16 %v528
    %v2326 = vunpack.c.h.b16 %v528
    %v2327 = vunpack.c.l.b16 %v529
    %v2328 = vunpack.c.h.b16 %v529
    %v2329 = vunpack.c.l.b16 %v530
    %v2330 = vunpack.c.h.b16 %v530
    %v2331 = vunpack.c.l.b16 %v531
    %v2332 = vunpack.c.h.b16 %v531
    %v2333 = vunpack.c.l.b16 %v532
    %v2334 = vunpack.c.h.b16 %v532
    %v2335 = vunpack.c.l.b16 %v533
    %v2336 = vunpack.c.h.b16 %v533
    %v2337 = vunpack.c.l.b16 %v534
    %v2338 = vunpack.c.h.b16 %v534
    %v2339 = vunpack.c.l.b16 %v535
    %v2340 = vunpack.c.h.b16 %v535
    %v2341 = vunpack.c.l.b16 %v536
    %v2342 = vunpack.c.h.b16 %v536
    %v2343 = vunpack.c.l.b16 %v537
    %v2344 = vunpack.c.h.b16 %v537
    %v2345 = vunpack.c.l.b16 %v538
    %v2346 = vunpack.c.h.b16 %v538
    %v2347 = vunpack.c.l.b16 %v539
    %v2348 = vunpack.c.h.b16 %v539
    %v2349 = vunpack.c.l.b16 %v540
    %v2350 = vunpack.c.h.b16 %v540
    %v2351 = vunpack.c.l.b16 %v541
    %v2352 = vunpack.c.h.b16 %v541
    %v2353 = vunpack.c.l.b16 %v542
    %v2354 = vunpack.c.h.b16 %v542
    %v2355 = vunpack.c.l.b16 %v543
    %v2356 = vunpack.c.h.b16 %v543
    %v2357 = vunpack.c.l.b16 %v544
    %v2358 = vunpack.c.h.b16 %v544
    %v2359 = vunpack.c.l.b16 %v545
    %v2360 = vunpack.c.h.b16 %v545
    %v2361 = vunpack.c.l.b16 %v546
    %v2362 = vunpack.c.h.b16 %v546
    %v2363 = vunpack.c.l.b16 %v547
    %v2364 = vunpack.c.h.b16 %v547
    %v2365 = vunpack.c.l.b16 %v548
    %v2366 = vunpack.c.h.b16 %v548
    %v2367 = vunpack.c.l.b16 %v549
    %v2368 = vunpack.c.h.b16 %v549
    %v2369 = vunpack.c.l.b16 %v550
    %v2370 = vunpack.c.h.b16 %v550
    %v2371 = vunpack.c.l.b16 %v551
    %v2372 = vunpack.c.h.b16 %v551
    %v2373 = vunpack.c.l.b16 %v552
    %v2374 = vunpack.c.h.b16 %v552
    %v2375 = vunpack.c.l.b16 %v553
    %v2376 = vunpack.c.h.b16 %v553
    %v2377 = vunpack.c.l.b16 %v554
    %v2378 = vunpack.c.h.b16 %v554
    %v2379 = vunpack.c.l.b16 %v555
    %v2380 = vunpack.c.h.b16 %v555
    %v2381 = vunpack.c.l.b16 %v556
    %v2382 = vunpack.c.h.b16 %v556
    %v2383 = vunpack.c.l.b16 %v557
    %v2384 = vunpack.c.h.b16 %v557
    %v2385 = vunpack.c.l.b16 %v558
    %v2386 = vunpack.c.h.b16 %v558
    %v2387 = vunpack.c.l.b16 %v559
    %v2388 = vunpack.c.h.b16 %v559
    %v2389 = vunpack.c.l.b16 %v560
    %v2390 = vunpack.c.h.b16 %v560
    %v2391 = vunpack.c.l.b16 %v561
    %v2392 = vunpack.c.h.b16 %v561
    %v2393 = vunpack.c.l.b16 %v562
    %v2394 = vunpack.c.h.b16 %v562
    %v2395 = vunpack.c.l.b16 %v563
    %v2396 = vunpack.c.h.b16 %v563
    %v2397 = vunpack.c.l.b16 %v564
    %v2398 = vunpack.c.h.b16 %v564
    %v2399 = vunpack.c.l.b16 %v565
    %v2400 = vunpack.c.h.b16 %v565
    %v2401 = vunpack.c.l.b16 %v566
    %v2402 = vunpack.c.h.b16 %v566
    %v2403 = vunpack.c.l.b16 %v567
    %v2404 = vunpack.c.h.b16 %v567
    %v2405 = vunpack.c.l.b16 %v568
    %v2406 = vunpack.c.h.b16 %v568
    %v2407 = vunpack.c.l.b16 %v569
    %v2408 = vunpack.c.h.b16 %v569
    %v2409 = vunpack.c.l.b16 %v570
    %v2410 = vunpack.c.h.b16 %v570
    %v2411 = vunpack.c.l.b16 %v571
    %v2412 = vunpack.c.h.b16 %v571
    %v2413 = vunpack.c.l.b16 %v572
    %v2414 = vunpack.c.h.b16 %v572
    %v2415 = vunpack.c.l.b16 %v573
    %v2416 = vunpack.c.h.b16 %v573
    %v2417 = vunpack.c.l.b16 %v574
    %v2418 = vunpack.c.h.b16 %v574
    %v2419 = vunpack.c.l.b16 %v575
    %v2420 = vunpack.c.h.b16 %v575
    %v2421 = vunpack.c.l.b16 %v576
    %v2422 = vunpack.c.h.b16 %v576
    %v2423 = vunpack.c.l.b16 %v577
    %v2424 = vunpack.c.h.b16 %v577
    %v2425 = vunpack.c.l.b16 %v578
    %v2426 = vunpack.c.h.b16 %v578
    %v2427 = vunpack.c.l.b16 %v579
    %v2428 = vunpack.c.h.b16 %v579
    %v2429 = vunpack.c.l.b16 %v580
    %v2430 = vunpack.c.h.b16 %v580
    %v2431 = vunpack.c.l.b16 %v581
    %v2432 = vunpack.c.h.b16 %v581
    %v2433 = vunpack.c.l.b16 %v582
    %v2434 = vunpack.c.h.b16 %v582
    %v2435 = vunpack.c.l.b16 %v583
    %v2436 = vunpack.c.h.b16 %v583
    %v2437 = vunpack.c.l.b16 %v584
    %v2438 = vunpack.c.h.b16 %v584
    %v2439 = vunpack.c.l.b16 %v585
    %v2440 = vunpack.c.h.b16 %v585
    %v2441 = vunpack.c.l.b16 %v586
    %v2442 = vunpack.c.h.b16 %v586
    %v2443 = vunpack.c.l.b16 %v587
    %v2444 = vunpack.c.h.b16 %v587
    %v2445 = vunpack.c.l.b16 %v588
    %v2446 = vunpack.c.h.b16 %v588
    %v2447 = vunpack.c.l.b16 %v589
    %v2448 = vunpack.c.h.b16 %v589
    %v2449 = vunpack.c.l.b16 %v590
    %v2450 = vunpack.c.h.b16 %v590
    %v2451 = vunpack.c.l.b16 %v591
    %v2452 = vunpack.c.h.b16 %v591
    %v2453 = vunpack.c.l.b16 %v592
    %v2454 = vunpack.c.h.b16 %v592
    %v2455 = vunpack.c.l.b16 %v593
    %v2456 = vunpack.c.h.b16 %v593
    %v2457 = vunpack.c.l.b16 %v594
    %v2458 = vunpack.c.h.b16 %v594
    %v2459 = vunpack.c.l.b16 %v595
    %v2460 = vunpack.c.h.b16 %v595
    %v2461 = vunpack.c.l.b16 %v596
    %v2462 = vunpack.c.h.b16 %v596
    %v2463 = vunpack.c.l.b16 %v597
    %v2464 = vunpack.c.h.b16 %v597
    %v2465 = vunpack.c.l.b16 %v598
    %v2466 = vunpack.c.h.b16 %v598
    %v2467 = vunpack.c.l.b16 %v599
    %v2468 = vunpack.c.h.b16 %v599
    %v2469 = vunpack.c.l.b16 %v600
    %v2470 = vunpack.c.h.b16 %v600
    %v2471 = vunpack.c.l.b16 %v601
    %v2472 = vunpack.c.h.b16 %v601
    %v2473 = vunpack.c.l.b16 %v602
    %v2474 = vunpack.c.h.b16 %v602
    %v2475 = vunpack.c.l.b16 %v603
    %v2476 = vunpack.c.h.b16 %v603
    %v2477 = vunpack.c.l.b16 %v604
    %v2478 = vunpack.c.h.b16 %v604
    %v2479 = vunpack.c.l.b16 %v605
    %v2480 = vunpack.c.h.b16 %v605
    %v2481 = vunpack.c.l.b16 %v606
    %v2482 = vunpack.c.h.b16 %v606
    %v2483 = vunpack.c.l.b16 %v607
    %v2484 = vunpack.c.h.b16 %v607
    %v2485 = vunpack.c.l.b16 %v608
    %v2486 = vunpack.c.h.b16 %v608
    %v2487 = vunpack.c.l.b16 %v609
    %v2488 = vunpack.c.h.b16 %v609
    %v2489 = vunpack.c.l.b16 %v610
    %v2490 = vunpack.c.h.b16 %v610
    %v2491 = vunpack.c.l.b16 %v611
    %v2492 = vunpack.c.h.b16 %v611
    %v2493 = vunpack.c.l.b16 %v612
    %v2494 = vunpack.c.h.b16 %v612
    %v2495 = vunpack.c.l.b16 %v613
    %v2496 = vunpack.c.h.b16 %v613
    %v2497 = vunpack.c.l.b16 %v614
    %v2498 = vunpack.c.h.b16 %v614
    %v2499 = vunpack.c.l.b16 %v615
    %v2500 = vunpack.c.h.b16 %v615
    %v2501 = vunpack.c.l.b16 %v616
    %v2502 = vunpack.c.h.b16 %v616
    %v2503 = vunpack.c.l.b16 %v617
    %v2504 = vunpack.c.h.b16 %v617
    %v2505 = vunpack.c.l.b16 %v618
    %v2506 = vunpack.c.h.b16 %v618
    %v2507 = vunpack.c.l.b16 %v619
    %v2508 = vunpack.c.h.b16 %v619
    %v2509 = vunpack.c.l.b16 %v620
    %v2510 = vunpack.c.h.b16 %v620
    %v2511 = vunpack.c.l.b16 %v621
    %v2512 = vunpack.c.h.b16 %v621
    %v2513 = vunpack.c.l.b16 %v622
    %v2514 = vunpack.c.h.b16 %v622
    %v2515 = vunpack.c.l.b16 %v623
    %v2516 = vunpack.c.h.b16 %v623
    %v2517 = vunpack.c.l.b16 %v624
    %v2518 = vunpack.c.h.b16 %v624
    %v2519 = vunpack.c.l.b16 %v625
    %v2520 = vunpack.c.h.b16 %v625
    %v2521 = vunpack.c.l.b16 %v626
    %v2522 = vunpack.c.h.b16 %v626
    %v2523 = vunpack.c.l.b16 %v627
    %v2524 = vunpack.c.h.b16 %v627
    %v2525 = vunpack.c.l.b16 %v628
    %v2526 = vunpack.c.h.b16 %v628
    %v2527 = vunpack.c.l.b16 %v629
    %v2528 = vunpack.c.h.b16 %v629
    %v2529 = vunpack.c.l.b16 %v630
    %v2530 = vunpack.c.h.b16 %v630
    %v2531 = vunpack.c.l.b16 %v631
    %v2532 = vunpack.c.h.b16 %v631
    %v2533 = vunpack.c.l.b16 %v632
    %v2534 = vunpack.c.h.b16 %v632
    %v2535 = vunpack.c.l.b16 %v633
    %v2536 = vunpack.c.h.b16 %v633
    %v2537 = vunpack.c.l.b16 %v634
    %v2538 = vunpack.c.h.b16 %v634
    %v2539 = vunpack.c.l.b16 %v635
    %v2540 = vunpack.c.h.b16 %v635
    %v2541 = vunpack.c.l.b16 %v636
    %v2542 = vunpack.c.h.b16 %v636
    %v2543 = vunpack.c.l.b16 %v637
    %v2544 = vunpack.c.h.b16 %v637
    %v2545 = vunpack.c.l.b16 %v638
    %v2546 = vunpack.c.h.b16 %v638
    %v2547 = vunpack.c.l.b16 %v639
    %v2548 = vunpack.c.h.b16 %v639
    %v2549 = vunpack.c.l.b16 %v640
    %v2550 = vunpack.c.h.b16 %v640
    %v2551 = vunpack.c.l.b16 %v641
    %v2552 = vunpack.c.h.b16 %v641
    %v2553 = vunpack.c.l.b16 %v642
    %v2554 = vunpack.c.h.b16 %v642
    %v2555 = vunpack.c.l.b16 %v643
    %v2556 = vunpack.c.h.b16 %v643
    %v2557 = vunpack.c.l.b16 %v644
    %v2558 = vunpack.c.h.b16 %v644
    %v2559 = vunpack.c.l.b16 %v645
    %v2560 = vunpack.c.h.b16 %v645
    %v2561 = vunpack.c.l.b16 %v646
    %v2562 = vunpack.c.h.b16 %v646
    %v2563 = vunpack.c.l.b16 %v647
    %v2564 = vunpack.c.h.b16 %v647
    %v2565 = vunpack.c.l.b16 %v648
    %v2566 = vunpack.c.h.b16 %v648
    %v2567 = vunpack.c.l.b16 %v649
    %v2568 = vunpack.c.h.b16 %v649
    %v2569 = vunpack.c.l.b16 %v650
    %v2570 = vunpack.c.h.b16 %v650
    %v2571 = vunpack.c.l.b16 %v651
    %v2572 = vunpack.c.h.b16 %v651
    %v2573 = vunpack.c.l.b16 %v652
    %v2574 = vunpack.c.h.b16 %v652
    %v2575 = vunpack.c.l.b16 %v653
    %v2576 = vunpack.c.h.b16 %v653
    %v2577 = vunpack.c.l.b16 %v654
    %v2578 = vunpack.c.h.b16 %v654
    %v2579 = vunpack.c.l.b16 %v655
    %v2580 = vunpack.c.h.b16 %v655
    %v2581 = vunpack.c.l.b16 %v656
    %v2582 = vunpack.c.h.b16 %v656
    %v2583 = vunpack.c.l.b16 %v657
    %v2584 = vunpack.c.h.b16 %v657
    %v2585 = vunpack.c.l.b16 %v658
    %v2586 = vunpack.c.h.b16 %v658
    %v2587 = vunpack.c.l.b16 %v659
    %v2588 = vunpack.c.h.b16 %v659
    %v2589 = vunpack.c.l.b16 %v660
    %v2590 = vunpack.c.h.b16 %v660
    %v2591 = vunpack.c.l.b16 %v661
    %v2592 = vunpack.c.h.b16 %v661
    %v2593 = vunpack.c.l.b16 %v662
    %v2594 = vunpack.c.h.b16 %v662
    %v2595 = vunpack.c.l.b16 %v663
    %v2596 = vunpack.c.h.b16 %v663
    %v2597 = vunpack.c.l.b16 %v664
    %v2598 = vunpack.c.h.b16 %v664
    %v2599 = vunpack.c.l.b16 %v665
    %v2600 = vunpack.c.h.b16 %v665
    %v2601 = vunpack.c.l.b16 %v666
    %v2602 = vunpack.c.h.b16 %v666
    %v2603 = vunpack.c.l.b16 %v667
    %v2604 = vunpack.c.h.b16 %v667
    %v2605 = vunpack.c.l.b16 %v668
    %v2606 = vunpack.c.h.b16 %v668
    %v2607 = vunpack.c.l.b16 %v669
    %v2608 = vunpack.c.h.b16 %v669
    %v2609 = vunpack.c.l.b16 %v670
    %v2610 = vunpack.c.h.b16 %v670
    %v2611 = vpack.c.b16 %v1351, %v1331
    %v2612 = vpack.c.b16 %v1352, %v1332
    %v2613 = vpack.c.b16 %v1353, %v1333
    %v2614 = vpack.c.b16 %v1354, %v1334
    %v2615 = vpack.c.b16 %v1355, %v1335
    %v2616 = vpack.c.b16 %v1356, %v1336
    %v2617 = vpack.c.b16 %v1357, %v1337
    %v2618 = vpack.c.b16 %v1358, %v1338
    %v2619 = vpack.c.b16 %v1359, %v1339
    %v2620 = vpack.c.b16 %v1360, %v1340
    %v2621 = vpack.c.b16 %v1361, %v1341
    %v2622 = vpack.c.b16 %v1362, %v1342
    %v2623 = vpack.c.b16 %v1363, %v1343
    %v2624 = vpack.c.b16 %v1364, %v1344
    %v2625 = vpack.c.b16 %v1365, %v1345
    %v2626 = vpack.c.b16 %v1366, %v1346
    %v2627 = vpack.c.b16 %v1367, %v1347
    %v2628 = vpack.c.b16 %v1368, %v1348
    %v2629 = vpack.c.b16 %v1369, %v1349
    %v2630 = vpack.c.b16 %v1370, %v1350
    %v2631 = vpack.c.b16 %v1391, %v1371
    %v2632 = vpack.c.b16 %v1392, %v1372
    %v2633 = vpack.c.b16 %v1393, %v1373
    %v2634 = vpack.c.b16 %v1394, %v1374
    %v2635 = vpack.c.b16 %v1395, %v1375
    %v2636 = vpack.c.b16 %v1396, %v1376
    %v2637 = vpack.c.b16 %v1397, %v1377
    %v2638 = vpack.c.b16 %v1398, %v1378
    %v2639 = vpack.c.b16 %v1399, %v1379
    %v2640 = vpack.c.b16 %v1400, %v1380
    %v2641 = vpack.c.b16 %v1401, %v1381
    %v2642 = vpack.c.b16 %v1402, %v1382
    %v2643 = vpack.c.b16 %v1403, %v1383
    %v2644 = vpack.c.b16 %v1404, %v1384
    %v2645 = vpack.c.b16 %v1405, %v1385
    %v2646 = vpack.c.b16 %v1406, %v1386
    %v2647 = vpack.c.b16 %v1407, %v1387
    %v2648 = vpack.c.b16 %v1408, %v1388
    %v2649 = vpack.c.b16 %v1409, %v1389
    %v2650 = vpack.c.b16 %v1410, %v1390
    %v2651 = vpack.c.b16 %v1431, %v1411
    %v2652 = vpack.c.b16 %v1432, %v1412
    %v2653 = vpack.c.b16 %v1433, %v1413
    %v2654 = vpack.c.b16 %v1434, %v1414
    %v2655 = vpack.c.b16 %v1435, %v1415
    %v2656 = vpack.c.b16 %v1436, %v1416
    %v2657 = vpack.c.b16 %v1437, %v1417
    %v2658 = vpack.c.b16 %v1438, %v1418
    %v2659 = vpack.c.b16 %v1439, %v1419
    %v2660 = vpack.c.b16 %v1440, %v1420
    %v2661 = vpack.c.b16 %v1441, %v1421
    %v2662 = vpack.c.b16 %v1442, %v1422
    %v2663 = vpack.c.b16 %v1443, %v1423
    %v2664 = vpack.c.b16 %v1444, %v1424
    %v2665 = vpack.c.b16 %v1445, %v1425
    %v2666 = vpack.c.b16 %v1446, %v1426
    %v2667 = vpack.c.b16 %v1447, %v1427
    %v2668 = vpack.c.b16 %v1448, %v1428
    %v2669 = vpack.c.b16 %v1449, %v1429
    %v2670 = vpack.c.b16 %v1450, %v1430
    %v2671 = vpack.c.b16 %v1471, %v1451
    %v2672 = vpack.c.b16 %v1472, %v1452
    %v2673 = vpack.c.b16 %v1473, %v1453
    %v2674 = vpack.c.b16 %v1474, %v1454
    %v2675 = vpack.c.b16 %v1475, %v1455
    %v2676 = vpack.c.b16 %v1476, %v1456
    %v2677 = vpack.c.b16 %v1477, %v1457
    %v2678 = vpack.c.b16 %v1478, %v1458
    %v2679 = vpack.c.b16 %v1479, %v1459
    %v2680 = vpack.c.b16 %v1480, %v1460
    %v2681 = vpack.c.b16 %v1481, %v1461
    %v2682 = vpack.c.b16 %v1482, %v1462
    %v2683 = vpack.c.b16 %v1483, %v1463
    %v2684 = vpack.c.b16 %v1484, %v1464
    %v2685 = vpack.c.b16 %v1485, %v1465
    %v2686 = vpack.c.b16 %v1486, %v1466
    %v2687 = vpack.c.b16 %v1487, %v1467
    %v2688 = vpack.c.b16 %v1488, %v1468
    %v2689 = vpack.c.b16 %v1489, %v1469
    %v2690 = vpack.c.b16 %v1490, %v1470
    %v2691 = vpack.c.b16 %v1511, %v1491
    %v2692 = vpack.c.b16 %v1512, %v1492
    %v2693 = vpack.c.b16 %v1513, %v1493
    %v2694 = vpack.c.b16 %v1514, %v1494
    %v2695 = vpack.c.b16 %v1515, %v1495
    %v2696 = vpack.c.b16 %v1516, %v1496
    %v2697 = vpack.c.b16 %v1517, %v1497
    %v2698 = vpack.c.b16 %v1518, %v1498
    %v2699 = vpack.c.b16 %v1519, %v1499
    %v2700 = vpack.c.b16 %v1520, %v1500
    %v2701 = vpack.c.b16 %v1521, %v1501
    %v2702 = vpack.c.b16 %v1522, %v1502
    %v2703 = vpack.c.b16 %v1523, %v1503
    %v2704 = vpack.c.b16 %v1524, %v1504
    %v2705 = vpack.c.b16 %v1525, %v1505
    %v2706 = vpack.c.b16 %v1526, %v1506
    %v2707 = vpack.c.b16 %v1527, %v1507
    %v2708 = vpack.c.b16 %v1528, %v1508
    %v2709 = vpack.c.b16 %v1529, %v1509
    %v2710 = vpack.c.b16 %v1530, %v1510
    %v2711 = vpack.c.b16 %v1551, %v1531
    %v2712 = vpack.c.b16 %v1552, %v1532
    %v2713 = vpack.c.b16 %v1553, %v1533
    %v2714 = vpack.c.b16 %v1554, %v1534
    %v2715 = vpack.c.b16 %v1555, %v1535
    %v2716 = vpack.c.b16 %v1556, %v1536
    %v2717 = vpack.c.b16 %v1557, %v1537
    %v2718 = vpack.c.b16 %v1558, %v1538
    %v2719 = vpack.c.b16 %v1559, %v1539
    %v2720 = vpack.c.b16 %v1560, %v1540
    %v2721 = vpack.c.b16 %v1561, %v1541
    %v2722 = vpack.c.b16 %v1562, %v1542
    %v2723 = vpack.c.b16 %v1563, %v1543
    %v2724 = vpack.c.b16 %v1564, %v1544
    %v2725 = vpack.c.b16 %v1565, %v1545
    %v2726 = vpack.c.b16 %v1566, %v1546
    %v2727 = vpack.c.b16 %v1567, %v1547
    %v2728 = vpack.c.b16 %v1568, %v1548
    %v2729 = vpack.c.b16 %v1569, %v1549
    %v2730 = vpack.c.b16 %v1570, %v1550
    %v2731 = vpack.c.b16 %v1591, %v1571
    %v2732 = vpack.c.b16 %v1592, %v1572
    %v2733 = vpack.c.b16 %v1593, %v1573
    %v2734 = vpack.c.b16 %v1594, %v1574
    %v2735 = vpack.c.b16 %v1595, %v1575
    %v2736 = vpack.c.b16 %v1596, %v1576
    %v2737 = vpack.c.b16 %v1597, %v1577
    %v2738 = vpack.c.b16 %v1598, %v1578
    %v2739 = vpack.c.b16 %v1599, %v1579
    %v2740 = vpack.c.b16 %v1600, %v1580
    %v2741 = vpack.c.b16 %v1601, %v1581
    %v2742 = vpack.c.b16 %v1602, %v1582
    %v2743 = vpack.c.b16 %v1603, %v1583
    %v2744 = vpack.c.b16 %v1604, %v1584
    %v2745 = vpack.c.b16 %v1605, %v1585
    %v2746 = vpack.c.b16 %v1606, %v1586
    %v2747 = vpack.c.b16 %v1607, %v1587
    %v2748 = vpack.c.b16 %v1608, %v1588
    %v2749 = vpack.c.b16 %v1609, %v1589
    %v2750 = vpack.c.b16 %v1610, %v1590
    %v2751 = vpack.c.b16 %v1631, %v1611
    %v2752 = vpack.c.b16 %v1632, %v1612
    %v2753 = vpack.c.b16 %v1633, %v1613
    %v2754 = vpack.c.b16 %v1634, %v1614
    %v2755 = vpack.c.b16 %v1635, %v1615
    %v2756 = vpack.c.b16 %v1636, %v1616
    %v2757 = vpack.c.b16 %v1637, %v1617
    %v2758 = vpack.c.b16 %v1638, %v1618
    %v2759 = vpack.c.b16 %v1639, %v1619
    %v2760 = vpack.c.b16 %v1640, %v1620
    %v2761 = vpack.c.b16 %v1641, %v1621
    %v2762 = vpack.c.b16 %v1642, %v1622
    %v2763 = vpack.c.b16 %v1643, %v1623
    %v2764 = vpack.c.b16 %v1644, %v1624
    %v2765 = vpack.c.b16 %v1645, %v1625
    %v2766 = vpack.c.b16 %v1646, %v1626
    %v2767 = vpack.c.b16 %v1647, %v1627
    %v2768 = vpack.c.b16 %v1648, %v1628
    %v2769 = vpack.c.b16 %v1649, %v1629
    %v2770 = vpack.c.b16 %v1650, %v1630
    %v2771 = vpack.c.b16 %v1671, %v1651
    %v2772 = vpack.c.b16 %v1672, %v1652
    %v2773 = vpack.c.b16 %v1673, %v1653
    %v2774 = vpack.c.b16 %v1674, %v1654
    %v2775 = vpack.c.b16 %v1675, %v1655
    %v2776 = vpack.c.b16 %v1676, %v1656
    %v2777 = vpack.c.b16 %v1677, %v1657
    %v2778 = vpack.c.b16 %v1678, %v1658
    %v2779 = vpack.c.b16 %v1679, %v1659
    %v2780 = vpack.c.b16 %v1680, %v1660
    %v2781 = vpack.c.b16 %v1681, %v1661
    %v2782 = vpack.c.b16 %v1682, %v1662
    %v2783 = vpack.c.b16 %v1683, %v1663
    %v2784 = vpack.c.b16 %v1684, %v1664
    %v2785 = vpack.c.b16 %v1685, %v1665
    %v2786 = vpack.c.b16 %v1686, %v1666
    %v2787 = vpack.c.b16 %v1687, %v1667
    %v2788 = vpack.c.b16 %v1688, %v1668
    %v2789 = vpack.c.b16 %v1689, %v1669
    %v2790 = vpack.c.b16 %v1690, %v1670
    %v2791 = vpack.c.b16 %v1711, %v1691
    %v2792 = vpack.c.b16 %v1712, %v1692
    %v2793 = vpack.c.b16 %v1713, %v1693
    %v2794 = vpack.c.b16 %v1714, %v1694
    %v2795 = vpack.c.b16 %v1715, %v1695
    %v2796 = vpack.c.b16 %v1716, %v1696
    %v2797 = vpack.c.b16 %v1717, %v1697
    %v2798 = vpack.c.b16 %v1718, %v1698
    %v2799 = vpack.c.b16 %v1719, %v1699
    %v2800 = vpack.c.b16 %v1720, %v1700
    %v2801 = vpack.c.b16 %v1721, %v1701
    %v2802 = vpack.c.b16 %v1722, %v1702
    %v2803 = vpack.c.b16 %v1723, %v1703
    %v2804 = vpack.c.b16 %v1724, %v1704
    %v2805 = vpack.c.b16 %v1725, %v1705
    %v2806 = vpack.c.b16 %v1726, %v1706
    %v2807 = vpack.c.b16 %v1727, %v1707
    %v2808 = vpack.c.b16 %v1728, %v1708
    %v2809 = vpack.c.b16 %v1729, %v1709
    %v2810 = vpack.c.b16 %v1730, %v1710
    %v2811 = vpack.c.b16 %v1751, %v1731
    %v2812 = vpack.c.b16 %v1752, %v1732
    %v2813 = vpack.c.b16 %v1753, %v1733
    %v2814 = vpack.c.b16 %v1754, %v1734
    %v2815 = vpack.c.b16 %v1755, %v1735
    %v2816 = vpack.c.b16 %v1756, %v1736
    %v2817 = vpack.c.b16 %v1757, %v1737
    %v2818 = vpack.c.b16 %v1758, %v1738
    %v2819 = vpack.c.b16 %v1759, %v1739
    %v2820 = vpack.c.b16 %v1760, %v1740
    %v2821 = vpack.c.b16 %v1761, %v1741
    %v2822 = vpack.c.b16 %v1762, %v1742
    %v2823 = vpack.c.b16 %v1763, %v1743
    %v2824 = vpack.c.b16 %v1764, %v1744
    %v2825 = vpack.c.b16 %v1765, %v1745
    %v2826 = vpack.c.b16 %v1766, %v1746
    %v2827 = vpack.c.b16 %v1767, %v1747
    %v2828 = vpack.c.b16 %v1768, %v1748
    %v2829 = vpack.c.b16 %v1769, %v1749
    %v2830 = vpack.c.b16 %v1770, %v1750
    %v2831 = vpack.c.b16 %v1791, %v1771
    %v2832 = vpack.c.b16 %v1792, %v1772
    %v2833 = vpack.c.b16 %v1793, %v1773
    %v2834 = vpack.c.b16 %v1794, %v1774
    %v2835 = vpack.c.b16 %v1795, %v1775
    %v2836 = vpack.c.b16 %v1796, %v1776
    %v2837 = vpack.c.b16 %v1797, %v1777
    %v2838 = vpack.c.b16 %v1798, %v1778
    %v2839 = vpack.c.b16 %v1799, %v1779
    %v2840 = vpack.c.b16 %v1800, %v1780
    %v2841 = vpack.c.b16 %v1801, %v1781
    %v2842 = vpack.c.b16 %v1802, %v1782
    %v2843 = vpack.c.b16 %v1803, %v1783
    %v2844 = vpack.c.b16 %v1804, %v1784
    %v2845 = vpack.c.b16 %v1805, %v1785
    %v2846 = vpack.c.b16 %v1806, %v1786
    %v2847 = vpack.c.b16 %v1807, %v1787
    %v2848 = vpack.c.b16 %v1808, %v1788
    %v2849 = vpack.c.b16 %v1809, %v1789
    %v2850 = vpack.c.b16 %v1810, %v1790
    %v2851 = vpack.c.b16 %v1831, %v1811
    %v2852 = vpack.c.b16 %v1832, %v1812
    %v2853 = vpack.c.b16 %v1833, %v1813
    %v2854 = vpack.c.b16 %v1834, %v1814
    %v2855 = vpack.c.b16 %v1835, %v1815
    %v2856 = vpack.c.b16 %v1836, %v1816
    %v2857 = vpack.c.b16 %v1837, %v1817
    %v2858 = vpack.c.b16 %v1838, %v1818
    %v2859 = vpack.c.b16 %v1839, %v1819
    %v2860 = vpack.c.b16 %v1840, %v1820
    %v2861 = vpack.c.b16 %v1841, %v1821
    %v2862 = vpack.c.b16 %v1842, %v1822
    %v2863 = vpack.c.b16 %v1843, %v1823
    %v2864 = vpack.c.b16 %v1844, %v1824
    %v2865 = vpack.c.b16 %v1845, %v1825
    %v2866 = vpack.c.b16 %v1846, %v1826
    %v2867 = vpack.c.b16 %v1847, %v1827
    %v2868 = vpack.c.b16 %v1848, %v1828
    %v2869 = vpack.c.b16 %v1849, %v1829
    %v2870 = vpack.c.b16 %v1850, %v1830
    %v2871 = vpack.c.b16 %v1871, %v1851
    %v2872 = vpack.c.b16 %v1872, %v1852
    %v2873 = vpack.c.b16 %v1873, %v1853
    %v2874 = vpack.c.b16 %v1874, %v1854
    %v2875 = vpack.c.b16 %v1875, %v1855
    %v2876 = vpack.c.b16 %v1876, %v1856
    %v2877 = vpack.c.b16 %v1877, %v1857
    %v2878 = vpack.c.b16 %v1878, %v1858
    %v2879 = vpack.c.b16 %v1879, %v1859
    %v2880 = vpack.c.b16 %v1880, %v1860
    %v2881 = vpack.c.b16 %v1881, %v1861
    %v2882 = vpack.c.b16 %v1882, %v1862
    %v2883 = vpack.c.b16 %v1883, %v1863
    %v2884 = vpack.c.b16 %v1884, %v1864
    %v2885 = vpack.c.b16 %v1885, %v1865
    %v2886 = vpack.c.b16 %v1886, %v1866
    %v2887 = vpack.c.b16 %v1887, %v1867
    %v2888 = vpack.c.b16 %v1888, %v1868
    %v2889 = vpack.c.b16 %v1889, %v1869
    %v2890 = vpack.c.b16 %v1890, %v1870
    %v2891 = vpack.c.b16 %v1911, %v1891
    %v2892 = vpack.c.b16 %v1912, %v1892
    %v2893 = vpack.c.b16 %v1913, %v1893
    %v2894 = vpack.c.b16 %v1914, %v1894
    %v2895 = vpack.c.b16 %v1915, %v1895
    %v2896 = vpack.c.b16 %v1916, %v1896
    %v2897 = vpack.c.b16 %v1917, %v1897
    %v2898 = vpack.c.b16 %v1918, %v1898
    %v2899 = vpack.c.b16 %v1919, %v1899
    %v2900 = vpack.c.b16 %v1920, %v1900
    %v2901 = vpack.c.b16 %v1921, %v1901
    %v2902 = vpack.c.b16 %v1922, %v1902
    %v2903 = vpack.c.b16 %v1923, %v1903
    %v2904 = vpack.c.b16 %v1924, %v1904
    %v2905 = vpack.c.b16 %v1925, %v1905
    %v2906 = vpack.c.b16 %v1926, %v1906
    %v2907 = vpack.c.b16 %v1927, %v1907
    %v2908 = vpack.c.b16 %v1928, %v1908
    %v2909 = vpack.c.b16 %v1929, %v1909
    %v2910 = vpack.c.b16 %v1930, %v1910
    %v2911 = vpack.c.b16 %v1951, %v1931
    %v2912 = vpack.c.b16 %v1952, %v1932
    %v2913 = vpack.c.b16 %v1953, %v1933
    %v2914 = vpack.c.b16 %v1954, %v1934
    %v2915 = vpack.c.b16 %v1955, %v1935
    %v2916 = vpack.c.b16 %v1956, %v1936
    %v2917 = vpack.c.b16 %v1957, %v1937
    %v2918 = vpack.c.b16 %v1958, %v1938
    %v2919 = vpack.c.b16 %v1959, %v1939
    %v2920 = vpack.c.b16 %v1960, %v1940
    %v2921 = vpack.c.b16 %v1961, %v1941
    %v2922 = vpack.c.b16 %v1962, %v1942
    %v2923 = vpack.c.b16 %v1963, %v1943
    %v2924 = vpack.c.b16 %v1964, %v1944
    %v2925 = vpack.c.b16 %v1965, %v1945
    %v2926 = vpack.c.b16 %v1966, %v1946
    %v2927 = vpack.c.b16 %v1967, %v1947
    %v2928 = vpack.c.b16 %v1968, %v1948
    %v2929 = vpack.c.b16 %v1969, %v1949
    %v2930 = vpack.c.b16 %v1970, %v1950
    %v2931 = vpack.c.b16 %v1991, %v1971
    %v2932 = vpack.c.b16 %v1992, %v1972
    %v2933 = vpack.c.b16 %v1993, %v1973
    %v2934 = vpack.c.b16 %v1994, %v1974
    %v2935 = vpack.c.b16 %v1995, %v1975
    %v2936 = vpack.c.b16 %v1996, %v1976
    %v2937 = vpack.c.b16 %v1997, %v1977
    %v2938 = vpack.c.b16 %v1998, %v1978
    %v2939 = vpack.c.b16 %v1999, %v1979
    %v2940 = vpack.c.b16 %v2000, %v1980
    %v2941 = vpack.c.b16 %v2001, %v1981
    %v2942 = vpack.c.b16 %v2002, %v1982
    %v2943 = vpack.c.b16 %v2003, %v1983
    %v2944 = vpack.c.b16 %v2004, %v1984
    %v2945 = vpack.c.b16 %v2005, %v1985
    %v2946 = vpack.c.b16 %v2006, %v1986
    %v2947 = vpack.c.b16 %v2007, %v1987
    %v2948 = vpack.c.b16 %v2008, %v1988
    %v2949 = vpack.c.b16 %v2009, %v1989
    %v2950 = vpack.c.b16 %v2010, %v1990
    %v2951 = vpack.c.b16 %v2031, %v2011
    %v2952 = vpack.c.b16 %v2032, %v2012
    %v2953 = vpack.c.b16 %v2033, %v2013
    %v2954 = vpack.c.b16 %v2034, %v2014
    %v2955 = vpack.c.b16 %v2035, %v2015
    %v2956 = vpack.c.b16 %v2036, %v2016
    %v2957 = vpack.c.b16 %v2037, %v2017
    %v2958 = vpack.c.b16 %v2038, %v2018
    %v2959 = vpack.c.b16 %v2039, %v2019
    %v2960 = vpack.c.b16 %v2040, %v2020
    %v2961 = vpack.c.b16 %v2041, %v2021
    %v2962 = vpack.c.b16 %v2042, %v2022
    %v2963 = vpack.c.b16 %v2043, %v2023
    %v2964 = vpack.c.b16 %v2044, %v2024
    %v2965 = vpack.c.b16 %v2045, %v2025
    %v2966 = vpack.c.b16 %v2046, %v2026
    %v2967 = vpack.c.b16 %v2047, %v2027
    %v2968 = vpack.c.b16 %v2048, %v2028
    %v2969 = vpack.c.b16 %v2049, %v2029
    %v2970 = vpack.c.b16 %v2050, %v2030
    %v2971 = vpack.c.b16 %v2071, %v2051
    %v2972 = vpack.c.b16 %v2072, %v2052
    %v2973 = vpack.c.b16 %v2073, %v2053
    %v2974 = vpack.c.b16 %v2074, %v2054
    %v2975 = vpack.c.b16 %v2075, %v2055
    %v2976 = vpack.c.b16 %v2076, %v2056
    %v2977 = vpack.c.b16 %v2077, %v2057
    %v2978 = vpack.c.b16 %v2078, %v2058
    %v2979 = vpack.c.b16 %v2079, %v2059
    %v2980 = vpack.c.b16 %v2080, %v2060
    %v2981 = vpack.c.b16 %v2081, %v2061
    %v2982 = vpack.c.b16 %v2082, %v2062
    %v2983 = vpack.c.b16 %v2083, %v2063
    %v2984 = vpack.c.b16 %v2084, %v2064
    %v2985 = vpack.c.b16 %v2085, %v2065
    %v2986 = vpack.c.b16 %v2086, %v2066
    %v2987 = vpack.c.b16 %v2087, %v2067
    %v2988 = vpack.c.b16 %v2088, %v2068
    %v2989 = vpack.c.b16 %v2089, %v2069
    %v2990 = vpack.c.b16 %v2090, %v2070
    %v2991 = vpack.c.b16 %v2111, %v2091
    %v2992 = vpack.c.b16 %v2112, %v2092
    %v2993 = vpack.c.b16 %v2113, %v2093
    %v2994 = vpack.c.b16 %v2114, %v2094
    %v2995 = vpack.c.b16 %v2115, %v2095
    %v2996 = vpack.c.b16 %v2116, %v2096
    %v2997 = vpack.c.b16 %v2117, %v2097
    %v2998 = vpack.c.b16 %v2118, %v2098
    %v2999 = vpack.c.b16 %v2119, %v2099
    %v3000 = vpack.c.b16 %v2120, %v2100
    %v3001 = vpack.c.b16 %v2121, %v2101
    %v3002 = vpack.c.b16 %v2122, %v2102
    %v3003 = vpack.c.b16 %v2123, %v2103
    %v3004 = vpack.c.b16 %v2124, %v2104
    %v3005 = vpack.c.b16 %v2125, %v2105
    %v3006 = vpack.c.b16 %v2126, %v2106
    %v3007 = vpack.c.b16 %v2127, %v2107
    %v3008 = vpack.c.b16 %v2128, %v2108
    %v3009 = vpack.c.b16 %v2129, %v2109
    %v3010 = vpack.c.b16 %v2130, %v2110
    %v3011 = vpack.c.b16 %v2151, %v2131
    %v3012 = vpack.c.b16 %v2152, %v2132
    %v3013 = vpack.c.b16 %v2153, %v2133
    %v3014 = vpack.c.b16 %v2154, %v2134
    %v3015 = vpack.c.b16 %v2155, %v2135
    %v3016 = vpack.c.b16 %v2156, %v2136
    %v3017 = vpack.c.b16 %v2157, %v2137
    %v3018 = vpack.c.b16 %v2158, %v2138
    %v3019 = vpack.c.b16 %v2159, %v2139
    %v3020 = vpack.c.b16 %v2160, %v2140
    %v3021 = vpack.c.b16 %v2161, %v2141
    %v3022 = vpack.c.b16 %v2162, %v2142
    %v3023 = vpack.c.b16 %v2163, %v2143
    %v3024 = vpack.c.b16 %v2164, %v2144
    %v3025 = vpack.c.b16 %v2165, %v2145
    %v3026 = vpack.c.b16 %v2166, %v2146
    %v3027 = vpack.c.b16 %v2167, %v2147
    %v3028 = vpack.c.b16 %v2168, %v2148
    %v3029 = vpack.c.b16 %v2169, %v2149
    %v3030 = vpack.c.b16 %v2170, %v2150
    %v3031 = vpack.c.b16 %v2191, %v2171
    %v3032 = vpack.c.b16 %v2192, %v2172
    %v3033 = vpack.c.b16 %v2193, %v2173
    %v3034 = vpack.c.b16 %v2194, %v2174
    %v3035 = vpack.c.b16 %v2195, %v2175
    %v3036 = vpack.c.b16 %v2196, %v2176
    %v3037 = vpack.c.b16 %v2197, %v2177
    %v3038 = vpack.c.b16 %v2198, %v2178
    %v3039 = vpack.c.b16 %v2199, %v2179
    %v3040 = vpack.c.b16 %v2200, %v2180
    %v3041 = vpack.c.b16 %v2201, %v2181
    %v3042 = vpack.c.b16 %v2202, %v2182
    %v3043 = vpack.c.b16 %v2203, %v2183
    %v3044 = vpack.c.b16 %v2204, %v2184
    %v3045 = vpack.c.b16 %v2205, %v2185
    %v3046 = vpack.c.b16 %v2206, %v2186
    %v3047 = vpack.c.b16 %v2207, %v2187
    %v3048 = vpack.c.b16 %v2208, %v2188
    %v3049 = vpack.c.b16 %v2209, %v2189
    %v3050 = vpack.c.b16 %v2210, %v2190
    %v3051 = vpack.c.b16 %v2231, %v2211
    %v3052 = vpack.c.b16 %v2232, %v2212
    %v3053 = vpack.c.b16 %v2233, %v2213
    %v3054 = vpack.c.b16 %v2234, %v2214
    %v3055 = vpack.c.b16 %v2235, %v2215
    %v3056 = vpack.c.b16 %v2236, %v2216
    %v3057 = vpack.c.b16 %v2237, %v2217
    %v3058 = vpack.c.b16 %v2238, %v2218
    %v3059 = vpack.c.b16 %v2239, %v2219
    %v3060 = vpack.c.b16 %v2240, %v2220
    %v3061 = vpack.c.b16 %v2241, %v2221
    %v3062 = vpack.c.b16 %v2242, %v2222
    %v3063 = vpack.c.b16 %v2243, %v2223
    %v3064 = vpack.c.b16 %v2244, %v2224
    %v3065 = vpack.c.b16 %v2245, %v2225
    %v3066 = vpack.c.b16 %v2246, %v2226
    %v3067 = vpack.c.b16 %v2247, %v2227
    %v3068 = vpack.c.b16 %v2248, %v2228
    %v3069 = vpack.c.b16 %v2249, %v2229
    %v3070 = vpack.c.b16 %v2250, %v2230
    %v3071 = vpack.c.b16 %v2271, %v2251
    %v3072 = vpack.c.b16 %v2272, %v2252
    %v3073 = vpack.c.b16 %v2273, %v2253
    %v3074 = vpack.c.b16 %v2274, %v2254
    %v3075 = vpack.c.b16 %v2275, %v2255
    %v3076 = vpack.c.b16 %v2276, %v2256
    %v3077 = vpack.c.b16 %v2277, %v2257
    %v3078 = vpack.c.b16 %v2278, %v2258
    %v3079 = vpack.c.b16 %v2279, %v2259
    %v3080 = vpack.c.b16 %v2280, %v2260
    %v3081 = vpack.c.b16 %v2281, %v2261
    %v3082 = vpack.c.b16 %v2282, %v2262
    %v3083 = vpack.c.b16 %v2283, %v2263
    %v3084 = vpack.c.b16 %v2284, %v2264
    %v3085 = vpack.c.b16 %v2285, %v2265
    %v3086 = vpack.c.b16 %v2286, %v2266
    %v3087 = vpack.c.b16 %v2287, %v2267
    %v3088 = vpack.c.b16 %v2288, %v2268
    %v3089 = vpack.c.b16 %v2289, %v2269
    %v3090 = vpack.c.b16 %v2290, %v2270
    %v3091 = vpack.c.b16 %v2311, %v2291
    %v3092 = vpack.c.b16 %v2312, %v2292
    %v3093 = vpack.c.b16 %v2313, %v2293
    %v3094 = vpack.c.b16 %v2314, %v2294
    %v3095 = vpack.c.b16 %v2315, %v2295
    %v3096 = vpack.c.b16 %v2316, %v2296
    %v3097 = vpack.c.b16 %v2317, %v2297
    %v3098 = vpack.c.b16 %v2318, %v2298
    %v3099 = vpack.c.b16 %v2319, %v2299
    %v3100 = vpack.c.b16 %v2320, %v2300
    %v3101 = vpack.c.b16 %v2321, %v2301
    %v3102 = vpack.c.b16 %v2322, %v2302
    %v3103 = vpack.c.b16 %v2323, %v2303
    %v3104 = vpack.c.b16 %v2324, %v2304
    %v3105 = vpack.c.b16 %v2325, %v2305
    %v3106 = vpack.c.b16 %v2326, %v2306
    %v3107 = vpack.c.b16 %v2327, %v2307
    %v3108 = vpack.c.b16 %v2328, %v2308
    %v3109 = vpack.c.b16 %v2329, %v2309
    %v3110 = vpack.c.b16 %v2330, %v2310
    %v3111 = vpack.c.b16 %v2351, %v2331
    %v3112 = vpack.c.b16 %v2352, %v2332
    %v3113 = vpack.c.b16 %v2353, %v2333
    %v3114 = vpack.c.b16 %v2354, %v2334
    %v3115 = vpack.c.b16 %v2355, %v2335
    %v3116 = vpack.c.b16 %v2356, %v2336
    %v3117 = vpack.c.b16 %v2357, %v2337
    %v3118 = vpack.c.b16 %v2358, %v2338
    %v3119 = vpack.c.b16 %v2359, %v2339
    %v3120 = vpack.c.b16 %v2360, %v2340
    %v3121 = vpack.c.b16 %v2361, %v2341
    %v3122 = vpack.c.b16 %v2362, %v2342
    %v3123 = vpack.c.b16 %v2363, %v2343
    %v3124 = vpack.c.b16 %v2364, %v2344
    %v3125 = vpack.c.b16 %v2365, %v2345
    %v3126 = vpack.c.b16 %v2366, %v2346
    %v3127 = vpack.c.b16 %v2367, %v2347
    %v3128 = vpack.c.b16 %v2368, %v2348
    %v3129 = vpack.c.b16 %v2369, %v2349
    %v3130 = vpack.c.b16 %v2370, %v2350
    %v3131 = vpack.c.b16 %v2391, %v2371
    %v3132 = vpack.c.b16 %v2392, %v2372
    %v3133 = vpack.c.b16 %v2393, %v2373
    %v3134 = vpack.c.b16 %v2394, %v2374
    %v3135 = vpack.c.b16 %v2395, %v2375
    %v3136 = vpack.c.b16 %v2396, %v2376
    %v3137 = vpack.c.b16 %v2397, %v2377
    %v3138 = vpack.c.b16 %v2398, %v2378
    %v3139 = vpack.c.b16 %v2399, %v2379
    %v3140 = vpack.c.b16 %v2400, %v2380
    %v3141 = vpack.c.b16 %v2401, %v2381
    %v3142 = vpack.c.b16 %v2402, %v2382
    %v3143 = vpack.c.b16 %v2403, %v2383
    %v3144 = vpack.c.b16 %v2404, %v2384
    %v3145 = vpack.c.b16 %v2405, %v2385
    %v3146 = vpack.c.b16 %v2406, %v2386
    %v3147 = vpack.c.b16 %v2407, %v2387
    %v3148 = vpack.c.b16 %v2408, %v2388
    %v3149 = vpack.c.b16 %v2409, %v2389
    %v3150 = vpack.c.b16 %v2410, %v2390
    %v3151 = vpack.c.b16 %v2431, %v2411
    %v3152 = vpack.c.b16 %v2432, %v2412
    %v3153 = vpack.c.b16 %v2433, %v2413
    %v3154 = vpack.c.b16 %v2434, %v2414
    %v3155 = vpack.c.b16 %v2435, %v2415
    %v3156 = vpack.c.b16 %v2436, %v2416
    %v3157 = vpack.c.b16 %v2437, %v2417
    %v3158 = vpack.c.b16 %v2438, %v2418
    %v3159 = vpack.c.b16 %v2439, %v2419
    %v3160 = vpack.c.b16 %v2440, %v2420
    %v3161 = vpack.c.b16 %v2441, %v2421
    %v3162 = vpack.c.b16 %v2442, %v2422
    %v3163 = vpack.c.b16 %v2443, %v2423
    %v3164 = vpack.c.b16 %v2444, %v2424
    %v3165 = vpack.c.b16 %v2445, %v2425
    %v3166 = vpack.c.b16 %v2446, %v2426
    %v3167 = vpack.c.b16 %v2447, %v2427
    %v3168 = vpack.c.b16 %v2448, %v2428
    %v3169 = vpack.c.b16 %v2449, %v2429
    %v3170 = vpack.c.b16 %v2450, %v2430
    %v3171 = vpack.c.b16 %v2471, %v2451
    %v3172 = vpack.c.b16 %v2472, %v2452
    %v3173 = vpack.c.b16 %v2473, %v2453
    %v3174 = vpack.c.b16 %v2474, %v2454
    %v3175 = vpack.c.b16 %v2475, %v2455
    %v3176 = vpack.c.b16 %v2476, %v2456
    %v3177 = vpack.c.b16 %v2477, %v2457
    %v3178 = vpack.c.b16 %v2478, %v2458
    %v3179 = vpack.c.b16 %v2479, %v2459
    %v3180 = vpack.c.b16 %v2480, %v2460
    %v3181 = vpack.c.b16 %v2481, %v2461
    %v3182 = vpack.c.b16 %v2482, %v2462
    %v3183 = vpack.c.b16 %v2483, %v2463
    %v3184 = vpack.c.b16 %v2484, %v2464
    %v3185 = vpack.c.b16 %v2485, %v2465
    %v3186 = vpack.c.b16 %v2486, %v2466
    %v3187 = vpack.c.b16 %v2487, %v2467
    %v3188 = vpack.c.b16 %v2488, %v2468
    %v3189 = vpack.c.b16 %v2489, %v2469
    %v3190 = vpack.c.b16 %v2490, %v2470
    %v3191 = vpack.c.b16 %v2511, %v2491
    %v3192 = vpack.c.b16 %v2512, %v2492
    %v3193 = vpack.c.b16 %v2513, %v2493
    %v3194 = vpack.c.b16 %v2514, %v2494
    %v3195 = vpack.c.b16 %v2515, %v2495
    %v3196 = vpack.c.b16 %v2516, %v2496
    %v3197 = vpack.c.b16 %v2517, %v2497
    %v3198 = vpack.c.b16 %v2518, %v2498
    %v3199 = vpack.c.b16 %v2519, %v2499
    %v3200 = vpack.c.b16 %v2520, %v2500
    %v3201 = vpack.c.b16 %v2521, %v2501
    %v3202 = vpack.c.b16 %v2522, %v2502
    %v3203 = vpack.c.b16 %v2523, %v2503
    %v3204 = vpack.c.b16 %v2524, %v2504
    %v3205 = vpack.c.b16 %v2525, %v2505
    %v3206 = vpack.c.b16 %v2526, %v2506
    %v3207 = vpack.c.b16 %v2527, %v2507
    %v3208 = vpack.c.b16 %v2528, %v2508
    %v3209 = vpack.c.b16 %v2529, %v2509
    %v3210 = vpack.c.b16 %v2530, %v2510
    %v3211 = vpack.c.b16 %v2551, %v2531
    %v3212 = vpack.c.b16 %v2552, %v2532
    %v3213 = vpack.c.b16 %v2553, %v2533
    %v3214 = vpack.c.b16 %v2554, %v2534
    %v3215 = vpack.c.b16 %v2555, %v2535
    %v3216 = vpack.c.b16 %v2556, %v2536
    %v3217 = vpack.c.b16 %v2557, %v2537
    %v3218 = vpack.c.b16 %v2558, %v2538
    %v3219 = vpack.c.b16 %v2559, %v2539
    %v3220 = vpack.c.b16 %v2560, %v2540
    %v3221 = vpack.c.b16 %v2561, %v2541
    %v3222 = vpack.c.b16 %v2562, %v2542
    %v3223 = vpack.c.b16 %v2563, %v2543
    %v3224 = vpack.c.b16 %v2564, %v2544
    %v3225 = vpack.c.b16 %v2565, %v2545
    %v3226 = vpack.c.b16 %v2566, %v2546
    %v3227 = vpack.c.b16 %v2567, %v2547
    %v3228 = vpack.c.b16 %v2568, %v2548
    %v3229 = vpack.c.b16 %v2569, %v2549
    %v3230 = vpack.c.b16 %v2570, %v2550
    %v3231 = vpack.c.b16 %v2591, %v2571
    %v3232 = vpack.c.b16 %v2592, %v2572
    %v3233 = vpack.c.b16 %v2593, %v2573
    %v3234 = vpack.c.b16 %v2594, %v2574
    %v3235 = vpack.c.b16 %v2595, %v2575
    %v3236 = vpack.c.b16 %v2596, %v2576
    %v3237 = vpack.c.b16 %v2597, %v2577
    %v3238 = vpack.c.b16 %v2598, %v2578
    %v3239 = vpack.c.b16 %v2599, %v2579
    %v3240 = vpack.c.b16 %v2600, %v2580
    %v3241 = vpack.c.b16 %v2601, %v2581
    %v3242 = vpack.c.b16 %v2602, %v2582
    %v3243 = vpack.c.b16 %v2603, %v2583
    %v3244 = vpack.c.b16 %v2604, %v2584
    %v3245 = vpack.c.b16 %v2605, %v2585
    %v3246 = vpack.c.b16 %v2606, %v2586
    %v3247 = vpack.c.b16 %v2607, %v2587
    %v3248 = vpack.c.b16 %v2608, %v2588
    %v3249 = vpack.c.b16 %v2609, %v2589
    %v3250 = vpack.c.b16 %v2610, %v2590
    %3891 = vmatprep.subr.bf16.mxu0 %v2612
    %3892 = vmatpush1.bf16.msra.mxu0 %v2611
    %3893 = vmatprep.subr.bf16.mxu0 %v2632
    %3894 = vmatpush1.bf16.msra.mxu0 %v2631
    %3895 = vmatprep.subr.bf16.mxu0 %v2652
    %3896 = vmatpush1.bf16.msra.mxu0 %v2651
    %3897 = vmatprep.subr.bf16.mxu0 %v2672
    %3898 = vmatpush1.bf16.msra.mxu0 %v2671
    %3899 = vmatprep.subr.bf16.mxu0 %v2692
    %3900 = vmatpush1.bf16.msra.mxu0 %v2691
    %3901 = vmatprep.subr.bf16.mxu0 %v2712
    %3902 = vmatpush1.bf16.msra.mxu0 %v2711
    %3903 = vmatprep.subr.bf16.mxu0 %v2732
    %3904 = vmatpush1.bf16.msra.mxu0 %v2731
    %3905 = vmatprep.subr.bf16.mxu0 %v2752
    %3906 = vmatpush1.bf16.msra.mxu0 %v2751
    %3907 = vmatprep.subr.bf16.mxu0 %v2772
    %3908 = vmatpush1.bf16.msra.mxu0 %v2771
    %3909 = vmatprep.subr.bf16.mxu0 %v2792
    %3910 = vmatpush1.bf16.msra.mxu0 %v2791
    %3911 = vmatprep.subr.bf16.mxu0 %v2812
    %3912 = vmatpush1.bf16.msra.mxu0 %v2811
    %3913 = vmatprep.subr.bf16.mxu0 %v2832
    %3914 = vmatpush1.bf16.msra.mxu0 %v2831
    %3915 = vmatprep.subr.bf16.mxu0 %v2852
    %3916 = vmatpush1.bf16.msra.mxu0 %v2851
    %3917 = vmatprep.subr.bf16.mxu0 %v2872
    %3918 = vmatpush1.bf16.msra.mxu0 %v2871
    %3919 = vmatprep.subr.bf16.mxu0 %v2892
    %3920 = vmatpush1.bf16.msra.mxu0 %v2891
    %3921 = vmatprep.subr.bf16.mxu0 %v2912
    %3922 = vmatpush1.bf16.msra.mxu0 %v2911
    %3923 = vmatprep.mubr.bf16.mxu0 %v684
    %3924 = vmatmul.mubr.bf16.gmra.mrb[0].mxu0 %v683
    %v3925 = vpop.f32.mrb[0].mxu0
    %v3926 = vadd.f32 0.0, %v3925
    %v3927 = vpop.f32.mrb[0].mxu0
    %v3928 = vadd.f32 0.0, %v3927
    %v3929 = vpop.f32.mrb[0].mxu0
    %v3930 = vadd.f32 0.0, %v3929
    %v3931 = vpop.f32.mrb[0].mxu0
    %v3932 = vadd.f32 0.0, %v3931
    %3933 = vdwg.mxu0
    %3934 = vmatprep.subr.bf16.mxu0 %v2932
    %3935 = vmatpush1.bf16.msra.mxu0 %v2931
    %3936 = vmatprep.subr.bf16.mxu0 %v2952
    %3937 = vmatpush1.bf16.msra.mxu0 %v2951
    %3938 = vmatprep.subr.bf16.mxu0 %v2972
    %3939 = vmatpush1.bf16.msra.mxu0 %v2971
    %3940 = vmatprep.subr.bf16.mxu0 %v2992
    %3941 = vmatpush1.bf16.msra.mxu0 %v2991
    %3942 = vmatprep.subr.bf16.mxu0 %v3012
    %3943 = vmatpush1.bf16.msra.mxu0 %v3011
    %3944 = vmatprep.subr.bf16.mxu0 %v3032
    %3945 = vmatpush1.bf16.msra.mxu0 %v3031
    %3946 = vmatprep.subr.bf16.mxu0 %v3052
    %3947 = vmatpush1.bf16.msra.mxu0 %v3051
    %3948 = vmatprep.subr.bf16.mxu0 %v3072
    %3949 = vmatpush1.bf16.msra.mxu0 %v3071
    %3950 = vmatprep.subr.bf16.mxu0 %v3092
    %3951 = vmatpush1.bf16.msra.mxu0 %v3091
    %3952 = vmatprep.subr.bf16.mxu0 %v3112
    %3953 = vmatpush1.bf16.msra.mxu0 %v3111
    %3954 = vmatprep.subr.bf16.mxu0 %v3132
    %3955 = vmatpush1.bf16.msra.mxu0 %v3131
    %3956 = vmatprep.subr.bf16.mxu0 %v3152
    %3957 = vmatpush1.bf16.msra.mxu0 %v3151
    %3958 = vmatprep.subr.bf16.mxu0 %v3172
    %3959 = vmatpush1.bf16.msra.mxu0 %v3171
    %3960 = vmatprep.subr.bf16.mxu0 %v3192
    %3961 = vmatpush1.bf16.msra.mxu0 %v3191
    %3962 = vmatprep.subr.bf16.mxu0 %v3212
    %3963 = vmatpush1.bf16.msra.mxu0 %v3211
    %3964 = vmatprep.subr.bf16.mxu0 %v3232
    %3965 = vmatpush1.bf16.msra.mxu0 %v3231
    %3966 = vmatprep.mubr.bf16.mxu0 %v686
    %3967 = vmatmul.mubr.bf16.gmra.mrb[0].mxu0 %v685
    %v3968 = vpop.f32.mrb[0].mxu0
    %v3969 = vadd.f32 %v3926, %v3968
    %v3970 = vpop.f32.mrb[0].mxu0
    %v3971 = vadd.f32 %v3928, %v3970
    %v3972 = vpop.f32.mrb[0].mxu0
    %v3973 = vadd.f32 %v3930, %v3972
    %v3974 = vpop.f32.mrb[0].mxu0
    %v3975 = vadd.f32 %v3932, %v3974
    %3976 = vdwg.mxu0
    %3977 = vmatprep.subr.bf16.mxu0 %v2614
    %3978 = vmatpush1.bf16.msra.mxu0 %v2613
    %3979 = vmatprep.subr.bf16.mxu0 %v2634
    %3980 = vmatpush1.bf16.msra.mxu0 %v2633
    %3981 = vmatprep.subr.bf16.mxu0 %v2654
    %3982 = vmatpush1.bf16.msra.mxu0 %v2653
    %3983 = vmatprep.subr.bf16.mxu0 %v2674
    %3984 = vmatpush1.bf16.msra.mxu0 %v2673
    %3985 = vmatprep.subr.bf16.mxu0 %v2694
    %3986 = vmatpush1.bf16.msra.mxu0 %v2693
    %3987 = vmatprep.subr.bf16.mxu0 %v2714
    %3988 = vmatpush1.bf16.msra.mxu0 %v2713
    %3989 = vmatprep.subr.bf16.mxu0 %v2734
    %3990 = vmatpush1.bf16.msra.mxu0 %v2733
    %3991 = vmatprep.subr.bf16.mxu0 %v2754
    %3992 = vmatpush1.bf16.msra.mxu0 %v2753
    %3993 = vmatprep.subr.bf16.mxu0 %v2774
    %3994 = vmatpush1.bf16.msra.mxu0 %v2773
    %3995 = vmatprep.subr.bf16.mxu0 %v2794
    %3996 = vmatpush1.bf16.msra.mxu0 %v2793
    %3997 = vmatprep.subr.bf16.mxu0 %v2814
    %3998 = vmatpush1.bf16.msra.mxu0 %v2813
    %3999 = vmatprep.subr.bf16.mxu0 %v2834
    %4000 = vmatpush1.bf16.msra.mxu0 %v2833
    %4001 = vmatprep.subr.bf16.mxu0 %v2854
    %4002 = vmatpush1.bf16.msra.mxu0 %v2853
    %4003 = vmatprep.subr.bf16.mxu0 %v2874
    %4004 = vmatpush1.bf16.msra.mxu0 %v2873
    %4005 = vmatprep.subr.bf16.mxu0 %v2894
    %4006 = vmatpush1.bf16.msra.mxu0 %v2893
    %4007 = vmatprep.subr.bf16.mxu0 %v2914
    %4008 = vmatpush1.bf16.msra.mxu0 %v2913
    %4009 = vmatprep.mubr.bf16.mxu0 %v684
    %4010 = vmatmul.mubr.bf16.gmra.mrb[0].mxu0 %v683
    %v4011 = vpop.f32.mrb[0].mxu0
    %v4012 = vadd.f32 0.0, %v4011
    %v4013 = vpop.f32.mrb[0].mxu0
    %v4014 = vadd.f32 0.0, %v4013
    %v4015 = vpop.f32.mrb[0].mxu0
    %v4016 = vadd.f32 0.0, %v4015
    %v4017 = vpop.f32.mrb[0].mxu0
    %v4018 = vadd.f32 0.0, %v4017
    %4019 = vdwg.mxu0
    %4020 = vmatprep.subr.bf16.mxu0 %v2934
    %4021 = vmatpush1.bf16.msra.mxu0 %v2933
    %4022 = vmatprep.subr.bf16.mxu0 %v2954
    %4023 = vmatpush1.bf16.msra.mxu0 %v2953
    %4024 = vmatprep.subr.bf16.mxu0 %v2974
    %4025 = vmatpush1.bf16.msra.mxu0 %v2973
    %4026 = vmatprep.subr.bf16.mxu0 %v2994
    %4027 = vmatpush1.bf16.msra.mxu0 %v2993
    %4028 = vmatprep.subr.bf16.mxu0 %v3014
    %4029 = vmatpush1.bf16.msra.mxu0 %v3013
    %4030 = vmatprep.subr.bf16.mxu0 %v3034
    %4031 = vmatpush1.bf16.msra.mxu0 %v3033
    %4032 = vmatprep.subr.bf16.mxu0 %v3054
    %4033 = vmatpush1.bf16.msra.mxu0 %v3053
    %4034 = vmatprep.subr.bf16.mxu0 %v3074
    %4035 = vmatpush1.bf16.msra.mxu0 %v3073
    %4036 = vmatprep.subr.bf16.mxu0 %v3094
    %4037 = vmatpush1.bf16.msra.mxu0 %v3093
    %4038 = vmatprep.subr.bf16.mxu0 %v3114
    %4039 = vmatpush1.bf16.msra.mxu0 %v3113
    %4040 = vmatprep.subr.bf16.mxu0 %v3134
    %4041 = vmatpush1.bf16.msra.mxu0 %v3133
    %4042 = vmatprep.subr.bf16.mxu0 %v3154
    %4043 = vmatpush1.bf16.msra.mxu0 %v3153
    %4044 = vmatprep.subr.bf16.mxu0 %v3174
    %4045 = vmatpush1.bf16.msra.mxu0 %v3173
    %4046 = vmatprep.subr.bf16.mxu0 %v3194
    %4047 = vmatpush1.bf16.msra.mxu0 %v3193
    %4048 = vmatprep.subr.bf16.mxu0 %v3214
    %4049 = vmatpush1.bf16.msra.mxu0 %v3213
    %4050 = vmatprep.subr.bf16.mxu0 %v3234
    %4051 = vmatpush1.bf16.msra.mxu0 %v3233
    %4052 = vmatprep.mubr.bf16.mxu0 %v686
    %4053 = vmatmul.mubr.bf16.gmra.mrb[0].mxu0 %v685
    %v4054 = vpop.f32.mrb[0].mxu0
    %v4055 = vadd.f32 %v4012, %v4054
    %v4056 = vpop.f32.mrb[0].mxu0
    %v4057 = vadd.f32 %v4014, %v4056
    %v4058 = vpop.f32.mrb[0].mxu0
    %v4059 = vadd.f32 %v4016, %v4058
    %v4060 = vpop.f32.mrb[0].mxu0
    %v4061 = vadd.f32 %v4018, %v4060
    %4062 = vdwg.mxu0
    %4063 = vmatprep.subr.bf16.mxu0 %v2616
    %4064 = vmatpush1.bf16.msra.mxu0 %v2615
    %4065 = vmatprep.subr.bf16.mxu0 %v2636
    %4066 = vmatpush1.bf16.msra.mxu0 %v2635
    %4067 = vmatprep.subr.bf16.mxu0 %v2656
    %4068 = vmatpush1.bf16.msra.mxu0 %v2655
    %4069 = vmatprep.subr.bf16.mxu0 %v2676
    %4070 = vmatpush1.bf16.msra.mxu0 %v2675
    %4071 = vmatprep.subr.bf16.mxu0 %v2696
    %4072 = vmatpush1.bf16.msra.mxu0 %v2695
    %4073 = vmatprep.subr.bf16.mxu0 %v2716
    %4074 = vmatpush1.bf16.msra.mxu0 %v2715
    %4075 = vmatprep.subr.bf16.mxu0 %v2736
    %4076 = vmatpush1.bf16.msra.mxu0 %v2735
    %4077 = vmatprep.subr.bf16.mxu0 %v2756
    %4078 = vmatpush1.bf16.msra.mxu0 %v2755
    %4079 = vmatprep.subr.bf16.mxu0 %v2776
    %4080 = vmatpush1.bf16.msra.mxu0 %v2775
    %4081 = vmatprep.subr.bf16.mxu0 %v2796
    %4082 = vmatpush1.bf16.msra.mxu0 %v2795
    %4083 = vmatprep.subr.bf16.mxu0 %v2816
    %4084 = vmatpush1.bf16.msra.mxu0 %v2815
    %4085 = vmatprep.subr.bf16.mxu0 %v2836
    %4086 = vmatpush1.bf16.msra.mxu0 %v2835
    %4087 = vmatprep.subr.bf16.mxu0 %v2856
    %4088 = vmatpush1.bf16.msra.mxu0 %v2855
    %4089 = vmatprep.subr.bf16.mxu0 %v2876
    %4090 = vmatpush1.bf16.msra.mxu0 %v2875
    %4091 = vmatprep.subr.bf16.mxu0 %v2896
    %4092 = vmatpush1.bf16.msra.mxu0 %v2895
    %4093 = vmatprep.subr.bf16.mxu0 %v2916
    %4094 = vmatpush1.bf16.msra.mxu0 %v2915
    %4095 = vmatprep.mubr.bf16.mxu0 %v684
    %4096 = vmatmul.mubr.bf16.gmra.mrb[0].mxu0 %v683
    %v4097 = vpop.f32.mrb[0].mxu0
    %v4098 = vadd.f32 0.0, %v4097
    %v4099 = vpop.f32.mrb[0].mxu0
    %v4100 = vadd.f32 0.0, %v4099
    %v4101 = vpop.f32.mrb[0].mxu0
    %v4102 = vadd.f32 0.0, %v4101
    %v4103 = vpop.f32.mrb[0].mxu0
    %v4104 = vadd.f32 0.0, %v4103
    %4105 = vdwg.mxu0
    %4106 = vmatprep.subr.bf16.mxu0 %v2936
    %4107 = vmatpush1.bf16.msra.mxu0 %v2935
    %4108 = vmatprep.subr.bf16.mxu0 %v2956
    %4109 = vmatpush1.bf16.msra.mxu0 %v2955
    %4110 = vmatprep.subr.bf16.mxu0 %v2976
    %4111 = vmatpush1.bf16.msra.mxu0 %v2975
    %4112 = vmatprep.subr.bf16.mxu0 %v2996
    %4113 = vmatpush1.bf16.msra.mxu0 %v2995
    %4114 = vmatprep.subr.bf16.mxu0 %v3016
    %4115 = vmatpush1.bf16.msra.mxu0 %v3015
    %4116 = vmatprep.subr.bf16.mxu0 %v3036
    %4117 = vmatpush1.bf16.msra.mxu0 %v3035
    %4118 = vmatprep.subr.bf16.mxu0 %v3056
    %4119 = vmatpush1.bf16.msra.mxu0 %v3055
    %4120 = vmatprep.subr.bf16.mxu0 %v3076
    %4121 = vmatpush1.bf16.msra.mxu0 %v3075
    %4122 = vmatprep.subr.bf16.mxu0 %v3096
    %4123 = vmatpush1.bf16.msra.mxu0 %v3095
    %4124 = vmatprep.subr.bf16.mxu0 %v3116
    %4125 = vmatpush1.bf16.msra.mxu0 %v3115
    %4126 = vmatprep.subr.bf16.mxu0 %v3136
    %4127 = vmatpush1.bf16.msra.mxu0 %v3135
    %4128 = vmatprep.subr.bf16.mxu0 %v3156
    %4129 = vmatpush1.bf16.msra.mxu0 %v3155
    %4130 = vmatprep.subr.bf16.mxu0 %v3176
    %4131 = vmatpush1.bf16.msra.mxu0 %v3175
    %4132 = vmatprep.subr.bf16.mxu0 %v3196
    %4133 = vmatpush1.bf16.msra.mxu0 %v3195
    %4134 = vmatprep.subr.bf16.mxu0 %v3216
    %4135 = vmatpush1.bf16.msra.mxu0 %v3215
    %4136 = vmatprep.subr.bf16.mxu0 %v3236
    %4137 = vmatpush1.bf16.msra.mxu0 %v3235
    %4138 = vmatprep.mubr.bf16.mxu0 %v686
    %4139 = vmatmul.mubr.bf16.gmra.mrb[0].mxu0 %v685
    %v4140 = vpop.f32.mrb[0].mxu0
    %v4141 = vadd.f32 %v4098, %v4140
    %v4142 = vpop.f32.mrb[0].mxu0
    %v4143 = vadd.f32 %v4100, %v4142
    %v4144 = vpop.f32.mrb[0].mxu0
    %v4145 = vadd.f32 %v4102, %v4144
    %v4146 = vpop.f32.mrb[0].mxu0
    %v4147 = vadd.f32 %v4104, %v4146
    %4148 = vdwg.mxu0
    %4149 = vmatprep.subr.bf16.mxu0 %v2618
    %4150 = vmatpush1.bf16.msra.mxu0 %v2617
    %4151 = vmatprep.subr.bf16.mxu0 %v2638
    %4152 = vmatpush1.bf16.msra.mxu0 %v2637
    %4153 = vmatprep.subr.bf16.mxu0 %v2658
    %4154 = vmatpush1.bf16.msra.mxu0 %v2657
    %4155 = vmatprep.subr.bf16.mxu0 %v2678
    %4156 = vmatpush1.bf16.msra.mxu0 %v2677
    %4157 = vmatprep.subr.bf16.mxu0 %v2698
    %4158 = vmatpush1.bf16.msra.mxu0 %v2697
    %4159 = vmatprep.subr.bf16.mxu0 %v2718
    %4160 = vmatpush1.bf16.msra.mxu0 %v2717
    %4161 = vmatprep.subr.bf16.mxu0 %v2738
    %4162 = vmatpush1.bf16.msra.mxu0 %v2737
    %4163 = vmatprep.subr.bf16.mxu0 %v2758
    %4164 = vmatpush1.bf16.msra.mxu0 %v2757
    %4165 = vmatprep.subr.bf16.mxu0 %v2778
    %4166 = vmatpush1.bf16.msra.mxu0 %v2777
    %4167 = vmatprep.subr.bf16.mxu0 %v2798
    %4168 = vmatpush1.bf16.msra.mxu0 %v2797
    %4169 = vmatprep.subr.bf16.mxu0 %v2818
    %4170 = vmatpush1.bf16.msra.mxu0 %v2817
    %4171 = vmatprep.subr.bf16.mxu0 %v2838
    %4172 = vmatpush1.bf16.msra.mxu0 %v2837
    %4173 = vmatprep.subr.bf16.mxu0 %v2858
    %4174 = vmatpush1.bf16.msra.mxu0 %v2857
    %4175 = vmatprep.subr.bf16.mxu0 %v2878
    %4176 = vmatpush1.bf16.msra.mxu0 %v2877
    %4177 = vmatprep.subr.bf16.mxu0 %v2898
    %4178 = vmatpush1.bf16.msra.mxu0 %v2897
    %4179 = vmatprep.subr.bf16.mxu0 %v2918
    %4180 = vmatpush1.bf16.msra.mxu0 %v2917
    %4181 = vmatprep.mubr.bf16.mxu0 %v684
    %4182 = vmatmul.mubr.bf16.gmra.mrb[0].mxu0 %v683
    %v4183 = vpop.f32.mrb[0].mxu0
    %v4184 = vadd.f32 0.0, %v4183
    %v4185 = vpop.f32.mrb[0].mxu0
    %v4186 = vadd.f32 0.0, %v4185
    %v4187 = vpop.f32.mrb[0].mxu0
    %v4188 = vadd.f32 0.0, %v4187
    %v4189 = vpop.f32.mrb[0].mxu0
    %v4190 = vadd.f32 0.0, %v4189
    %4191 = vdwg.mxu0
    %4192 = vmatprep.subr.bf16.mxu0 %v2938
    %4193 = vmatpush1.bf16.msra.mxu0 %v2937
    %4194 = vmatprep.subr.bf16.mxu0 %v2958
    %4195 = vmatpush1.bf16.msra.mxu0 %v2957
    %4196 = vmatprep.subr.bf16.mxu0 %v2978
    %4197 = vmatpush1.bf16.msra.mxu0 %v2977
    %4198 = vmatprep.subr.bf16.mxu0 %v2998
    %4199 = vmatpush1.bf16.msra.mxu0 %v2997
    %4200 = vmatprep.subr.bf16.mxu0 %v3018
    %4201 = vmatpush1.bf16.msra.mxu0 %v3017
    %4202 = vmatprep.subr.bf16.mxu0 %v3038
    %4203 = vmatpush1.bf16.msra.mxu0 %v3037
    %4204 = vmatprep.subr.bf16.mxu0 %v3058
    %4205 = vmatpush1.bf16.msra.mxu0 %v3057
    %4206 = vmatprep.subr.bf16.mxu0 %v3078
    %4207 = vmatpush1.bf16.msra.mxu0 %v3077
    %4208 = vmatprep.subr.bf16.mxu0 %v3098
    %4209 = vmatpush1.bf16.msra.mxu0 %v3097
    %4210 = vmatprep.subr.bf16.mxu0 %v3118
    %4211 = vmatpush1.bf16.msra.mxu0 %v3117
    %4212 = vmatprep.subr.bf16.mxu0 %v3138
    %4213 = vmatpush1.bf16.msra.mxu0 %v3137
    %4214 = vmatprep.subr.bf16.mxu0 %v3158
    %4215 = vmatpush1.bf16.msra.mxu0 %v3157
    %4216 = vmatprep.subr.bf16.mxu0 %v3178
    %4217 = vmatpush1.bf16.msra.mxu0 %v3177
    %4218 = vmatprep.subr.bf16.mxu0 %v3198
    %4219 = vmatpush1.bf16.msra.mxu0 %v3197
    %4220 = vmatprep.subr.bf16.mxu0 %v3218
    %4221 = vmatpush1.bf16.msra.mxu0 %v3217
    %4222 = vmatprep.subr.bf16.mxu0 %v3238
    %4223 = vmatpush1.bf16.msra.mxu0 %v3237
    %4224 = vmatprep.mubr.bf16.mxu0 %v686
    %4225 = vmatmul.mubr.bf16.gmra.mrb[0].mxu0 %v685
    %v4226 = vpop.f32.mrb[0].mxu0
    %v4227 = vadd.f32 %v4184, %v4226
    %v4228 = vpop.f32.mrb[0].mxu0
    %v4229 = vadd.f32 %v4186, %v4228
    %v4230 = vpop.f32.mrb[0].mxu0
    %v4231 = vadd.f32 %v4188, %v4230
    %v4232 = vpop.f32.mrb[0].mxu0
    %v4233 = vadd.f32 %v4190, %v4232
    %4234 = vdwg.mxu0
    %4235 = vmatprep.subr.bf16.mxu0 %v2620
    %4236 = vmatpush1.bf16.msra.mxu0 %v2619
    %4237 = vmatprep.subr.bf16.mxu0 %v2640
    %4238 = vmatpush1.bf16.msra.mxu0 %v2639
    %4239 = vmatprep.subr.bf16.mxu0 %v2660
    %4240 = vmatpush1.bf16.msra.mxu0 %v2659
    %4241 = vmatprep.subr.bf16.mxu0 %v2680
    %4242 = vmatpush1.bf16.msra.mxu0 %v2679
    %4243 = vmatprep.subr.bf16.mxu0 %v2700
    %4244 = vmatpush1.bf16.msra.mxu0 %v2699
    %4245 = vmatprep.subr.bf16.mxu0 %v2720
    %4246 = vmatpush1.bf16.msra.mxu0 %v2719
    %4247 = vmatprep.subr.bf16.mxu0 %v2740
    %4248 = vmatpush1.bf16.msra.mxu0 %v2739
    %4249 = vmatprep.subr.bf16.mxu0 %v2760
    %4250 = vmatpush1.bf16.msra.mxu0 %v2759
    %4251 = vmatprep.subr.bf16.mxu0 %v2780
    %4252 = vmatpush1.bf16.msra.mxu0 %v2779
    %4253 = vmatprep.subr.bf16.mxu0 %v2800
    %4254 = vmatpush1.bf16.msra.mxu0 %v2799
    %4255 = vmatprep.subr.bf16.mxu0 %v2820
    %4256 = vmatpush1.bf16.msra.mxu0 %v2819
    %4257 = vmatprep.subr.bf16.mxu0 %v2840
    %4258 = vmatpush1.bf16.msra.mxu0 %v2839
    %4259 = vmatprep.subr.bf16.mxu0 %v2860
    %4260 = vmatpush1.bf16.msra.mxu0 %v2859
    %4261 = vmatprep.subr.bf16.mxu0 %v2880
    %4262 = vmatpush1.bf16.msra.mxu0 %v2879
    %4263 = vmatprep.subr.bf16.mxu0 %v2900
    %4264 = vmatpush1.bf16.msra.mxu0 %v2899
    %4265 = vmatprep.subr.bf16.mxu0 %v2920
    %4266 = vmatpush1.bf16.msra.mxu0 %v2919
    %4267 = vmatprep.mubr.bf16.mxu0 %v684
    %4268 = vmatmul.mubr.bf16.gmra.mrb[0].mxu0 %v683
    %v4269 = vpop.f32.mrb[0].mxu0
    %v4270 = vadd.f32 0.0, %v4269
    %v4271 = vpop.f32.mrb[0].mxu0
    %v4272 = vadd.f32 0.0, %v4271
    %v4273 = vpop.f32.mrb[0].mxu0
    %v4274 = vadd.f32 0.0, %v4273
    %v4275 = vpop.f32.mrb[0].mxu0
    %v4276 = vadd.f32 0.0, %v4275
    %4277 = vdwg.mxu0
    %4278 = vmatprep.subr.bf16.mxu0 %v2940
    %4279 = vmatpush1.bf16.msra.mxu0 %v2939
    %4280 = vmatprep.subr.bf16.mxu0 %v2960
    %4281 = vmatpush1.bf16.msra.mxu0 %v2959
    %4282 = vmatprep.subr.bf16.mxu0 %v2980
    %4283 = vmatpush1.bf16.msra.mxu0 %v2979
    %4284 = vmatprep.subr.bf16.mxu0 %v3000
    %4285 = vmatpush1.bf16.msra.mxu0 %v2999
    %4286 = vmatprep.subr.bf16.mxu0 %v3020
    %4287 = vmatpush1.bf16.msra.mxu0 %v3019
    %4288 = vmatprep.subr.bf16.mxu0 %v3040
    %4289 = vmatpush1.bf16.msra.mxu0 %v3039
    %4290 = vmatprep.subr.bf16.mxu0 %v3060
    %4291 = vmatpush1.bf16.msra.mxu0 %v3059
    %4292 = vmatprep.subr.bf16.mxu0 %v3080
    %4293 = vmatpush1.bf16.msra.mxu0 %v3079
    %4294 = vmatprep.subr.bf16.mxu0 %v3100
    %4295 = vmatpush1.bf16.msra.mxu0 %v3099
    %4296 = vmatprep.subr.bf16.mxu0 %v3120
    %4297 = vmatpush1.bf16.msra.mxu0 %v3119
    %4298 = vmatprep.subr.bf16.mxu0 %v3140
    %4299 = vmatpush1.bf16.msra.mxu0 %v3139
    %4300 = vmatprep.subr.bf16.mxu0 %v3160
    %4301 = vmatpush1.bf16.msra.mxu0 %v3159
    %4302 = vmatprep.subr.bf16.mxu0 %v3180
    %4303 = vmatpush1.bf16.msra.mxu0 %v3179
    %4304 = vmatprep.subr.bf16.mxu0 %v3200
    %4305 = vmatpush1.bf16.msra.mxu0 %v3199
    %4306 = vmatprep.subr.bf16.mxu0 %v3220
    %4307 = vmatpush1.bf16.msra.mxu0 %v3219
    %4308 = vmatprep.subr.bf16.mxu0 %v3240
    %4309 = vmatpush1.bf16.msra.mxu0 %v3239
    %4310 = vmatprep.mubr.bf16.mxu0 %v686
    %4311 = vmatmul.mubr.bf16.gmra.mrb[0].mxu0 %v685
    %v4312 = vpop.f32.mrb[0].mxu0
    %v4313 = vadd.f32 %v4270, %v4312
    %v4314 = vpop.f32.mrb[0].mxu0
    %v4315 = vadd.f32 %v4272, %v4314
    %v4316 = vpop.f32.mrb[0].mxu0
    %v4317 = vadd.f32 %v4274, %v4316
    %v4318 = vpop.f32.mrb[0].mxu0
    %v4319 = vadd.f32 %v4276, %v4318
    %4320 = vdwg.mxu0
    %4321 = vmatprep.subr.bf16.mxu0 %v2622
    %4322 = vmatpush1.bf16.msra.mxu0 %v2621
    %4323 = vmatprep.subr.bf16.mxu0 %v2642
    %4324 = vmatpush1.bf16.msra.mxu0 %v2641
    %4325 = vmatprep.subr.bf16.mxu0 %v2662
    %4326 = vmatpush1.bf16.msra.mxu0 %v2661
    %4327 = vmatprep.subr.bf16.mxu0 %v2682
    %4328 = vmatpush1.bf16.msra.mxu0 %v2681
    %4329 = vmatprep.subr.bf16.mxu0 %v2702
    %4330 = vmatpush1.bf16.msra.mxu0 %v2701
    %4331 = vmatprep.subr.bf16.mxu0 %v2722
    %4332 = vmatpush1.bf16.msra.mxu0 %v2721
    %4333 = vmatprep.subr.bf16.mxu0 %v2742
    %4334 = vmatpush1.bf16.msra.mxu0 %v2741
    %4335 = vmatprep.subr.bf16.mxu0 %v2762
    %4336 = vmatpush1.bf16.msra.mxu0 %v2761
    %4337 = vmatprep.subr.bf16.mxu0 %v2782
    %4338 = vmatpush1.bf16.msra.mxu0 %v2781
    %4339 = vmatprep.subr.bf16.mxu0 %v2802
    %4340 = vmatpush1.bf16.msra.mxu0 %v2801
    %4341 = vmatprep.subr.bf16.mxu0 %v2822
    %4342 = vmatpush1.bf16.msra.mxu0 %v2821
    %4343 = vmatprep.subr.bf16.mxu0 %v2842
    %4344 = vmatpush1.bf16.msra.mxu0 %v2841
    %4345 = vmatprep.subr.bf16.mxu0 %v2862
    %4346 = vmatpush1.bf16.msra.mxu0 %v2861
    %4347 = vmatprep.subr.bf16.mxu0 %v2882
    %4348 = vmatpush1.bf16.msra.mxu0 %v2881
    %4349 = vmatprep.subr.bf16.mxu0 %v2902
    %4350 = vmatpush1.bf16.msra.mxu0 %v2901
    %4351 = vmatprep.subr.bf16.mxu0 %v2922
    %4352 = vmatpush1.bf16.msra.mxu0 %v2921
    %4353 = vmatprep.mubr.bf16.mxu0 %v684
    %4354 = vmatmul.mubr.bf16.gmra.mrb[0].mxu0 %v683
    %v4355 = vpop.f32.mrb[0].mxu0
    %v4356 = vadd.f32 0.0, %v4355
    %v4357 = vpop.f32.mrb[0].mxu0
    %v4358 = vadd.f32 0.0, %v4357
    %v4359 = vpop.f32.mrb[0].mxu0
    %v4360 = vadd.f32 0.0, %v4359
    %v4361 = vpop.f32.mrb[0].mxu0
    %v4362 = vadd.f32 0.0, %v4361
    %4363 = vdwg.mxu0
    %4364 = vmatprep.subr.bf16.mxu0 %v2942
    %4365 = vmatpush1.bf16.msra.mxu0 %v2941
    %4366 = vmatprep.subr.bf16.mxu0 %v2962
    %4367 = vmatpush1.bf16.msra.mxu0 %v2961
    %4368 = vmatprep.subr.bf16.mxu0 %v2982
    %4369 = vmatpush1.bf16.msra.mxu0 %v2981
    %4370 = vmatprep.subr.bf16.mxu0 %v3002
    %4371 = vmatpush1.bf16.msra.mxu0 %v3001
    %4372 = vmatprep.subr.bf16.mxu0 %v3022
    %4373 = vmatpush1.bf16.msra.mxu0 %v3021
    %4374 = vmatprep.subr.bf16.mxu0 %v3042
    %4375 = vmatpush1.bf16.msra.mxu0 %v3041
    %4376 = vmatprep.subr.bf16.mxu0 %v3062
    %4377 = vmatpush1.bf16.msra.mxu0 %v3061
    %4378 = vmatprep.subr.bf16.mxu0 %v3082
    %4379 = vmatpush1.bf16.msra.mxu0 %v3081
    %4380 = vmatprep.subr.bf16.mxu0 %v3102
    %4381 = vmatpush1.bf16.msra.mxu0 %v3101
    %4382 = vmatprep.subr.bf16.mxu0 %v3122
    %4383 = vmatpush1.bf16.msra.mxu0 %v3121
    %4384 = vmatprep.subr.bf16.mxu0 %v3142
    %4385 = vmatpush1.bf16.msra.mxu0 %v3141
    %4386 = vmatprep.subr.bf16.mxu0 %v3162
    %4387 = vmatpush1.bf16.msra.mxu0 %v3161
    %4388 = vmatprep.subr.bf16.mxu0 %v3182
    %4389 = vmatpush1.bf16.msra.mxu0 %v3181
    %4390 = vmatprep.subr.bf16.mxu0 %v3202
    %4391 = vmatpush1.bf16.msra.mxu0 %v3201
    %4392 = vmatprep.subr.bf16.mxu0 %v3222
    %4393 = vmatpush1.bf16.msra.mxu0 %v3221
    %4394 = vmatprep.subr.bf16.mxu0 %v3242
    %4395 = vmatpush1.bf16.msra.mxu0 %v3241
    %4396 = vmatprep.mubr.bf16.mxu0 %v686
    %4397 = vmatmul.mubr.bf16.gmra.mrb[0].mxu0 %v685
    %v4398 = vpop.f32.mrb[0].mxu0
    %v4399 = vadd.f32 %v4356, %v4398
    %v4400 = vpop.f32.mrb[0].mxu0
    %v4401 = vadd.f32 %v4358, %v4400
    %v4402 = vpop.f32.mrb[0].mxu0
    %v4403 = vadd.f32 %v4360, %v4402
    %v4404 = vpop.f32.mrb[0].mxu0
    %v4405 = vadd.f32 %v4362, %v4404
    %4406 = vdwg.mxu0
    %4407 = vmatprep.subr.bf16.mxu0 %v2624
    %4408 = vmatpush1.bf16.msra.mxu0 %v2623
    %4409 = vmatprep.subr.bf16.mxu0 %v2644
    %4410 = vmatpush1.bf16.msra.mxu0 %v2643
    %4411 = vmatprep.subr.bf16.mxu0 %v2664
    %4412 = vmatpush1.bf16.msra.mxu0 %v2663
    %4413 = vmatprep.subr.bf16.mxu0 %v2684
    %4414 = vmatpush1.bf16.msra.mxu0 %v2683
    %4415 = vmatprep.subr.bf16.mxu0 %v2704
    %4416 = vmatpush1.bf16.msra.mxu0 %v2703
    %4417 = vmatprep.subr.bf16.mxu0 %v2724
    %4418 = vmatpush1.bf16.msra.mxu0 %v2723
    %4419 = vmatprep.subr.bf16.mxu0 %v2744
    %4420 = vmatpush1.bf16.msra.mxu0 %v2743
    %4421 = vmatprep.subr.bf16.mxu0 %v2764
    %4422 = vmatpush1.bf16.msra.mxu0 %v2763
    %4423 = vmatprep.subr.bf16.mxu0 %v2784
    %4424 = vmatpush1.bf16.msra.mxu0 %v2783
    %4425 = vmatprep.subr.bf16.mxu0 %v2804
    %4426 = vmatpush1.bf16.msra.mxu0 %v2803
    %4427 = vmatprep.subr.bf16.mxu0 %v2824
    %4428 = vmatpush1.bf16.msra.mxu0 %v2823
    %4429 = vmatprep.subr.bf16.mxu0 %v2844
    %4430 = vmatpush1.bf16.msra.mxu0 %v2843
    %4431 = vmatprep.subr.bf16.mxu0 %v2864
    %4432 = vmatpush1.bf16.msra.mxu0 %v2863
    %4433 = vmatprep.subr.bf16.mxu0 %v2884
    %4434 = vmatpush1.bf16.msra.mxu0 %v2883
    %4435 = vmatprep.subr.bf16.mxu0 %v2904
    %4436 = vmatpush1.bf16.msra.mxu0 %v2903
    %4437 = vmatprep.subr.bf16.mxu0 %v2924
    %4438 = vmatpush1.bf16.msra.mxu0 %v2923
    %4439 = vmatprep.mubr.bf16.mxu0 %v684
    %4440 = vmatmul.mubr.bf16.gmra.mrb[0].mxu0 %v683
    %v4441 = vpop.f32.mrb[0].mxu0
    %v4442 = vadd.f32 0.0, %v4441
    %v4443 = vpop.f32.mrb[0].mxu0
    %v4444 = vadd.f32 0.0, %v4443
    %v4445 = vpop.f32.mrb[0].mxu0
    %v4446 = vadd.f32 0.0, %v4445
    %v4447 = vpop.f32.mrb[0].mxu0
    %v4448 = vadd.f32 0.0, %v4447
    %4449 = vdwg.mxu0
    %4450 = vmatprep.subr.bf16.mxu0 %v2944
    %4451 = vmatpush1.bf16.msra.mxu0 %v2943
    %4452 = vmatprep.subr.bf16.mxu0 %v2964
    %4453 = vmatpush1.bf16.msra.mxu0 %v2963
    %4454 = vmatprep.subr.bf16.mxu0 %v2984
    %4455 = vmatpush1.bf16.msra.mxu0 %v2983
    %4456 = vmatprep.subr.bf16.mxu0 %v3004
    %4457 = vmatpush1.bf16.msra.mxu0 %v3003
    %4458 = vmatprep.subr.bf16.mxu0 %v3024
    %4459 = vmatpush1.bf16.msra.mxu0 %v3023
    %4460 = vmatprep.subr.bf16.mxu0 %v3044
    %4461 = vmatpush1.bf16.msra.mxu0 %v3043
    %4462 = vmatprep.subr.bf16.mxu0 %v3064
    %4463 = vmatpush1.bf16.msra.mxu0 %v3063
    %4464 = vmatprep.subr.bf16.mxu0 %v3084
    %4465 = vmatpush1.bf16.msra.mxu0 %v3083
    %4466 = vmatprep.subr.bf16.mxu0 %v3104
    %4467 = vmatpush1.bf16.msra.mxu0 %v3103
    %4468 = vmatprep.subr.bf16.mxu0 %v3124
    %4469 = vmatpush1.bf16.msra.mxu0 %v3123
    %4470 = vmatprep.subr.bf16.mxu0 %v3144
    %4471 = vmatpush1.bf16.msra.mxu0 %v3143
    %4472 = vmatprep.subr.bf16.mxu0 %v3164
    %4473 = vmatpush1.bf16.msra.mxu0 %v3163
    %4474 = vmatprep.subr.bf16.mxu0 %v3184
    %4475 = vmatpush1.bf16.msra.mxu0 %v3183
    %4476 = vmatprep.subr.bf16.mxu0 %v3204
    %4477 = vmatpush1.bf16.msra.mxu0 %v3203
    %4478 = vmatprep.subr.bf16.mxu0 %v3224
    %4479 = vmatpush1.bf16.msra.mxu0 %v3223
    %4480 = vmatprep.subr.bf16.mxu0 %v3244
    %4481 = vmatpush1.bf16.msra.mxu0 %v3243
    %4482 = vmatprep.mubr.bf16.mxu0 %v686
    %4483 = vmatmul.mubr.bf16.gmra.mrb[0].mxu0 %v685
    %v4484 = vpop.f32.mrb[0].mxu0
    %v4485 = vadd.f32 %v4442, %v4484
    %v4486 = vpop.f32.mrb[0].mxu0
    %v4487 = vadd.f32 %v4444, %v4486
    %v4488 = vpop.f32.mrb[0].mxu0
    %v4489 = vadd.f32 %v4446, %v4488
    %v4490 = vpop.f32.mrb[0].mxu0
    %v4491 = vadd.f32 %v4448, %v4490
    %4492 = vdwg.mxu0
    %4493 = vmatprep.subr.bf16.mxu0 %v2626
    %4494 = vmatpush1.bf16.msra.mxu0 %v2625
    %4495 = vmatprep.subr.bf16.mxu0 %v2646
    %4496 = vmatpush1.bf16.msra.mxu0 %v2645
    %4497 = vmatprep.subr.bf16.mxu0 %v2666
    %4498 = vmatpush1.bf16.msra.mxu0 %v2665
    %4499 = vmatprep.subr.bf16.mxu0 %v2686
    %4500 = vmatpush1.bf16.msra.mxu0 %v2685
    %4501 = vmatprep.subr.bf16.mxu0 %v2706
    %4502 = vmatpush1.bf16.msra.mxu0 %v2705
    %4503 = vmatprep.subr.bf16.mxu0 %v2726
    %4504 = vmatpush1.bf16.msra.mxu0 %v2725
    %4505 = vmatprep.subr.bf16.mxu0 %v2746
    %4506 = vmatpush1.bf16.msra.mxu0 %v2745
    %4507 = vmatprep.subr.bf16.mxu0 %v2766
    %4508 = vmatpush1.bf16.msra.mxu0 %v2765
    %4509 = vmatprep.subr.bf16.mxu0 %v2786
    %4510 = vmatpush1.bf16.msra.mxu0 %v2785
    %4511 = vmatprep.subr.bf16.mxu0 %v2806
    %4512 = vmatpush1.bf16.msra.mxu0 %v2805
    %4513 = vmatprep.subr.bf16.mxu0 %v2826
    %4514 = vmatpush1.bf16.msra.mxu0 %v2825
    %4515 = vmatprep.subr.bf16.mxu0 %v2846
    %4516 = vmatpush1.bf16.msra.mxu0 %v2845
    %4517 = vmatprep.subr.bf16.mxu0 %v2866
    %4518 = vmatpush1.bf16.msra.mxu0 %v2865
    %4519 = vmatprep.subr.bf16.mxu0 %v2886
    %4520 = vmatpush1.bf16.msra.mxu0 %v2885
    %4521 = vmatprep.subr.bf16.mxu0 %v2906
    %4522 = vmatpush1.bf16.msra.mxu0 %v2905
    %4523 = vmatprep.subr.bf16.mxu0 %v2926
    %4524 = vmatpush1.bf16.msra.mxu0 %v2925
    %4525 = vmatprep.mubr.bf16.mxu0 %v684
    %4526 = vmatmul.mubr.bf16.gmra.mrb[0].mxu0 %v683
    %v4527 = vpop.f32.mrb[0].mxu0
    %v4528 = vadd.f32 0.0, %v4527
    %v4529 = vpop.f32.mrb[0].mxu0
    %v4530 = vadd.f32 0.0, %v4529
    %v4531 = vpop.f32.mrb[0].mxu0
    %v4532 = vadd.f32 0.0, %v4531
    %v4533 = vpop.f32.mrb[0].mxu0
    %v4534 = vadd.f32 0.0, %v4533
    %4535 = vdwg.mxu0
    %4536 = vmatprep.subr.bf16.mxu0 %v2946
    %4537 = vmatpush1.bf16.msra.mxu0 %v2945
    %4538 = vmatprep.subr.bf16.mxu0 %v2966
    %4539 = vmatpush1.bf16.msra.mxu0 %v2965
    %4540 = vmatprep.subr.bf16.mxu0 %v2986
    %4541 = vmatpush1.bf16.msra.mxu0 %v2985
    %4542 = vmatprep.subr.bf16.mxu0 %v3006
    %4543 = vmatpush1.bf16.msra.mxu0 %v3005
    %4544 = vmatprep.subr.bf16.mxu0 %v3026
    %4545 = vmatpush1.bf16.msra.mxu0 %v3025
    %4546 = vmatprep.subr.bf16.mxu0 %v3046
    %4547 = vmatpush1.bf16.msra.mxu0 %v3045
    %4548 = vmatprep.subr.bf16.mxu0 %v3066
    %4549 = vmatpush1.bf16.msra.mxu0 %v3065
    %4550 = vmatprep.subr.bf16.mxu0 %v3086
    %4551 = vmatpush1.bf16.msra.mxu0 %v3085
    %4552 = vmatprep.subr.bf16.mxu0 %v3106
    %4553 = vmatpush1.bf16.msra.mxu0 %v3105
    %4554 = vmatprep.subr.bf16.mxu0 %v3126
    %4555 = vmatpush1.bf16.msra.mxu0 %v3125
    %4556 = vmatprep.subr.bf16.mxu0 %v3146
    %4557 = vmatpush1.bf16.msra.mxu0 %v3145
    %4558 = vmatprep.subr.bf16.mxu0 %v3166
    %4559 = vmatpush1.bf16.msra.mxu0 %v3165
    %4560 = vmatprep.subr.bf16.mxu0 %v3186
    %4561 = vmatpush1.bf16.msra.mxu0 %v3185
    %4562 = vmatprep.subr.bf16.mxu0 %v3206
    %4563 = vmatpush1.bf16.msra.mxu0 %v3205
    %4564 = vmatprep.subr.bf16.mxu0 %v3226
    %4565 = vmatpush1.bf16.msra.mxu0 %v3225
    %4566 = vmatprep.subr.bf16.mxu0 %v3246
    %4567 = vmatpush1.bf16.msra.mxu0 %v3245
    %4568 = vmatprep.mubr.bf16.mxu0 %v686
    %4569 = vmatmul.mubr.bf16.gmra.mrb[0].mxu0 %v685
    %v4570 = vpop.f32.mrb[0].mxu0
    %v4571 = vadd.f32 %v4528, %v4570
    %v4572 = vpop.f32.mrb[0].mxu0
    %v4573 = vadd.f32 %v4530, %v4572
    %v4574 = vpop.f32.mrb[0].mxu0
    %v4575 = vadd.f32 %v4532, %v4574
    %v4576 = vpop.f32.mrb[0].mxu0
    %v4577 = vadd.f32 %v4534, %v4576
    %4578 = vdwg.mxu0
    %4579 = vmatprep.subr.bf16.mxu0 %v2628
    %4580 = vmatpush1.bf16.msra.mxu0 %v2627
    %4581 = vmatprep.subr.bf16.mxu0 %v2648
    %4582 = vmatpush1.bf16.msra.mxu0 %v2647
    %4583 = vmatprep.subr.bf16.mxu0 %v2668
    %4584 = vmatpush1.bf16.msra.mxu0 %v2667
    %4585 = vmatprep.subr.bf16.mxu0 %v2688
    %4586 = vmatpush1.bf16.msra.mxu0 %v2687
    %4587 = vmatprep.subr.bf16.mxu0 %v2708
    %4588 = vmatpush1.bf16.msra.mxu0 %v2707
    %4589 = vmatprep.subr.bf16.mxu0 %v2728
    %4590 = vmatpush1.bf16.msra.mxu0 %v2727
    %4591 = vmatprep.subr.bf16.mxu0 %v2748
    %4592 = vmatpush1.bf16.msra.mxu0 %v2747
    %4593 = vmatprep.subr.bf16.mxu0 %v2768
    %4594 = vmatpush1.bf16.msra.mxu0 %v2767
    %4595 = vmatprep.subr.bf16.mxu0 %v2788
    %4596 = vmatpush1.bf16.msra.mxu0 %v2787
    %4597 = vmatprep.subr.bf16.mxu0 %v2808
    %4598 = vmatpush1.bf16.msra.mxu0 %v2807
    %4599 = vmatprep.subr.bf16.mxu0 %v2828
    %4600 = vmatpush1.bf16.msra.mxu0 %v2827
    %4601 = vmatprep.subr.bf16.mxu0 %v2848
    %4602 = vmatpush1.bf16.msra.mxu0 %v2847
    %4603 = vmatprep.subr.bf16.mxu0 %v2868
    %4604 = vmatpush1.bf16.msra.mxu0 %v2867
    %4605 = vmatprep.subr.bf16.mxu0 %v2888
    %4606 = vmatpush1.bf16.msra.mxu0 %v2887
    %4607 = vmatprep.subr.bf16.mxu0 %v2908
    %4608 = vmatpush1.bf16.msra.mxu0 %v2907
    %4609 = vmatprep.subr.bf16.mxu0 %v2928
    %4610 = vmatpush1.bf16.msra.mxu0 %v2927
    %4611 = vmatprep.mubr.bf16.mxu0 %v684
    %4612 = vmatmul.mubr.bf16.gmra.mrb[0].mxu0 %v683
    %v4613 = vpop.f32.mrb[0].mxu0
    %v4614 = vadd.f32 0.0, %v4613
    %v4615 = vpop.f32.mrb[0].mxu0
    %v4616 = vadd.f32 0.0, %v4615
    %v4617 = vpop.f32.mrb[0].mxu0
    %v4618 = vadd.f32 0.0, %v4617
    %v4619 = vpop.f32.mrb[0].mxu0
    %v4620 = vadd.f32 0.0, %v4619
    %4621 = vdwg.mxu0
    %4622 = vmatprep.subr.bf16.mxu0 %v2948
    %4623 = vmatpush1.bf16.msra.mxu0 %v2947
    %4624 = vmatprep.subr.bf16.mxu0 %v2968
    %4625 = vmatpush1.bf16.msra.mxu0 %v2967
    %4626 = vmatprep.subr.bf16.mxu0 %v2988
    %4627 = vmatpush1.bf16.msra.mxu0 %v2987
    %4628 = vmatprep.subr.bf16.mxu0 %v3008
    %4629 = vmatpush1.bf16.msra.mxu0 %v3007
    %4630 = vmatprep.subr.bf16.mxu0 %v3028
    %4631 = vmatpush1.bf16.msra.mxu0 %v3027
    %4632 = vmatprep.subr.bf16.mxu0 %v3048
    %4633 = vmatpush1.bf16.msra.mxu0 %v3047
    %4634 = vmatprep.subr.bf16.mxu0 %v3068
    %4635 = vmatpush1.bf16.msra.mxu0 %v3067
    %4636 = vmatprep.subr.bf16.mxu0 %v3088
    %4637 = vmatpush1.bf16.msra.mxu0 %v3087
    %4638 = vmatprep.subr.bf16.mxu0 %v3108
    %4639 = vmatpush1.bf16.msra.mxu0 %v3107
    %4640 = vmatprep.subr.bf16.mxu0 %v3128
    %4641 = vmatpush1.bf16.msra.mxu0 %v3127
    %4642 = vmatprep.subr.bf16.mxu0 %v3148
    %4643 = vmatpush1.bf16.msra.mxu0 %v3147
    %4644 = vmatprep.subr.bf16.mxu0 %v3168
    %4645 = vmatpush1.bf16.msra.mxu0 %v3167
    %4646 = vmatprep.subr.bf16.mxu0 %v3188
    %4647 = vmatpush1.bf16.msra.mxu0 %v3187
    %4648 = vmatprep.subr.bf16.mxu0 %v3208
    %4649 = vmatpush1.bf16.msra.mxu0 %v3207
    %4650 = vmatprep.subr.bf16.mxu0 %v3228
    %4651 = vmatpush1.bf16.msra.mxu0 %v3227
    %4652 = vmatprep.subr.bf16.mxu0 %v3248
    %4653 = vmatpush1.bf16.msra.mxu0 %v3247
    %4654 = vmatprep.mubr.bf16.mxu0 %v686
    %4655 = vmatmul.mubr.bf16.gmra.mrb[0].mxu0 %v685
    %v4656 = vpop.f32.mrb[0].mxu0
    %v4657 = vadd.f32 %v4614, %v4656
    %v4658 = vpop.f32.mrb[0].mxu0
    %v4659 = vadd.f32 %v4616, %v4658
    %v4660 = vpop.f32.mrb[0].mxu0
    %v4661 = vadd.f32 %v4618, %v4660
    %v4662 = vpop.f32.mrb[0].mxu0
    %v4663 = vadd.f32 %v4620, %v4662
    %4664 = vdwg.mxu0
    %4665 = vmatprep.subr.bf16.mxu0 %v2630
    %4666 = vmatpush1.bf16.msra.mxu0 %v2629
    %4667 = vmatprep.subr.bf16.mxu0 %v2650
    %4668 = vmatpush1.bf16.msra.mxu0 %v2649
    %4669 = vmatprep.subr.bf16.mxu0 %v2670
    %4670 = vmatpush1.bf16.msra.mxu0 %v2669
    %4671 = vmatprep.subr.bf16.mxu0 %v2690
    %4672 = vmatpush1.bf16.msra.mxu0 %v2689
    %4673 = vmatprep.subr.bf16.mxu0 %v2710
    %4674 = vmatpush1.bf16.msra.mxu0 %v2709
    %4675 = vmatprep.subr.bf16.mxu0 %v2730
    %4676 = vmatpush1.bf16.msra.mxu0 %v2729
    %4677 = vmatprep.subr.bf16.mxu0 %v2750
    %4678 = vmatpush1.bf16.msra.mxu0 %v2749
    %4679 = vmatprep.subr.bf16.mxu0 %v2770
    %4680 = vmatpush1.bf16.msra.mxu0 %v2769
    %4681 = vmatprep.subr.bf16.mxu0 %v2790
    %4682 = vmatpush1.bf16.msra.mxu0 %v2789
    %4683 = vmatprep.subr.bf16.mxu0 %v2810
    %4684 = vmatpush1.bf16.msra.mxu0 %v2809
    %4685 = vmatprep.subr.bf16.mxu0 %v2830
    %4686 = vmatpush1.bf16.msra.mxu0 %v2829
    %4687 = vmatprep.subr.bf16.mxu0 %v2850
    %4688 = vmatpush1.bf16.msra.mxu0 %v2849
    %4689 = vmatprep.subr.bf16.mxu0 %v2870
    %4690 = vmatpush1.bf16.msra.mxu0 %v2869
    %4691 = vmatprep.subr.bf16.mxu0 %v2890
    %4692 = vmatpush1.bf16.msra.mxu0 %v2889
    %4693 = vmatprep.subr.bf16.mxu0 %v2910
    %4694 = vmatpush1.bf16.msra.mxu0 %v2909
    %4695 = vmatprep.subr.bf16.mxu0 %v2930
    %4696 = vmatpush1.bf16.msra.mxu0 %v2929
    %4697 = vmatprep.mubr.bf16.mxu0 %v684
    %4698 = vmatmul.mubr.bf16.gmra.mrb[0].mxu0 %v683
    %v4699 = vpop.f32.mrb[0].mxu0
    %v4700 = vadd.f32 0.0, %v4699
    %v4701 = vpop.f32.mrb[0].mxu0
    %v4702 = vadd.f32 0.0, %v4701
    %v4703 = vpop.f32.mrb[0].mxu0
    %v4704 = vadd.f32 0.0, %v4703
    %v4705 = vpop.f32.mrb[0].mxu0
    %v4706 = vadd.f32 0.0, %v4705
    %4707 = vdwg.mxu0
    %4708 = vmatprep.subr.bf16.mxu0 %v2950
    %4709 = vmatpush1.bf16.msra.mxu0 %v2949
    %4710 = vmatprep.subr.bf16.mxu0 %v2970
    %4711 = vmatpush1.bf16.msra.mxu0 %v2969
    %4712 = vmatprep.subr.bf16.mxu0 %v2990
    %4713 = vmatpush1.bf16.msra.mxu0 %v2989
    %4714 = vmatprep.subr.bf16.mxu0 %v3010
    %4715 = vmatpush1.bf16.msra.mxu0 %v3009
    %4716 = vmatprep.subr.bf16.mxu0 %v3030
    %4717 = vmatpush1.bf16.msra.mxu0 %v3029
    %4718 = vmatprep.subr.bf16.mxu0 %v3050
    %4719 = vmatpush1.bf16.msra.mxu0 %v3049
    %4720 = vmatprep.subr.bf16.mxu0 %v3070
    %4721 = vmatpush1.bf16.msra.mxu0 %v3069
    %4722 = vmatprep.subr.bf16.mxu0 %v3090
    %4723 = vmatpush1.bf16.msra.mxu0 %v3089
    %4724 = vmatprep.subr.bf16.mxu0 %v3110
    %4725 = vmatpush1.bf16.msra.mxu0 %v3109
    %4726 = vmatprep.subr.bf16.mxu0 %v3130
    %4727 = vmatpush1.bf16.msra.mxu0 %v3129
    %4728 = vmatprep.subr.bf16.mxu0 %v3150
    %4729 = vmatpush1.bf16.msra.mxu0 %v3149
    %4730 = vmatprep.subr.bf16.mxu0 %v3170
    %4731 = vmatpush1.bf16.msra.mxu0 %v3169
    %4732 = vmatprep.subr.bf16.mxu0 %v3190
    %4733 = vmatpush1.bf16.msra.mxu0 %v3189
    %4734 = vmatprep.subr.bf16.mxu0 %v3210
    %4735 = vmatpush1.bf16.msra.mxu0 %v3209
    %4736 = vmatprep.subr.bf16.mxu0 %v3230
    %4737 = vmatpush1.bf16.msra.mxu0 %v3229
    %4738 = vmatprep.subr.bf16.mxu0 %v3250
    %4739 = vmatpush1.bf16.msra.mxu0 %v3249
    %4740 = vmatprep.mubr.bf16.mxu0 %v686
    %4741 = vmatmul.mubr.bf16.gmra.mrb[0].mxu0 %v685
    %v4742 = vpop.f32.mrb[0].mxu0
    %v4743 = vadd.f32 %v4700, %v4742
    %v4744 = vpop.f32.mrb[0].mxu0
    %v4745 = vadd.f32 %v4702, %v4744
    %v4746 = vpop.f32.mrb[0].mxu0
    %v4747 = vadd.f32 %v4704, %v4746
    %v4748 = vpop.f32.mrb[0].mxu0
    %v4749 = vadd.f32 %v4706, %v4748
    %4750 = vdwg.mxu0
    %v4751 = vpack.c.bf16 %v3973, %v3969
    %v4752 = vpack.c.bf16 %v3975, %v3971
    %v4753 = vpack.c.bf16 %v4059, %v4055
    %v4754 = vpack.c.bf16 %v4061, %v4057
    %v4755 = vpack.c.bf16 %v4145, %v4141
    %v4756 = vpack.c.bf16 %v4147, %v4143
    %v4757 = vpack.c.bf16 %v4231, %v4227
    %v4758 = vpack.c.bf16 %v4233, %v4229
    %v4759 = vpack.c.bf16 %v4317, %v4313
    %v4760 = vpack.c.bf16 %v4319, %v4315
    %v4761 = vpack.c.bf16 %v4403, %v4399
    %v4762 = vpack.c.bf16 %v4405, %v4401
    %v4763 = vpack.c.bf16 %v4489, %v4485
    %v4764 = vpack.c.bf16 %v4491, %v4487
    %v4765 = vpack.c.bf16 %v4575, %v4571
    %v4766 = vpack.c.bf16 %v4577, %v4573
    %v4767 = vpack.c.bf16 %v4661, %v4657
    %v4768 = vpack.c.bf16 %v4663, %v4659
    %v4769 = vpack.c.bf16 %v4747, %v4743
    %v4770 = vpack.c.bf16 %v4749, %v4745
    %v4791 = vunpack.c.l.b16 %v4751
    %v4792 = vunpack.c.l.b16 %v4752
    %v4793 = vunpack.c.l.b16 %v4753
    %v4794 = vunpack.c.l.b16 %v4754
    %v4795 = vunpack.c.l.b16 %v4755
    %v4796 = vunpack.c.l.b16 %v4756
    %v4797 = vunpack.c.l.b16 %v4757
    %v4798 = vunpack.c.l.b16 %v4758
    %v4799 = vunpack.c.l.b16 %v4759
    %v4800 = vunpack.c.l.b16 %v4760
    %v4801 = vunpack.c.l.b16 %v4761
    %v4802 = vunpack.c.l.b16 %v4762
    %v4803 = vunpack.c.l.b16 %v4763
    %v4804 = vunpack.c.l.b16 %v4764
    %v4805 = vunpack.c.l.b16 %v4765
    %v4806 = vunpack.c.l.b16 %v4766
    %v4807 = vunpack.c.l.b16 %v4767
    %v4808 = vunpack.c.l.b16 %v4768
    %v4809 = vunpack.c.l.b16 %v4769
    %v4810 = vunpack.c.l.b16 %v4770
    %v4811 = vunpack.c.h.b16 %v4751
    %v4812 = vunpack.c.h.b16 %v4752
    %v4813 = vunpack.c.h.b16 %v4753
    %v4814 = vunpack.c.h.b16 %v4754
    %v4815 = vunpack.c.h.b16 %v4755
    %v4816 = vunpack.c.h.b16 %v4756
    %v4817 = vunpack.c.h.b16 %v4757
    %v4818 = vunpack.c.h.b16 %v4758
    %v4819 = vunpack.c.h.b16 %v4759
    %v4820 = vunpack.c.h.b16 %v4760
    %v4821 = vunpack.c.h.b16 %v4761
    %v4822 = vunpack.c.h.b16 %v4762
    %v4823 = vunpack.c.h.b16 %v4763
    %v4824 = vunpack.c.h.b16 %v4764
    %v4825 = vunpack.c.h.b16 %v4765
    %v4826 = vunpack.c.h.b16 %v4766
    %v4827 = vunpack.c.h.b16 %v4767
    %v4828 = vunpack.c.h.b16 %v4768
    %v4829 = vunpack.c.h.b16 %v4769
    %v4830 = vunpack.c.h.b16 %v4770
    %v4831 = vpack.c.b16 %v4792, %v4791
    %v4832 = vpack.c.b16 %v4794, %v4793
    %v4833 = vpack.c.b16 %v4796, %v4795
    %v4834 = vpack.c.b16 %v4798, %v4797
    %v4835 = vpack.c.b16 %v4800, %v4799
    %v4836 = vpack.c.b16 %v4802, %v4801
    %v4837 = vpack.c.b16 %v4804, %v4803
    %v4838 = vpack.c.b16 %v4806, %v4805
    %v4839 = vpack.c.b16 %v4808, %v4807
    %v4840 = vpack.c.b16 %v4810, %v4809
    %v4841 = vpack.c.b16 %v4812, %v4811
    %v4842 = vpack.c.b16 %v4814, %v4813
    %v4843 = vpack.c.b16 %v4816, %v4815
    %v4844 = vpack.c.b16 %v4818, %v4817
    %v4845 = vpack.c.b16 %v4820, %v4819
    %v4846 = vpack.c.b16 %v4822, %v4821
    %v4847 = vpack.c.b16 %v4824, %v4823
    %v4848 = vpack.c.b16 %v4826, %v4825
    %v4849 = vpack.c.b16 %v4828, %v4827
    %v4850 = vpack.c.b16 %v4830, %v4829
    %4871 = vst [vmem:[%s2] sm:$0xff] %v4831
    %4872 = vst [vmem:[%s2 + $0x8] sm:$0xff] %v4832
    %4873 = vst [vmem:[%s2 + $0x10] sm:$0xff] %v4833
    %4874 = vst [vmem:[%s2 + $0x18] sm:$0xff] %v4834
    %4875 = vst [vmem:[%s2 + $0x20] sm:$0xff] %v4835
    %4876 = vst [vmem:[%s2 + $0x28] sm:$0xff] %v4836
    %4877 = vst [vmem:[%s2 + $0x30] sm:$0xff] %v4837
    %4878 = vst [vmem:[%s2 + $0x38] sm:$0xff] %v4838
    %4879 = vst [vmem:[%s2 + $0x40] sm:$0xff] %v4839
    %vm4880 = vcmask 1043456
    %vm4881 = vcmask 556036
    %vm4882 = vmor %vm4881, %vm4880
    %4883 = vst.msk [vmem:[%s2 + $0x48] sm:$0xff] %vm4882, %v4840
    %4884 = vst [vmem:[%s2 + $0x50] sm:$0xff] %v4841
    %4885 = vst [vmem:[%s2 + $0x58] sm:$0xff] %v4842
    %4886 = vst [vmem:[%s2 + $0x60] sm:$0xff] %v4843
    %4887 = vst [vmem:[%s2 + $0x68] sm:$0xff] %v4844
    %4888 = vst [vmem:[%s2 + $0x70] sm:$0xff] %v4845
    %4889 = vst [vmem:[%s2 + $0x78] sm:$0xff] %v4846
    %4890 = vst [vmem:[%s2 + $0x80] sm:$0xff] %v4847
    %4891 = vst [vmem:[%s2 + $0x88] sm:$0xff] %v4848
    %4892 = vst [vmem:[%s2 + $0x90] sm:$0xff] %v4849
    %4893 = vst.msk [vmem:[%s2 + $0x98] sm:$0xff] %vm4882, %v4850
    %4894 = vst [vmem:[%s3] sm:$0xff] %v4745
    %4895 = vst [vmem:[%s3 + $0x8] sm:$0xff] %v4749
    // Predicated region
    $region14: #{position_evaluator.1} parent=1 // pred_check
      _
    $region15: #{position_evaluator.1} parent=1 // pred_check_branch
      %4897 = sbr.rel (0) target = $region17
    $region16: #{position_evaluator.1} parent=1 // pred_region
      _
    $region17: #{position_evaluator.1} parent=1 // pred_fallthru
      _
    // Predicated region
    $region18: #{position_evaluator.1} parent=1 // pred_check
      _
    $region19: #{position_evaluator.1} parent=1 // pred_check_branch
      %4899 = sbr.rel (0) target = $region21
    $region20: #{position_evaluator.1} parent=1 // pred_region
      _
    $region21: #{position_evaluator.1} parent=1 // pred_fallthru
      _
    // Predicated region
    $region22: #{position_evaluator.1} parent=1 // pred_check
      _
    $region23: #{position_evaluator.1} parent=1 // pred_check_branch
      %4901 = sbr.rel (0) target = $region25
    $region24: #{position_evaluator.1} parent=1 // pred_region
      _
    $region25: #{position_evaluator.1} parent=1 // pred_fallthru
      _
    // Predicated region
    $region26: #{position_evaluator.1} parent=1 // pred_check
      _
    $region27: #{position_evaluator.1} parent=1 // pred_check_branch
      %4903 = sbr.rel (0) target = $region29
    $region28: #{position_evaluator.1} parent=1 // pred_region
      _
    $region29: #{position_evaluator.1} parent=1 // pred_fallthru
      _
    %4904 = vsyncpa [#allocation3], 1

</llo_original>
